<compile_context>
chip_gen: v5e
topology: v5e:2x2
jax: 0.10.0
libtpu: 0.0.40
codegen_flags: <defaults>
</compile_context>

<pallas_src>
import jax
import jax.numpy as jnp
from jax.experimental import pallas as pl
from jax.experimental.pallas import tpu as pltpu


# ----------------------------- small helpers -----------------------------
def _round_up(x, m):
    return ((x + m - 1) // m) * m


def _cdiv(a, b):
    return (a + b - 1) // b


def _gate_layout(h):
    """Per-gate lane stride GS and packed total width W3 (multiple of 128)."""
    gs = h if 3 * h <= 128 else _round_up(h, 128)
    return gs, _round_up(3 * gs, 128)


def _choose_batch_tile(batch, max_bt):
    """Batch tile bt (multiple of 8) and padded batch Bp (multiple of bt).

    Mid-size batches are forced into >= 2 grid steps so the 'parallel' grid axis can
    occupy both TensorCores on v7x (neutral on single-TC v5e/v6e).  Large batches cap
    at max_bt (256 fills the v6e/v7x 256-row MXU; use 128 on v5e)."""
    max_bt = max(8, _round_up(max_bt, 8))
    bp = _round_up(batch, 8)
    if bp <= 8:
        bt = bp
    elif bp <= 2 * max_bt:
        bt = _round_up(_cdiv(bp, 2), 8)
    else:
        bt = max_bt
    return bt, _round_up(bp, bt)


# ----------------------------- kernel -----------------------------
def _make_kernel(bt, S, H, GS, W3, L, scale, mm_dtype):
    f32 = jnp.float32

    def kernel(x_ref, wkqvT_ref, bkqv_ref, wihT_ref, bih_ref,
               whhT_ref, bhh_ref, wlinT_ref, blin_ref, out_ref,
               gx_scr, seq_scr):
        # -------- Attn: fused K|Q|V projection + softmax (batched precompute) --------
        # (bt*S, H) merge is a layout no-op when S % 8 == 0 (bt % 8 == 0 always).
        x2 = x_ref[...].reshape(bt * S, H)
        kqv = (jnp.dot(x2.astype(mm_dtype), wkqvT_ref[...].astype(mm_dtype),
                       preferred_element_type=f32)
               + bkqv_ref[...]).reshape(bt, S, W3)
        k = kqv[:, :, 0:GS]
        q = kqv[:, :, GS:2 * GS]
        v = kqv[:, :, 2 * GS:3 * GS]

        scores = jnp.einsum('bqd,bkd->bqk', q, k,
                            preferred_element_type=f32) * scale            # (bt, S, S)
        m = jnp.max(scores, axis=-1, keepdims=True)
        e = jnp.exp(scores - m)
        # exact softmax: pl.reciprocal(approx=True) would move the divide to the EUP but
        # can cost ~1e-4 relative accuracy; keep exact for strict f32 parity.
        attn = jnp.einsum('bqk,bkd->bqd', e / jnp.sum(e, axis=-1, keepdims=True), v,
                          preferred_element_type=f32)                      # (bt, S, GS)

        # One-time conversion to time-major (S leading-axis stores); after this nothing
        # on the serial recurrence path touches a non-leading axis.
        for s in range(S):
            seq_scr[s] = attn[:, s, :]

        # -------- multi-layer GRU, time-major recurrence (h0 = 0) --------
        h = jnp.zeros((bt, GS), f32)
        for l in range(L):
            # input-gate contributions for all timesteps in one matmul; the
            # (S*bt, GS) merge of the time-major scratch is a layout no-op.
            src = seq_scr[...].reshape(S * bt, GS)
            gx_scr[...] = (jnp.dot(src.astype(mm_dtype), wihT_ref[l].astype(mm_dtype),
                                   preferred_element_type=f32)
                           + bih_ref[l]).reshape(S, bt, W3)
            whh_l = whhT_ref[l]                   # (GS, W3) — recurrence stays f32
            bhh_l = bhh_ref[l]                    # (1, W3)
            write_seq = l < L - 1                 # last layer: only final h is consumed

            h = jnp.zeros((bt, GS), f32)
            # Static unroll (S is small & static).  Liveness stays bounded: each h is
            # stored to seq_scr immediately and only h itself is carried forward.
            # TODO(synk): for very large S switch this to lax.fori_loop over gx_scr/seq_scr
            # to bound generated code size.
            for t in range(S):
                gx = gx_scr[t]                                         # (bt, W3), leading-axis load
                gh = jnp.dot(h, whh_l, preferred_element_type=f32) + bhh_l
                r = jax.nn.sigmoid(gx[:, 0:GS] + gh[:, 0:GS])
                z = jax.nn.sigmoid(gx[:, GS:2 * GS] + gh[:, GS:2 * GS])
                n = jnp.tanh(gx[:, 2 * GS:3 * GS] + r * gh[:, 2 * GS:3 * GS])
                h = (1.0 - z) * n + z * h
                if write_seq:
                    seq_scr[t] = h                                     # leading-axis store

        # -------- Linear head, lane-dense (bt, 128) output block --------
        out_ref[...] = (jnp.dot(h, wlinT_ref[...], preferred_element_type=f32)
                        + blin_ref[...])

    return kernel


# ----------------------------- weight packing -----------------------------
def _pack_kqv(wk, bk, wq, bq, wv, bv, H, D, GS, W3):
    wkqvT = jnp.zeros((H, W3), jnp.float32)
    bkqv = jnp.zeros((W3,), jnp.float32)
    for g, (w, b) in enumerate(((wk, bk), (wq, bq), (wv, bv))):
        wkqvT = wkqvT.at[:, g * GS:g * GS + D].set(w.T.astype(jnp.float32))
        bkqv = bkqv.at[g * GS:g * GS + D].set(b.astype(jnp.float32))
    return wkqvT, bkqv.reshape(1, W3)


def _pack_gru_layer(w, b, H, GS, W3):
    """w: (3H, H) PyTorch GRU weight (gate order r,z,n), b: (3H,).
    Returns transposed, gate-strided, zero-padded (GS, W3) and (1, W3)."""
    wt = jnp.zeros((GS, W3), jnp.float32)
    bv = jnp.zeros((W3,), jnp.float32)
    for g in range(3):
        wt = wt.at[0:H, g * GS:g * GS + H].set(w[g * H:(g + 1) * H, :].T.astype(jnp.float32))
        bv = bv.at[g * GS:g * GS + H].set(b[g * H:(g + 1) * H].astype(jnp.float32))
    return wt, bv.reshape(1, W3)


# ----------------------------- wrapper -----------------------------
def attn_gru_forward(x, params, *, max_batch_tile=256, precompute_dtype=jnp.float32):
    """x: (B, S, H) float32.  Returns (B, 2) float32 (PyTorch AttnGRU semantics).

    max_batch_tile: batch rows per grid step (256 for v6e/v7x MXU; use 128 on v5e).
    precompute_dtype: dtype of the two batched precompute matmuls (KQV projection and
      per-layer input gates); jnp.bfloat16 for ~2-3x MXU rate if ~1e-3 accuracy is ok.
    """
    B, S, H = x.shape
    (wk, bk, wq, bq, wv, bv, w_ih, b_ih, w_hh, b_hh, w_lin, b_lin) = params
    D = wk.shape[0]            # kqv_dim
    L = w_ih.shape[0]
    assert D == H, "AttnGRU requires kqv_dim == hidden_dim (GRU input size)"

    GS, W3 = _gate_layout(H)   # per-gate lane stride / packed gate width
    OUTW = 128                 # lane-dense head tile; true output width is 2
    scale = 1.0 / (D ** 0.5)

    bt, Bp = _choose_batch_tile(B, max_batch_tile)
    nbt = Bp // bt
    xp = x if Bp == B else jnp.pad(x, ((0, Bp - B), (0, 0), (0, 0)))

    wkqvT, bkqv = _pack_kqv(wk, bk, wq, bq, wv, bv, H, D, GS, W3)
    packed_ih = [_pack_gru_layer(w_ih[l], b_ih[l], H, GS, W3) for l in range(L)]
    packed_hh = [_pack_gru_layer(w_hh[l], b_hh[l], H, GS, W3) for l in range(L)]
    wihT = jnp.stack([p[0] for p in packed_ih])
    bih = jnp.stack([p[1] for p in packed_ih])
    whhT = jnp.stack([p[0] for p in packed_hh])
    bhh = jnp.stack([p[1] for p in packed_hh])

    wlinT = jnp.zeros((GS, OUTW), jnp.float32).at[0:H, 0:2].set(w_lin.T)
    blin = jnp.zeros((1, OUTW), jnp.float32).at[0, 0:2].set(b_lin)

    kernel = _make_kernel(bt, S, H, GS, W3, L, scale, precompute_dtype)

    # NOTE (v7x VMEM budget): per-layer GRU weights are 2*GS*W3*4 B and gx scratch is
    # S*bt*W3*4 B; for large H (e.g. 1024) with bt=256 this approaches v7x's 64 MiB
    # physical VMEM — shrink max_batch_tile or move the layer loop onto an 'arbitrary'
    # grid axis (one resident layer) before raising vmem_limit_bytes.
    grid_spec = pltpu.PrefetchScalarGridSpec(
        num_scalar_prefetch=0,
        grid=(nbt,),
        in_specs=[
            pl.BlockSpec((bt, S, H), lambda i: (i, 0, 0)),      # x (batch tile)
            pl.BlockSpec((H, W3), lambda i: (0, 0)),            # fused K|Q|V weight^T
            pl.BlockSpec((1, W3), lambda i: (0, 0)),            # fused K|Q|V bias
            pl.BlockSpec((L, GS, W3), lambda i: (0, 0, 0)),     # GRU W_ih^T (gate-strided)
            pl.BlockSpec((L, 1, W3), lambda i: (0, 0, 0)),      # GRU b_ih
            pl.BlockSpec((L, GS, W3), lambda i: (0, 0, 0)),     # GRU W_hh^T (gate-strided)
            pl.BlockSpec((L, 1, W3), lambda i: (0, 0, 0)),      # GRU b_hh
            pl.BlockSpec((GS, OUTW), lambda i: (0, 0)),         # head weight^T (lane-dense)
            pl.BlockSpec((1, OUTW), lambda i: (0, 0)),          # head bias
        ],
        out_specs=pl.BlockSpec((bt, OUTW), lambda i: (i, 0)),
        scratch_shapes=[
            pltpu.VMEM((S, bt, W3), jnp.float32),               # time-major input gates
            pltpu.VMEM((S, bt, GS), jnp.float32),               # time-major layer sequence
        ],
    )

    out = pl.pallas_call(
        kernel,
        out_shape=jax.ShapeDtypeStruct((Bp, OUTW), jnp.float32),
        grid_spec=grid_spec,
        compiler_params=pltpu.CompilerParams(
            # batch tiles are fully independent -> shard across TensorCores on v7x
            dimension_semantics=("parallel",)),
    )(xp, wkqvT, bkqv, wihT, bih, whhT, bhh, wlinT, blin)
    return out[:B, 0:2]


# ----------------------------- pure-JAX reference -----------------------------
def attn_gru_reference(x, params):
    (wk, bk, wq, bq, wv, bv, w_ih, b_ih, w_hh, b_hh, w_lin, b_lin) = params
    B, S, H = x.shape
    D = wk.shape[0]
    L = w_ih.shape[0]

    k = x @ wk.T + bk
    q = x @ wq.T + bq
    v = x @ wv.T + bv
    scores = jnp.einsum('bqd,bkd->bqk', q, k) / (D ** 0.5)
    w = jax.nn.softmax(scores, axis=-1)
    seq = jnp.einsum('bqk,bkd->bqd', w, v)

    for l in range(L):
        h = jnp.zeros((B, H), jnp.float32)
        outs = []
        for t in range(S):
            xt = seq[:, t, :]
            gx = xt @ w_ih[l].T + b_ih[l]
            gh = h @ w_hh[l].T + b_hh[l]
            r = jax.nn.sigmoid(gx[:, :H] + gh[:, :H])
            z = jax.nn.sigmoid(gx[:, H:2 * H] + gh[:, H:2 * H])
            n = jnp.tanh(gx[:, 2 * H:] + r * gh[:, 2 * H:])
            h = (1.0 - z) * n + z * h
            outs.append(h)
        seq = jnp.stack(outs, axis=1)

    return seq[:, -1, :] @ w_lin.T + b_lin


# ----------------------------- parameter construction -----------------------------
def init_params(key, hidden_dim, num_layers, kqv_dim):
    ks = jax.random.split(key, 12)
    s = 0.1
    wk = jax.random.normal(ks[0], (kqv_dim, hidden_dim), jnp.float32) * s
    bk = jax.random.normal(ks[1], (kqv_dim,), jnp.float32) * s
    wq = jax.random.normal(ks[2], (kqv_dim, hidden_dim), jnp.float32) * s
    bq = jax.random.normal(ks[3], (kqv_dim,), jnp.float32) * s
    wv = jax.random.normal(ks[4], (kqv_dim, hidden_dim), jnp.float32) * s
    bv = jax.random.normal(ks[5], (kqv_dim,), jnp.float32) * s
    # GRU: layer-0 input size is kqv_dim (== hidden_dim so the PyTorch forward is valid)
    w_ih = jax.random.normal(ks[6], (num_layers, 3 * hidden_dim, hidden_dim), jnp.float32) * s
    b_ih = jax.random.normal(ks[7], (num_layers, 3 * hidden_dim), jnp.float32) * s
    w_hh = jax.random.normal(ks[8], (num_layers, 3 * hidden_dim, hidden_dim), jnp.float32) * s
    b_hh = jax.random.normal(ks[9], (num_layers, 3 * hidden_dim), jnp.float32) * s
    w_lin = jax.random.normal(ks[10], (2, hidden_dim), jnp.float32) * s
    b_lin = jax.random.normal(ks[11], (2,), jnp.float32) * s
    return (wk, bk, wq, bq, wv, bv, w_ih, b_ih, w_hh, b_hh, w_lin, b_lin)


if __name__ == "__main__":
    B, S, H = 2, 8, 32
    num_layers = 2
    kqv_dim = H   # must equal hidden_dim for the PyTorch module's forward to be valid

    key = jax.random.PRNGKey(0)
    k_x, k_p = jax.random.split(key)
    x = jax.random.normal(k_x, (B, S, H), jnp.float32)
    params = init_params(k_p, H, num_layers, kqv_dim)

    out = attn_gru_forward(x, params)
    out = jax.block_until_ready(out)

    ref = attn_gru_reference(x, params)
    assert out.shape == (B, 2)
    assert jnp.allclose(out, ref, rtol=1e-4, atol=1e-4), (out, ref)

    print("KERNEL_OK")
</pallas_src>

<mosaic_0001>
module attributes {stable_mosaic.version = 11 : i64} {
  func.func @kernel(%arg0: i32, %arg1: memref<8x8x32xf32, #tpu.memory_space<vmem>>, %arg2: memref<32x128xf32, #tpu.memory_space<vmem>>, %arg3: memref<1x128xf32, #tpu.memory_space<vmem>>, %arg4: memref<2x32x128xf32, #tpu.memory_space<vmem>>, %arg5: memref<2x1x128xf32, #tpu.memory_space<vmem>>, %arg6: memref<2x32x128xf32, #tpu.memory_space<vmem>>, %arg7: memref<2x1x128xf32, #tpu.memory_space<vmem>>, %arg8: memref<32x128xf32, #tpu.memory_space<vmem>>, %arg9: memref<1x128xf32, #tpu.memory_space<vmem>>, %arg10: memref<8x128xf32, #tpu.memory_space<vmem>>, %arg11: memref<8x8x128xf32, #tpu.memory_space<vmem>>, %arg12: memref<8x8x32xf32, #tpu.memory_space<vmem>>) attributes {dimension_semantics = [#tpu.dimension_semantics<parallel>], iteration_bounds = array<i64: 1>, scalar_prefetch = 0 : i64, scratch_operands = 2 : i64, tpu.core_type = #tpu.core_type<tc>, window_params = [{transform_indices = @transform_0, window_bounds = array<i64: 8, 8, 32>}, {pipeline_mode = #tpu.pipeline_mode<synchronous>, transform_indices = @transform_1, window_bounds = array<i64: 32, 128>}, {pipeline_mode = #tpu.pipeline_mode<synchronous>, transform_indices = @transform_2, window_bounds = array<i64: 1, 128>}, {pipeline_mode = #tpu.pipeline_mode<synchronous>, transform_indices = @transform_3, window_bounds = array<i64: 2, 32, 128>}, {pipeline_mode = #tpu.pipeline_mode<synchronous>, transform_indices = @transform_4, window_bounds = array<i64: 2, 1, 128>}, {pipeline_mode = #tpu.pipeline_mode<synchronous>, transform_indices = @transform_5, window_bounds = array<i64: 2, 32, 128>}, {pipeline_mode = #tpu.pipeline_mode<synchronous>, transform_indices = @transform_6, window_bounds = array<i64: 2, 1, 128>}, {pipeline_mode = #tpu.pipeline_mode<synchronous>, transform_indices = @transform_7, window_bounds = array<i64: 32, 128>}, {pipeline_mode = #tpu.pipeline_mode<synchronous>, transform_indices = @transform_8, window_bounds = array<i64: 1, 128>}, {transform_indices = @transform_9, window_bounds = array<i64: 8, 128>}]} {
    %c0 = arith.constant 0 : index
    %c0_0 = arith.constant 0 : index
    %c0_1 = arith.constant 0 : index
    %0 = vector.load %arg1[%c0, %c0_0, %c0_1] : memref<8x8x32xf32, #tpu.memory_space<vmem>>, vector<8x8x32xf32>
    %1 = vector.shape_cast %0 : vector<8x8x32xf32> to vector<64x32xf32>
    %c0_2 = arith.constant 0 : index
    %c0_3 = arith.constant 0 : index
    %2 = vector.load %arg2[%c0_2, %c0_3] : memref<32x128xf32, #tpu.memory_space<vmem>>, vector<32x128xf32>
    %cst = arith.constant dense<0.000000e+00> : vector<64x128xf32>
    %3 = tpu.matmul %1, %2, %cst {dimension_numbers = #tpu.dot_dimension_numbers<[1], [0], [0], [1], [0, 0, 1, 1], [], []>} : vector<64x32xf32>, vector<32x128xf32>, vector<64x128xf32> -> vector<64x128xf32>
    %c0_4 = arith.constant 0 : index
    %c0_5 = arith.constant 0 : index
    %4 = vector.load %arg3[%c0_4, %c0_5] : memref<1x128xf32, #tpu.memory_space<vmem>>, vector<1x128xf32>
    %5 = vector.broadcast %4 : vector<1x128xf32> to vector<64x128xf32>
    %6 = arith.addf %3, %5 : vector<64x128xf32>
    %7 = vector.shape_cast %6 : vector<64x128xf32> to vector<8x8x128xf32>
    %8 = vector.extract_strided_slice %7 {offsets = [0, 0, 0], sizes = [8, 8, 32], strides = [1, 1, 1]} : vector<8x8x128xf32> to vector<8x8x32xf32>
    %9 = vector.extract_strided_slice %7 {offsets = [0, 0, 32], sizes = [8, 8, 32], strides = [1, 1, 1]} : vector<8x8x128xf32> to vector<8x8x32xf32>
    %10 = vector.extract_strided_slice %7 {offsets = [0, 0, 64], sizes = [8, 8, 32], strides = [1, 1, 1]} : vector<8x8x128xf32> to vector<8x8x32xf32>
    "tpu.trace_start"() <{level = 10 : i32, message = "bqd,bkd->bqk"}> : () -> ()
    %cst_6 = arith.constant dense<0.000000e+00> : vector<8x8x8xf32>
    %11 = tpu.matmul %9, %8, %cst_6 {dimension_numbers = #tpu.dot_dimension_numbers<[2], [2], [1], [1], [0, 0, 0, 1, 1, 1], [0], [0]>} : vector<8x8x32xf32>, vector<8x8x32xf32>, vector<8x8x8xf32> -> vector<8x8x8xf32>
    "tpu.trace_stop"() : () -> ()
    %cst_7 = arith.constant 0.176776692 : f32
    %12 = vector.broadcast %cst_7 : f32 to vector<8x8x8xf32>
    %13 = arith.mulf %11, %12 : vector<8x8x8xf32>
    %cst_8 = arith.constant dense<0xFF800000> : vector<8x8xf32>
    %14 = vector.multi_reduction <maximumf>, %13, %cst_8 [2] : vector<8x8x8xf32> to vector<8x8xf32>
    %15 = vector.shape_cast %14 : vector<8x8xf32> to vector<8x8x1xf32>
    %16 = vector.broadcast %15 : vector<8x8x1xf32> to vector<8x8x8xf32>
    %17 = arith.subf %13, %16 : vector<8x8x8xf32>
    %18 = math.exp %17 : vector<8x8x8xf32>
    %cst_9 = arith.constant dense<0.000000e+00> : vector<8x8xf32>
    %19 = vector.multi_reduction <add>, %18, %cst_9 [2] : vector<8x8x8xf32> to vector<8x8xf32>
    %20 = vector.shape_cast %19 : vector<8x8xf32> to vector<8x8x1xf32>
    %21 = vector.broadcast %20 : vector<8x8x1xf32> to vector<8x8x8xf32>
    %22 = arith.divf %18, %21 : vector<8x8x8xf32>
    "tpu.trace_start"() <{level = 10 : i32, message = "bqk,bkd->bqd"}> : () -> ()
    %cst_10 = arith.constant dense<0.000000e+00> : vector<8x8x32xf32>
    %23 = tpu.matmul %22, %10, %cst_10 {dimension_numbers = #tpu.dot_dimension_numbers<[2], [1], [1], [2], [0, 0, 0, 1, 1, 2], [0], [0]>} : vector<8x8x8xf32>, vector<8x8x32xf32>, vector<8x8x32xf32> -> vector<8x8x32xf32>
    "tpu.trace_stop"() : () -> ()
    %24 = vector.extract_strided_slice %23 {offsets = [0, 0, 0], sizes = [8, 1, 32], strides = [1, 1, 1]} : vector<8x8x32xf32> to vector<8x1x32xf32>
    %25 = vector.shape_cast %24 : vector<8x1x32xf32> to vector<8x32xf32>
    %c0_11 = arith.constant 0 : index
    %c0_12 = arith.constant 0 : index
    %c0_13 = arith.constant 0 : index
    %26 = vector.load %arg12[%c0_11, %c0_12, %c0_13] : memref<8x8x32xf32, #tpu.memory_space<vmem>>, vector<1x8x32xf32>
    %27 = vector.shape_cast %26 : vector<1x8x32xf32> to vector<8x32xf32>
    %28 = vector.shape_cast %25 : vector<8x32xf32> to vector<1x8x32xf32>
    tpu.vector_store %arg12[%c0_11, %c0_12, %c0_13], %28 {strides = array<i32>} : memref<8x8x32xf32, #tpu.memory_space<vmem>>, vector<1x8x32xf32>,
    %29 = vector.extract_strided_slice %23 {offsets = [0, 1, 0], sizes = [8, 1, 32], strides = [1, 1, 1]} : vector<8x8x32xf32> to vector<8x1x32xf32>
    %30 = vector.shape_cast %29 : vector<8x1x32xf32> to vector<8x32xf32>
    %c1 = arith.constant 1 : index
    %c0_14 = arith.constant 0 : index
    %c0_15 = arith.constant 0 : index
    %31 = vector.load %arg12[%c1, %c0_14, %c0_15] : memref<8x8x32xf32, #tpu.memory_space<vmem>>, vector<1x8x32xf32>
    %32 = vector.shape_cast %31 : vector<1x8x32xf32> to vector<8x32xf32>
    %33 = vector.shape_cast %30 : vector<8x32xf32> to vector<1x8x32xf32>
    tpu.vector_store %arg12[%c1, %c0_14, %c0_15], %33 {strides = array<i32>} : memref<8x8x32xf32, #tpu.memory_space<vmem>>, vector<1x8x32xf32>,
    %34 = vector.extract_strided_slice %23 {offsets = [0, 2, 0], sizes = [8, 1, 32], strides = [1, 1, 1]} : vector<8x8x32xf32> to vector<8x1x32xf32>
    %35 = vector.shape_cast %34 : vector<8x1x32xf32> to vector<8x32xf32>
    %c2 = arith.constant 2 : index
    %c0_16 = arith.constant 0 : index
    %c0_17 = arith.constant 0 : index
    %36 = vector.load %arg12[%c2, %c0_16, %c0_17] : memref<8x8x32xf32, #tpu.memory_space<vmem>>, vector<1x8x32xf32>
    %37 = vector.shape_cast %36 : vector<1x8x32xf32> to vector<8x32xf32>
    %38 = vector.shape_cast %35 : vector<8x32xf32> to vector<1x8x32xf32>
    tpu.vector_store %arg12[%c2, %c0_16, %c0_17], %38 {strides = array<i32>} : memref<8x8x32xf32, #tpu.memory_space<vmem>>, vector<1x8x32xf32>,
    %39 = vector.extract_strided_slice %23 {offsets = [0, 3, 0], sizes = [8, 1, 32], strides = [1, 1, 1]} : vector<8x8x32xf32> to vector<8x1x32xf32>
    %40 = vector.shape_cast %39 : vector<8x1x32xf32> to vector<8x32xf32>
    %c3 = arith.constant 3 : index
    %c0_18 = arith.constant 0 : index
    %c0_19 = arith.constant 0 : index
    %41 = vector.load %arg12[%c3, %c0_18, %c0_19] : memref<8x8x32xf32, #tpu.memory_space<vmem>>, vector<1x8x32xf32>
    %42 = vector.shape_cast %41 : vector<1x8x32xf32> to vector<8x32xf32>
    %43 = vector.shape_cast %40 : vector<8x32xf32> to vector<1x8x32xf32>
    tpu.vector_store %arg12[%c3, %c0_18, %c0_19], %43 {strides = array<i32>} : memref<8x8x32xf32, #tpu.memory_space<vmem>>, vector<1x8x32xf32>,
    %44 = vector.extract_strided_slice %23 {offsets = [0, 4, 0], sizes = [8, 1, 32], strides = [1, 1, 1]} : vector<8x8x32xf32> to vector<8x1x32xf32>
    %45 = vector.shape_cast %44 : vector<8x1x32xf32> to vector<8x32xf32>
    %c4 = arith.constant 4 : index
    %c0_20 = arith.constant 0 : index
    %c0_21 = arith.constant 0 : index
    %46 = vector.load %arg12[%c4, %c0_20, %c0_21] : memref<8x8x32xf32, #tpu.memory_space<vmem>>, vector<1x8x32xf32>
    %47 = vector.shape_cast %46 : vector<1x8x32xf32> to vector<8x32xf32>
    %48 = vector.shape_cast %45 : vector<8x32xf32> to vector<1x8x32xf32>
    tpu.vector_store %arg12[%c4, %c0_20, %c0_21], %48 {strides = array<i32>} : memref<8x8x32xf32, #tpu.memory_space<vmem>>, vector<1x8x32xf32>,
    %49 = vector.extract_strided_slice %23 {offsets = [0, 5, 0], sizes = [8, 1, 32], strides = [1, 1, 1]} : vector<8x8x32xf32> to vector<8x1x32xf32>
    %50 = vector.shape_cast %49 : vector<8x1x32xf32> to vector<8x32xf32>
    %c5 = arith.constant 5 : index
    %c0_22 = arith.constant 0 : index
    %c0_23 = arith.constant 0 : index
    %51 = vector.load %arg12[%c5, %c0_22, %c0_23] : memref<8x8x32xf32, #tpu.memory_space<vmem>>, vector<1x8x32xf32>
    %52 = vector.shape_cast %51 : vector<1x8x32xf32> to vector<8x32xf32>
    %53 = vector.shape_cast %50 : vector<8x32xf32> to vector<1x8x32xf32>
    tpu.vector_store %arg12[%c5, %c0_22, %c0_23], %53 {strides = array<i32>} : memref<8x8x32xf32, #tpu.memory_space<vmem>>, vector<1x8x32xf32>,
    %54 = vector.extract_strided_slice %23 {offsets = [0, 6, 0], sizes = [8, 1, 32], strides = [1, 1, 1]} : vector<8x8x32xf32> to vector<8x1x32xf32>
    %55 = vector.shape_cast %54 : vector<8x1x32xf32> to vector<8x32xf32>
    %c6 = arith.constant 6 : index
    %c0_24 = arith.constant 0 : index
    %c0_25 = arith.constant 0 : index
    %56 = vector.load %arg12[%c6, %c0_24, %c0_25] : memref<8x8x32xf32, #tpu.memory_space<vmem>>, vector<1x8x32xf32>
    %57 = vector.shape_cast %56 : vector<1x8x32xf32> to vector<8x32xf32>
    %58 = vector.shape_cast %55 : vector<8x32xf32> to vector<1x8x32xf32>
    tpu.vector_store %arg12[%c6, %c0_24, %c0_25], %58 {strides = array<i32>} : memref<8x8x32xf32, #tpu.memory_space<vmem>>, vector<1x8x32xf32>,
    %59 = vector.extract_strided_slice %23 {offsets = [0, 7, 0], sizes = [8, 1, 32], strides = [1, 1, 1]} : vector<8x8x32xf32> to vector<8x1x32xf32>
    %60 = vector.shape_cast %59 : vector<8x1x32xf32> to vector<8x32xf32>
    %c7 = arith.constant 7 : index
    %c0_26 = arith.constant 0 : index
    %c0_27 = arith.constant 0 : index
    %61 = vector.load %arg12[%c7, %c0_26, %c0_27] : memref<8x8x32xf32, #tpu.memory_space<vmem>>, vector<1x8x32xf32>
    %62 = vector.shape_cast %61 : vector<1x8x32xf32> to vector<8x32xf32>
    %63 = vector.shape_cast %60 : vector<8x32xf32> to vector<1x8x32xf32>
    tpu.vector_store %arg12[%c7, %c0_26, %c0_27], %63 {strides = array<i32>} : memref<8x8x32xf32, #tpu.memory_space<vmem>>, vector<1x8x32xf32>,
    %c0_28 = arith.constant 0 : index
    %c0_29 = arith.constant 0 : index
    %c0_30 = arith.constant 0 : index
    %64 = vector.load %arg12[%c0_28, %c0_29, %c0_30] : memref<8x8x32xf32, #tpu.memory_space<vmem>>, vector<8x8x32xf32>
    %65 = vector.shape_cast %64 : vector<8x8x32xf32> to vector<64x32xf32>
    %c0_31 = arith.constant 0 : index
    %c0_32 = arith.constant 0 : index
    %c0_33 = arith.constant 0 : index
    %66 = vector.load %arg4[%c0_31, %c0_32, %c0_33] : memref<2x32x128xf32, #tpu.memory_space<vmem>>, vector<1x32x128xf32>
    %67 = vector.shape_cast %66 : vector<1x32x128xf32> to vector<32x128xf32>
    %cst_34 = arith.constant dense<0.000000e+00> : vector<64x128xf32>
    %68 = tpu.matmul %65, %67, %cst_34 {dimension_numbers = #tpu.dot_dimension_numbers<[1], [0], [0], [1], [0, 0, 1, 1], [], []>} : vector<64x32xf32>, vector<32x128xf32>, vector<64x128xf32> -> vector<64x128xf32>
    %c0_35 = arith.constant 0 : index
    %c0_36 = arith.constant 0 : index
    %c0_37 = arith.constant 0 : index
    %69 = vector.load %arg5[%c0_35, %c0_36, %c0_37] : memref<2x1x128xf32, #tpu.memory_space<vmem>>, vector<1x1x128xf32>
    %70 = vector.shape_cast %69 : vector<1x1x128xf32> to vector<1x128xf32>
    %71 = vector.broadcast %70 : vector<1x128xf32> to vector<64x128xf32>
    %72 = arith.addf %68, %71 : vector<64x128xf32>
    %73 = vector.shape_cast %72 : vector<64x128xf32> to vector<8x8x128xf32>
    %c0_38 = arith.constant 0 : index
    %c0_39 = arith.constant 0 : index
    %c0_40 = arith.constant 0 : index
    %74 = vector.load %arg11[%c0_38, %c0_39, %c0_40] : memref<8x8x128xf32, #tpu.memory_space<vmem>>, vector<8x8x128xf32>
    tpu.vector_store %arg11[%c0_38, %c0_39, %c0_40], %73 {strides = array<i32>} : memref<8x8x128xf32, #tpu.memory_space<vmem>>, vector<8x8x128xf32>,
    %c0_41 = arith.constant 0 : index
    %c0_42 = arith.constant 0 : index
    %c0_43 = arith.constant 0 : index
    %75 = vector.load %arg6[%c0_41, %c0_42, %c0_43] : memref<2x32x128xf32, #tpu.memory_space<vmem>>, vector<1x32x128xf32>
    %76 = vector.shape_cast %75 : vector<1x32x128xf32> to vector<32x128xf32>
    %c0_44 = arith.constant 0 : index
    %c0_45 = arith.constant 0 : index
    %c0_46 = arith.constant 0 : index
    %77 = vector.load %arg7[%c0_44, %c0_45, %c0_46] : memref<2x1x128xf32, #tpu.memory_space<vmem>>, vector<1x1x128xf32>
    %78 = vector.shape_cast %77 : vector<1x1x128xf32> to vector<1x128xf32>
    %cst_47 = arith.constant 0.000000e+00 : f32
    %79 = vector.broadcast %cst_47 : f32 to vector<8x32xf32>
    %c0_48 = arith.constant 0 : index
    %c0_49 = arith.constant 0 : index
    %c0_50 = arith.constant 0 : index
    %80 = vector.load %arg11[%c0_48, %c0_49, %c0_50] : memref<8x8x128xf32, #tpu.memory_space<vmem>>, vector<1x8x128xf32>
    %81 = vector.shape_cast %80 : vector<1x8x128xf32> to vector<8x128xf32>
    %cst_51 = arith.constant dense<0.000000e+00> : vector<8x128xf32>
    %82 = tpu.matmul %79, %76, %cst_51 {dimension_numbers = #tpu.dot_dimension_numbers<[1], [0], [0], [1], [0, 0, 1, 1], [], []>} : vector<8x32xf32>, vector<32x128xf32>, vector<8x128xf32> -> vector<8x128xf32>
    %83 = vector.broadcast %78 : vector<1x128xf32> to vector<8x128xf32>
    %84 = arith.addf %82, %83 : vector<8x128xf32>
    %85 = vector.extract_strided_slice %81 {offsets = [0, 0], sizes = [8, 32], strides = [1, 1]} : vector<8x128xf32> to vector<8x32xf32>
    %86 = vector.extract_strided_slice %84 {offsets = [0, 0], sizes = [8, 32], strides = [1, 1]} : vector<8x128xf32> to vector<8x32xf32>
    %87 = arith.addf %85, %86 : vector<8x32xf32>
    %88 = arith.negf %87 : vector<8x32xf32>
    %89 = math.exp %88 : vector<8x32xf32>
    %cst_52 = arith.constant 1.000000e+00 : f32
    %90 = vector.broadcast %cst_52 : f32 to vector<8x32xf32>
    %91 = arith.addf %90, %89 : vector<8x32xf32>
    %92 = arith.divf %90, %91 : vector<8x32xf32>
    %93 = vector.extract_strided_slice %81 {offsets = [0, 32], sizes = [8, 32], strides = [1, 1]} : vector<8x128xf32> to vector<8x32xf32>
    %94 = vector.extract_strided_slice %84 {offsets = [0, 32], sizes = [8, 32], strides = [1, 1]} : vector<8x128xf32> to vector<8x32xf32>
    %95 = arith.addf %93, %94 : vector<8x32xf32>
    %96 = arith.negf %95 : vector<8x32xf32>
    %97 = math.exp %96 : vector<8x32xf32>
    %cst_53 = arith.constant 1.000000e+00 : f32
    %98 = vector.broadcast %cst_53 : f32 to vector<8x32xf32>
    %99 = arith.addf %98, %97 : vector<8x32xf32>
    %100 = arith.divf %98, %99 : vector<8x32xf32>
    %101 = vector.extract_strided_slice %81 {offsets = [0, 64], sizes = [8, 32], strides = [1, 1]} : vector<8x128xf32> to vector<8x32xf32>
    %102 = vector.extract_strided_slice %84 {offsets = [0, 64], sizes = [8, 32], strides = [1, 1]} : vector<8x128xf32> to vector<8x32xf32>
    %103 = arith.mulf %92, %102 : vector<8x32xf32>
    %104 = arith.addf %101, %103 : vector<8x32xf32>
    %105 = math.tanh %104 : vector<8x32xf32>
    %cst_54 = arith.constant 1.000000e+00 : f32
    %106 = vector.broadcast %cst_54 : f32 to vector<8x32xf32>
    %107 = arith.subf %106, %100 : vector<8x32xf32>
    %108 = arith.mulf %107, %105 : vector<8x32xf32>
    %109 = arith.mulf %100, %79 : vector<8x32xf32>
    %110 = arith.addf %108, %109 : vector<8x32xf32>
    %c0_55 = arith.constant 0 : index
    %c0_56 = arith.constant 0 : index
    %c0_57 = arith.constant 0 : index
    %111 = vector.load %arg12[%c0_55, %c0_56, %c0_57] : memref<8x8x32xf32, #tpu.memory_space<vmem>>, vector<1x8x32xf32>
    %112 = vector.shape_cast %111 : vector<1x8x32xf32> to vector<8x32xf32>
    %113 = vector.shape_cast %110 : vector<8x32xf32> to vector<1x8x32xf32>
    tpu.vector_store %arg12[%c0_55, %c0_56, %c0_57], %113 {strides = array<i32>} : memref<8x8x32xf32, #tpu.memory_space<vmem>>, vector<1x8x32xf32>,
    %c1_58 = arith.constant 1 : index
    %c0_59 = arith.constant 0 : index
    %c0_60 = arith.constant 0 : index
    %114 = vector.load %arg11[%c1_58, %c0_59, %c0_60] : memref<8x8x128xf32, #tpu.memory_space<vmem>>, vector<1x8x128xf32>
    %115 = vector.shape_cast %114 : vector<1x8x128xf32> to vector<8x128xf32>
    %cst_61 = arith.constant dense<0.000000e+00> : vector<8x128xf32>
    %116 = tpu.matmul %110, %76, %cst_61 {dimension_numbers = #tpu.dot_dimension_numbers<[1], [0], [0], [1], [0, 0, 1, 1], [], []>} : vector<8x32xf32>, vector<32x128xf32>, vector<8x128xf32> -> vector<8x128xf32>
    %117 = vector.broadcast %78 : vector<1x128xf32> to vector<8x128xf32>
    %118 = arith.addf %116, %117 : vector<8x128xf32>
    %119 = vector.extract_strided_slice %115 {offsets = [0, 0], sizes = [8, 32], strides = [1, 1]} : vector<8x128xf32> to vector<8x32xf32>
    %120 = vector.extract_strided_slice %118 {offsets = [0, 0], sizes = [8, 32], strides = [1, 1]} : vector<8x128xf32> to vector<8x32xf32>
    %121 = arith.addf %119, %120 : vector<8x32xf32>
    %122 = arith.negf %121 : vector<8x32xf32>
    %123 = math.exp %122 : vector<8x32xf32>
    %cst_62 = arith.constant 1.000000e+00 : f32
    %124 = vector.broadcast %cst_62 : f32 to vector<8x32xf32>
    %125 = arith.addf %124, %123 : vector<8x32xf32>
    %126 = arith.divf %124, %125 : vector<8x32xf32>
    %127 = vector.extract_strided_slice %115 {offsets = [0, 32], sizes = [8, 32], strides = [1, 1]} : vector<8x128xf32> to vector<8x32xf32>
    %128 = vector.extract_strided_slice %118 {offsets = [0, 32], sizes = [8, 32], strides = [1, 1]} : vector<8x128xf32> to vector<8x32xf32>
    %129 = arith.addf %127, %128 : vector<8x32xf32>
    %130 = arith.negf %129 : vector<8x32xf32>
    %131 = math.exp %130 : vector<8x32xf32>
    %cst_63 = arith.constant 1.000000e+00 : f32
    %132 = vector.broadcast %cst_63 : f32 to vector<8x32xf32>
    %133 = arith.addf %132, %131 : vector<8x32xf32>
    %134 = arith.divf %132, %133 : vector<8x32xf32>
    %135 = vector.extract_strided_slice %115 {offsets = [0, 64], sizes = [8, 32], strides = [1, 1]} : vector<8x128xf32> to vector<8x32xf32>
    %136 = vector.extract_strided_slice %118 {offsets = [0, 64], sizes = [8, 32], strides = [1, 1]} : vector<8x128xf32> to vector<8x32xf32>
    %137 = arith.mulf %126, %136 : vector<8x32xf32>
    %138 = arith.addf %135, %137 : vector<8x32xf32>
    %139 = math.tanh %138 : vector<8x32xf32>
    %cst_64 = arith.constant 1.000000e+00 : f32
    %140 = vector.broadcast %cst_64 : f32 to vector<8x32xf32>
    %141 = arith.subf %140, %134 : vector<8x32xf32>
    %142 = arith.mulf %141, %139 : vector<8x32xf32>
    %143 = arith.mulf %134, %110 : vector<8x32xf32>
    %144 = arith.addf %142, %143 : vector<8x32xf32>
    %c1_65 = arith.constant 1 : index
    %c0_66 = arith.constant 0 : index
    %c0_67 = arith.constant 0 : index
    %145 = vector.load %arg12[%c1_65, %c0_66, %c0_67] : memref<8x8x32xf32, #tpu.memory_space<vmem>>, vector<1x8x32xf32>
    %146 = vector.shape_cast %145 : vector<1x8x32xf32> to vector<8x32xf32>
    %147 = vector.shape_cast %144 : vector<8x32xf32> to vector<1x8x32xf32>
    tpu.vector_store %arg12[%c1_65, %c0_66, %c0_67], %147 {strides = array<i32>} : memref<8x8x32xf32, #tpu.memory_space<vmem>>, vector<1x8x32xf32>,
    %c2_68 = arith.constant 2 : index
    %c0_69 = arith.constant 0 : index
    %c0_70 = arith.constant 0 : index
    %148 = vector.load %arg11[%c2_68, %c0_69, %c0_70] : memref<8x8x128xf32, #tpu.memory_space<vmem>>, vector<1x8x128xf32>
    %149 = vector.shape_cast %148 : vector<1x8x128xf32> to vector<8x128xf32>
    %cst_71 = arith.constant dense<0.000000e+00> : vector<8x128xf32>
    %150 = tpu.matmul %144, %76, %cst_71 {dimension_numbers = #tpu.dot_dimension_numbers<[1], [0], [0], [1], [0, 0, 1, 1], [], []>} : vector<8x32xf32>, vector<32x128xf32>, vector<8x128xf32> -> vector<8x128xf32>
    %151 = vector.broadcast %78 : vector<1x128xf32> to vector<8x128xf32>
    %152 = arith.addf %150, %151 : vector<8x128xf32>
    %153 = vector.extract_strided_slice %149 {offsets = [0, 0], sizes = [8, 32], strides = [1, 1]} : vector<8x128xf32> to vector<8x32xf32>
    %154 = vector.extract_strided_slice %152 {offsets = [0, 0], sizes = [8, 32], strides = [1, 1]} : vector<8x128xf32> to vector<8x32xf32>
    %155 = arith.addf %153, %154 : vector<8x32xf32>
    %156 = arith.negf %155 : vector<8x32xf32>
    %157 = math.exp %156 : vector<8x32xf32>
    %cst_72 = arith.constant 1.000000e+00 : f32
    %158 = vector.broadcast %cst_72 : f32 to vector<8x32xf32>
    %159 = arith.addf %158, %157 : vector<8x32xf32>
    %160 = arith.divf %158, %159 : vector<8x32xf32>
    %161 = vector.extract_strided_slice %149 {offsets = [0, 32], sizes = [8, 32], strides = [1, 1]} : vector<8x128xf32> to vector<8x32xf32>
    %162 = vector.extract_strided_slice %152 {offsets = [0, 32], sizes = [8, 32], strides = [1, 1]} : vector<8x128xf32> to vector<8x32xf32>
    %163 = arith.addf %161, %162 : vector<8x32xf32>
    %164 = arith.negf %163 : vector<8x32xf32>
    %165 = math.exp %164 : vector<8x32xf32>
    %cst_73 = arith.constant 1.000000e+00 : f32
    %166 = vector.broadcast %cst_73 : f32 to vector<8x32xf32>
    %167 = arith.addf %166, %165 : vector<8x32xf32>
    %168 = arith.divf %166, %167 : vector<8x32xf32>
    %169 = vector.extract_strided_slice %149 {offsets = [0, 64], sizes = [8, 32], strides = [1, 1]} : vector<8x128xf32> to vector<8x32xf32>
    %170 = vector.extract_strided_slice %152 {offsets = [0, 64], sizes = [8, 32], strides = [1, 1]} : vector<8x128xf32> to vector<8x32xf32>
    %171 = arith.mulf %160, %170 : vector<8x32xf32>
    %172 = arith.addf %169, %171 : vector<8x32xf32>
    %173 = math.tanh %172 : vector<8x32xf32>
    %cst_74 = arith.constant 1.000000e+00 : f32
    %174 = vector.broadcast %cst_74 : f32 to vector<8x32xf32>
    %175 = arith.subf %174, %168 : vector<8x32xf32>
    %176 = arith.mulf %175, %173 : vector<8x32xf32>
    %177 = arith.mulf %168, %144 : vector<8x32xf32>
    %178 = arith.addf %176, %177 : vector<8x32xf32>
    %c2_75 = arith.constant 2 : index
    %c0_76 = arith.constant 0 : index
    %c0_77 = arith.constant 0 : index
    %179 = vector.load %arg12[%c2_75, %c0_76, %c0_77] : memref<8x8x32xf32, #tpu.memory_space<vmem>>, vector<1x8x32xf32>
    %180 = vector.shape_cast %179 : vector<1x8x32xf32> to vector<8x32xf32>
    %181 = vector.shape_cast %178 : vector<8x32xf32> to vector<1x8x32xf32>
    tpu.vector_store %arg12[%c2_75, %c0_76, %c0_77], %181 {strides = array<i32>} : memref<8x8x32xf32, #tpu.memory_space<vmem>>, vector<1x8x32xf32>,
    %c3_78 = arith.constant 3 : index
    %c0_79 = arith.constant 0 : index
    %c0_80 = arith.constant 0 : index
    %182 = vector.load %arg11[%c3_78, %c0_79, %c0_80] : memref<8x8x128xf32, #tpu.memory_space<vmem>>, vector<1x8x128xf32>
    %183 = vector.shape_cast %182 : vector<1x8x128xf32> to vector<8x128xf32>
    %cst_81 = arith.constant dense<0.000000e+00> : vector<8x128xf32>
    %184 = tpu.matmul %178, %76, %cst_81 {dimension_numbers = #tpu.dot_dimension_numbers<[1], [0], [0], [1], [0, 0, 1, 1], [], []>} : vector<8x32xf32>, vector<32x128xf32>, vector<8x128xf32> -> vector<8x128xf32>
    %185 = vector.broadcast %78 : vector<1x128xf32> to vector<8x128xf32>
    %186 = arith.addf %184, %185 : vector<8x128xf32>
    %187 = vector.extract_strided_slice %183 {offsets = [0, 0], sizes = [8, 32], strides = [1, 1]} : vector<8x128xf32> to vector<8x32xf32>
    %188 = vector.extract_strided_slice %186 {offsets = [0, 0], sizes = [8, 32], strides = [1, 1]} : vector<8x128xf32> to vector<8x32xf32>
    %189 = arith.addf %187, %188 : vector<8x32xf32>
    %190 = arith.negf %189 : vector<8x32xf32>
    %191 = math.exp %190 : vector<8x32xf32>
    %cst_82 = arith.constant 1.000000e+00 : f32
    %192 = vector.broadcast %cst_82 : f32 to vector<8x32xf32>
    %193 = arith.addf %192, %191 : vector<8x32xf32>
    %194 = arith.divf %192, %193 : vector<8x32xf32>
    %195 = vector.extract_strided_slice %183 {offsets = [0, 32], sizes = [8, 32], strides = [1, 1]} : vector<8x128xf32> to vector<8x32xf32>
    %196 = vector.extract_strided_slice %186 {offsets = [0, 32], sizes = [8, 32], strides = [1, 1]} : vector<8x128xf32> to vector<8x32xf32>
    %197 = arith.addf %195, %196 : vector<8x32xf32>
    %198 = arith.negf %197 : vector<8x32xf32>
    %199 = math.exp %198 : vector<8x32xf32>
    %cst_83 = arith.constant 1.000000e+00 : f32
    %200 = vector.broadcast %cst_83 : f32 to vector<8x32xf32>
    %201 = arith.addf %200, %199 : vector<8x32xf32>
    %202 = arith.divf %200, %201 : vector<8x32xf32>
    %203 = vector.extract_strided_slice %183 {offsets = [0, 64], sizes = [8, 32], strides = [1, 1]} : vector<8x128xf32> to vector<8x32xf32>
    %204 = vector.extract_strided_slice %186 {offsets = [0, 64], sizes = [8, 32], strides = [1, 1]} : vector<8x128xf32> to vector<8x32xf32>
    %205 = arith.mulf %194, %204 : vector<8x32xf32>
    %206 = arith.addf %203, %205 : vector<8x32xf32>
    %207 = math.tanh %206 : vector<8x32xf32>
    %cst_84 = arith.constant 1.000000e+00 : f32
    %208 = vector.broadcast %cst_84 : f32 to vector<8x32xf32>
    %209 = arith.subf %208, %202 : vector<8x32xf32>
    %210 = arith.mulf %209, %207 : vector<8x32xf32>
    %211 = arith.mulf %202, %178 : vector<8x32xf32>
    %212 = arith.addf %210, %211 : vector<8x32xf32>
    %c3_85 = arith.constant 3 : index
    %c0_86 = arith.constant 0 : index
    %c0_87 = arith.constant 0 : index
    %213 = vector.load %arg12[%c3_85, %c0_86, %c0_87] : memref<8x8x32xf32, #tpu.memory_space<vmem>>, vector<1x8x32xf32>
    %214 = vector.shape_cast %213 : vector<1x8x32xf32> to vector<8x32xf32>
    %215 = vector.shape_cast %212 : vector<8x32xf32> to vector<1x8x32xf32>
    tpu.vector_store %arg12[%c3_85, %c0_86, %c0_87], %215 {strides = array<i32>} : memref<8x8x32xf32, #tpu.memory_space<vmem>>, vector<1x8x32xf32>,
    %c4_88 = arith.constant 4 : index
    %c0_89 = arith.constant 0 : index
    %c0_90 = arith.constant 0 : index
    %216 = vector.load %arg11[%c4_88, %c0_89, %c0_90] : memref<8x8x128xf32, #tpu.memory_space<vmem>>, vector<1x8x128xf32>
    %217 = vector.shape_cast %216 : vector<1x8x128xf32> to vector<8x128xf32>
    %cst_91 = arith.constant dense<0.000000e+00> : vector<8x128xf32>
    %218 = tpu.matmul %212, %76, %cst_91 {dimension_numbers = #tpu.dot_dimension_numbers<[1], [0], [0], [1], [0, 0, 1, 1], [], []>} : vector<8x32xf32>, vector<32x128xf32>, vector<8x128xf32> -> vector<8x128xf32>
    %219 = vector.broadcast %78 : vector<1x128xf32> to vector<8x128xf32>
    %220 = arith.addf %218, %219 : vector<8x128xf32>
    %221 = vector.extract_strided_slice %217 {offsets = [0, 0], sizes = [8, 32], strides = [1, 1]} : vector<8x128xf32> to vector<8x32xf32>
    %222 = vector.extract_strided_slice %220 {offsets = [0, 0], sizes = [8, 32], strides = [1, 1]} : vector<8x128xf32> to vector<8x32xf32>
    %223 = arith.addf %221, %222 : vector<8x32xf32>
    %224 = arith.negf %223 : vector<8x32xf32>
    %225 = math.exp %224 : vector<8x32xf32>
    %cst_92 = arith.constant 1.000000e+00 : f32
    %226 = vector.broadcast %cst_92 : f32 to vector<8x32xf32>
    %227 = arith.addf %226, %225 : vector<8x32xf32>
    %228 = arith.divf %226, %227 : vector<8x32xf32>
    %229 = vector.extract_strided_slice %217 {offsets = [0, 32], sizes = [8, 32], strides = [1, 1]} : vector<8x128xf32> to vector<8x32xf32>
    %230 = vector.extract_strided_slice %220 {offsets = [0, 32], sizes = [8, 32], strides = [1, 1]} : vector<8x128xf32> to vector<8x32xf32>
    %231 = arith.addf %229, %230 : vector<8x32xf32>
    %232 = arith.negf %231 : vector<8x32xf32>
    %233 = math.exp %232 : vector<8x32xf32>
    %cst_93 = arith.constant 1.000000e+00 : f32
    %234 = vector.broadcast %cst_93 : f32 to vector<8x32xf32>
    %235 = arith.addf %234, %233 : vector<8x32xf32>
    %236 = arith.divf %234, %235 : vector<8x32xf32>
    %237 = vector.extract_strided_slice %217 {offsets = [0, 64], sizes = [8, 32], strides = [1, 1]} : vector<8x128xf32> to vector<8x32xf32>
    %238 = vector.extract_strided_slice %220 {offsets = [0, 64], sizes = [8, 32], strides = [1, 1]} : vector<8x128xf32> to vector<8x32xf32>
    %239 = arith.mulf %228, %238 : vector<8x32xf32>
    %240 = arith.addf %237, %239 : vector<8x32xf32>
    %241 = math.tanh %240 : vector<8x32xf32>
    %cst_94 = arith.constant 1.000000e+00 : f32
    %242 = vector.broadcast %cst_94 : f32 to vector<8x32xf32>
    %243 = arith.subf %242, %236 : vector<8x32xf32>
    %244 = arith.mulf %243, %241 : vector<8x32xf32>
    %245 = arith.mulf %236, %212 : vector<8x32xf32>
    %246 = arith.addf %244, %245 : vector<8x32xf32>
    %c4_95 = arith.constant 4 : index
    %c0_96 = arith.constant 0 : index
    %c0_97 = arith.constant 0 : index
    %247 = vector.load %arg12[%c4_95, %c0_96, %c0_97] : memref<8x8x32xf32, #tpu.memory_space<vmem>>, vector<1x8x32xf32>
    %248 = vector.shape_cast %247 : vector<1x8x32xf32> to vector<8x32xf32>
    %249 = vector.shape_cast %246 : vector<8x32xf32> to vector<1x8x32xf32>
    tpu.vector_store %arg12[%c4_95, %c0_96, %c0_97], %249 {strides = array<i32>} : memref<8x8x32xf32, #tpu.memory_space<vmem>>, vector<1x8x32xf32>,
    %c5_98 = arith.constant 5 : index
    %c0_99 = arith.constant 0 : index
    %c0_100 = arith.constant 0 : index
    %250 = vector.load %arg11[%c5_98, %c0_99, %c0_100] : memref<8x8x128xf32, #tpu.memory_space<vmem>>, vector<1x8x128xf32>
    %251 = vector.shape_cast %250 : vector<1x8x128xf32> to vector<8x128xf32>
    %cst_101 = arith.constant dense<0.000000e+00> : vector<8x128xf32>
    %252 = tpu.matmul %246, %76, %cst_101 {dimension_numbers = #tpu.dot_dimension_numbers<[1], [0], [0], [1], [0, 0, 1, 1], [], []>} : vector<8x32xf32>, vector<32x128xf32>, vector<8x128xf32> -> vector<8x128xf32>
    %253 = vector.broadcast %78 : vector<1x128xf32> to vector<8x128xf32>
    %254 = arith.addf %252, %253 : vector<8x128xf32>
    %255 = vector.extract_strided_slice %251 {offsets = [0, 0], sizes = [8, 32], strides = [1, 1]} : vector<8x128xf32> to vector<8x32xf32>
    %256 = vector.extract_strided_slice %254 {offsets = [0, 0], sizes = [8, 32], strides = [1, 1]} : vector<8x128xf32> to vector<8x32xf32>
    %257 = arith.addf %255, %256 : vector<8x32xf32>
    %258 = arith.negf %257 : vector<8x32xf32>
    %259 = math.exp %258 : vector<8x32xf32>
    %cst_102 = arith.constant 1.000000e+00 : f32
    %260 = vector.broadcast %cst_102 : f32 to vector<8x32xf32>
    %261 = arith.addf %260, %259 : vector<8x32xf32>
    %262 = arith.divf %260, %261 : vector<8x32xf32>
    %263 = vector.extract_strided_slice %251 {offsets = [0, 32], sizes = [8, 32], strides = [1, 1]} : vector<8x128xf32> to vector<8x32xf32>
    %264 = vector.extract_strided_slice %254 {offsets = [0, 32], sizes = [8, 32], strides = [1, 1]} : vector<8x128xf32> to vector<8x32xf32>
    %265 = arith.addf %263, %264 : vector<8x32xf32>
    %266 = arith.negf %265 : vector<8x32xf32>
    %267 = math.exp %266 : vector<8x32xf32>
    %cst_103 = arith.constant 1.000000e+00 : f32
    %268 = vector.broadcast %cst_103 : f32 to vector<8x32xf32>
    %269 = arith.addf %268, %267 : vector<8x32xf32>
    %270 = arith.divf %268, %269 : vector<8x32xf32>
    %271 = vector.extract_strided_slice %251 {offsets = [0, 64], sizes = [8, 32], strides = [1, 1]} : vector<8x128xf32> to vector<8x32xf32>
    %272 = vector.extract_strided_slice %254 {offsets = [0, 64], sizes = [8, 32], strides = [1, 1]} : vector<8x128xf32> to vector<8x32xf32>
    %273 = arith.mulf %262, %272 : vector<8x32xf32>
    %274 = arith.addf %271, %273 : vector<8x32xf32>
    %275 = math.tanh %274 : vector<8x32xf32>
    %cst_104 = arith.constant 1.000000e+00 : f32
    %276 = vector.broadcast %cst_104 : f32 to vector<8x32xf32>
    %277 = arith.subf %276, %270 : vector<8x32xf32>
    %278 = arith.mulf %277, %275 : vector<8x32xf32>
    %279 = arith.mulf %270, %246 : vector<8x32xf32>
    %280 = arith.addf %278, %279 : vector<8x32xf32>
    %c5_105 = arith.constant 5 : index
    %c0_106 = arith.constant 0 : index
    %c0_107 = arith.constant 0 : index
    %281 = vector.load %arg12[%c5_105, %c0_106, %c0_107] : memref<8x8x32xf32, #tpu.memory_space<vmem>>, vector<1x8x32xf32>
    %282 = vector.shape_cast %281 : vector<1x8x32xf32> to vector<8x32xf32>
    %283 = vector.shape_cast %280 : vector<8x32xf32> to vector<1x8x32xf32>
    tpu.vector_store %arg12[%c5_105, %c0_106, %c0_107], %283 {strides = array<i32>} : memref<8x8x32xf32, #tpu.memory_space<vmem>>, vector<1x8x32xf32>,
    %c6_108 = arith.constant 6 : index
    %c0_109 = arith.constant 0 : index
    %c0_110 = arith.constant 0 : index
    %284 = vector.load %arg11[%c6_108, %c0_109, %c0_110] : memref<8x8x128xf32, #tpu.memory_space<vmem>>, vector<1x8x128xf32>
    %285 = vector.shape_cast %284 : vector<1x8x128xf32> to vector<8x128xf32>
    %cst_111 = arith.constant dense<0.000000e+00> : vector<8x128xf32>
    %286 = tpu.matmul %280, %76, %cst_111 {dimension_numbers = #tpu.dot_dimension_numbers<[1], [0], [0], [1], [0, 0, 1, 1], [], []>} : vector<8x32xf32>, vector<32x128xf32>, vector<8x128xf32> -> vector<8x128xf32>
    %287 = vector.broadcast %78 : vector<1x128xf32> to vector<8x128xf32>
    %288 = arith.addf %286, %287 : vector<8x128xf32>
    %289 = vector.extract_strided_slice %285 {offsets = [0, 0], sizes = [8, 32], strides = [1, 1]} : vector<8x128xf32> to vector<8x32xf32>
    %290 = vector.extract_strided_slice %288 {offsets = [0, 0], sizes = [8, 32], strides = [1, 1]} : vector<8x128xf32> to vector<8x32xf32>
    %291 = arith.addf %289, %290 : vector<8x32xf32>
    %292 = arith.negf %291 : vector<8x32xf32>
    %293 = math.exp %292 : vector<8x32xf32>
    %cst_112 = arith.constant 1.000000e+00 : f32
    %294 = vector.broadcast %cst_112 : f32 to vector<8x32xf32>
    %295 = arith.addf %294, %293 : vector<8x32xf32>
    %296 = arith.divf %294, %295 : vector<8x32xf32>
    %297 = vector.extract_strided_slice %285 {offsets = [0, 32], sizes = [8, 32], strides = [1, 1]} : vector<8x128xf32> to vector<8x32xf32>
    %298 = vector.extract_strided_slice %288 {offsets = [0, 32], sizes = [8, 32], strides = [1, 1]} : vector<8x128xf32> to vector<8x32xf32>
    %299 = arith.addf %297, %298 : vector<8x32xf32>
    %300 = arith.negf %299 : vector<8x32xf32>
    %301 = math.exp %300 : vector<8x32xf32>
    %cst_113 = arith.constant 1.000000e+00 : f32
    %302 = vector.broadcast %cst_113 : f32 to vector<8x32xf32>
    %303 = arith.addf %302, %301 : vector<8x32xf32>
    %304 = arith.divf %302, %303 : vector<8x32xf32>
    %305 = vector.extract_strided_slice %285 {offsets = [0, 64], sizes = [8, 32], strides = [1, 1]} : vector<8x128xf32> to vector<8x32xf32>
    %306 = vector.extract_strided_slice %288 {offsets = [0, 64], sizes = [8, 32], strides = [1, 1]} : vector<8x128xf32> to vector<8x32xf32>
    %307 = arith.mulf %296, %306 : vector<8x32xf32>
    %308 = arith.addf %305, %307 : vector<8x32xf32>
    %309 = math.tanh %308 : vector<8x32xf32>
    %cst_114 = arith.constant 1.000000e+00 : f32
    %310 = vector.broadcast %cst_114 : f32 to vector<8x32xf32>
    %311 = arith.subf %310, %304 : vector<8x32xf32>
    %312 = arith.mulf %311, %309 : vector<8x32xf32>
    %313 = arith.mulf %304, %280 : vector<8x32xf32>
    %314 = arith.addf %312, %313 : vector<8x32xf32>
    %c6_115 = arith.constant 6 : index
    %c0_116 = arith.constant 0 : index
    %c0_117 = arith.constant 0 : index
    %315 = vector.load %arg12[%c6_115, %c0_116, %c0_117] : memref<8x8x32xf32, #tpu.memory_space<vmem>>, vector<1x8x32xf32>
    %316 = vector.shape_cast %315 : vector<1x8x32xf32> to vector<8x32xf32>
    %317 = vector.shape_cast %314 : vector<8x32xf32> to vector<1x8x32xf32>
    tpu.vector_store %arg12[%c6_115, %c0_116, %c0_117], %317 {strides = array<i32>} : memref<8x8x32xf32, #tpu.memory_space<vmem>>, vector<1x8x32xf32>,
    %c7_118 = arith.constant 7 : index
    %c0_119 = arith.constant 0 : index
    %c0_120 = arith.constant 0 : index
    %318 = vector.load %arg11[%c7_118, %c0_119, %c0_120] : memref<8x8x128xf32, #tpu.memory_space<vmem>>, vector<1x8x128xf32>
    %319 = vector.shape_cast %318 : vector<1x8x128xf32> to vector<8x128xf32>
    %cst_121 = arith.constant dense<0.000000e+00> : vector<8x128xf32>
    %320 = tpu.matmul %314, %76, %cst_121 {dimension_numbers = #tpu.dot_dimension_numbers<[1], [0], [0], [1], [0, 0, 1, 1], [], []>} : vector<8x32xf32>, vector<32x128xf32>, vector<8x128xf32> -> vector<8x128xf32>
    %321 = vector.broadcast %78 : vector<1x128xf32> to vector<8x128xf32>
    %322 = arith.addf %320, %321 : vector<8x128xf32>
    %323 = vector.extract_strided_slice %319 {offsets = [0, 0], sizes = [8, 32], strides = [1, 1]} : vector<8x128xf32> to vector<8x32xf32>
    %324 = vector.extract_strided_slice %322 {offsets = [0, 0], sizes = [8, 32], strides = [1, 1]} : vector<8x128xf32> to vector<8x32xf32>
    %325 = arith.addf %323, %324 : vector<8x32xf32>
    %326 = arith.negf %325 : vector<8x32xf32>
    %327 = math.exp %326 : vector<8x32xf32>
    %cst_122 = arith.constant 1.000000e+00 : f32
    %328 = vector.broadcast %cst_122 : f32 to vector<8x32xf32>
    %329 = arith.addf %328, %327 : vector<8x32xf32>
    %330 = arith.divf %328, %329 : vector<8x32xf32>
    %331 = vector.extract_strided_slice %319 {offsets = [0, 32], sizes = [8, 32], strides = [1, 1]} : vector<8x128xf32> to vector<8x32xf32>
    %332 = vector.extract_strided_slice %322 {offsets = [0, 32], sizes = [8, 32], strides = [1, 1]} : vector<8x128xf32> to vector<8x32xf32>
    %333 = arith.addf %331, %332 : vector<8x32xf32>
    %334 = arith.negf %333 : vector<8x32xf32>
    %335 = math.exp %334 : vector<8x32xf32>
    %cst_123 = arith.constant 1.000000e+00 : f32
    %336 = vector.broadcast %cst_123 : f32 to vector<8x32xf32>
    %337 = arith.addf %336, %335 : vector<8x32xf32>
    %338 = arith.divf %336, %337 : vector<8x32xf32>
    %339 = vector.extract_strided_slice %319 {offsets = [0, 64], sizes = [8, 32], strides = [1, 1]} : vector<8x128xf32> to vector<8x32xf32>
    %340 = vector.extract_strided_slice %322 {offsets = [0, 64], sizes = [8, 32], strides = [1, 1]} : vector<8x128xf32> to vector<8x32xf32>
    %341 = arith.mulf %330, %340 : vector<8x32xf32>
    %342 = arith.addf %339, %341 : vector<8x32xf32>
    %343 = math.tanh %342 : vector<8x32xf32>
    %cst_124 = arith.constant 1.000000e+00 : f32
    %344 = vector.broadcast %cst_124 : f32 to vector<8x32xf32>
    %345 = arith.subf %344, %338 : vector<8x32xf32>
    %346 = arith.mulf %345, %343 : vector<8x32xf32>
    %347 = arith.mulf %338, %314 : vector<8x32xf32>
    %348 = arith.addf %346, %347 : vector<8x32xf32>
    %c7_125 = arith.constant 7 : index
    %c0_126 = arith.constant 0 : index
    %c0_127 = arith.constant 0 : index
    %349 = vector.load %arg12[%c7_125, %c0_126, %c0_127] : memref<8x8x32xf32, #tpu.memory_space<vmem>>, vector<1x8x32xf32>
    %350 = vector.shape_cast %349 : vector<1x8x32xf32> to vector<8x32xf32>
    %351 = vector.shape_cast %348 : vector<8x32xf32> to vector<1x8x32xf32>
    tpu.vector_store %arg12[%c7_125, %c0_126, %c0_127], %351 {strides = array<i32>} : memref<8x8x32xf32, #tpu.memory_space<vmem>>, vector<1x8x32xf32>,
    %c0_128 = arith.constant 0 : index
    %c0_129 = arith.constant 0 : index
    %c0_130 = arith.constant 0 : index
    %352 = vector.load %arg12[%c0_128, %c0_129, %c0_130] : memref<8x8x32xf32, #tpu.memory_space<vmem>>, vector<8x8x32xf32>
    %353 = vector.shape_cast %352 : vector<8x8x32xf32> to vector<64x32xf32>
    %c1_131 = arith.constant 1 : index
    %c0_132 = arith.constant 0 : index
    %c0_133 = arith.constant 0 : index
    %354 = vector.load %arg4[%c1_131, %c0_132, %c0_133] : memref<2x32x128xf32, #tpu.memory_space<vmem>>, vector<1x32x128xf32>
    %355 = vector.shape_cast %354 : vector<1x32x128xf32> to vector<32x128xf32>
    %cst_134 = arith.constant dense<0.000000e+00> : vector<64x128xf32>
    %356 = tpu.matmul %353, %355, %cst_134 {dimension_numbers = #tpu.dot_dimension_numbers<[1], [0], [0], [1], [0, 0, 1, 1], [], []>} : vector<64x32xf32>, vector<32x128xf32>, vector<64x128xf32> -> vector<64x128xf32>
    %c1_135 = arith.constant 1 : index
    %c0_136 = arith.constant 0 : index
    %c0_137 = arith.constant 0 : index
    %357 = vector.load %arg5[%c1_135, %c0_136, %c0_137] : memref<2x1x128xf32, #tpu.memory_space<vmem>>, vector<1x1x128xf32>
    %358 = vector.shape_cast %357 : vector<1x1x128xf32> to vector<1x128xf32>
    %359 = vector.broadcast %358 : vector<1x128xf32> to vector<64x128xf32>
    %360 = arith.addf %356, %359 : vector<64x128xf32>
    %361 = vector.shape_cast %360 : vector<64x128xf32> to vector<8x8x128xf32>
    %c0_138 = arith.constant 0 : index
    %c0_139 = arith.constant 0 : index
    %c0_140 = arith.constant 0 : index
    %362 = vector.load %arg11[%c0_138, %c0_139, %c0_140] : memref<8x8x128xf32, #tpu.memory_space<vmem>>, vector<8x8x128xf32>
    tpu.vector_store %arg11[%c0_138, %c0_139, %c0_140], %361 {strides = array<i32>} : memref<8x8x128xf32, #tpu.memory_space<vmem>>, vector<8x8x128xf32>,
    %c1_141 = arith.constant 1 : index
    %c0_142 = arith.constant 0 : index
    %c0_143 = arith.constant 0 : index
    %363 = vector.load %arg6[%c1_141, %c0_142, %c0_143] : memref<2x32x128xf32, #tpu.memory_space<vmem>>, vector<1x32x128xf32>
    %364 = vector.shape_cast %363 : vector<1x32x128xf32> to vector<32x128xf32>
    %c1_144 = arith.constant 1 : index
    %c0_145 = arith.constant 0 : index
    %c0_146 = arith.constant 0 : index
    %365 = vector.load %arg7[%c1_144, %c0_145, %c0_146] : memref<2x1x128xf32, #tpu.memory_space<vmem>>, vector<1x1x128xf32>
    %366 = vector.shape_cast %365 : vector<1x1x128xf32> to vector<1x128xf32>
    %cst_147 = arith.constant 0.000000e+00 : f32
    %367 = vector.broadcast %cst_147 : f32 to vector<8x32xf32>
    %c0_148 = arith.constant 0 : index
    %c0_149 = arith.constant 0 : index
    %c0_150 = arith.constant 0 : index
    %368 = vector.load %arg11[%c0_148, %c0_149, %c0_150] : memref<8x8x128xf32, #tpu.memory_space<vmem>>, vector<1x8x128xf32>
    %369 = vector.shape_cast %368 : vector<1x8x128xf32> to vector<8x128xf32>
    %cst_151 = arith.constant dense<0.000000e+00> : vector<8x128xf32>
    %370 = tpu.matmul %367, %364, %cst_151 {dimension_numbers = #tpu.dot_dimension_numbers<[1], [0], [0], [1], [0, 0, 1, 1], [], []>} : vector<8x32xf32>, vector<32x128xf32>, vector<8x128xf32> -> vector<8x128xf32>
    %371 = vector.broadcast %366 : vector<1x128xf32> to vector<8x128xf32>
    %372 = arith.addf %370, %371 : vector<8x128xf32>
    %373 = vector.extract_strided_slice %369 {offsets = [0, 0], sizes = [8, 32], strides = [1, 1]} : vector<8x128xf32> to vector<8x32xf32>
    %374 = vector.extract_strided_slice %372 {offsets = [0, 0], sizes = [8, 32], strides = [1, 1]} : vector<8x128xf32> to vector<8x32xf32>
    %375 = arith.addf %373, %374 : vector<8x32xf32>
    %376 = arith.negf %375 : vector<8x32xf32>
    %377 = math.exp %376 : vector<8x32xf32>
    %cst_152 = arith.constant 1.000000e+00 : f32
    %378 = vector.broadcast %cst_152 : f32 to vector<8x32xf32>
    %379 = arith.addf %378, %377 : vector<8x32xf32>
    %380 = arith.divf %378, %379 : vector<8x32xf32>
    %381 = vector.extract_strided_slice %369 {offsets = [0, 32], sizes = [8, 32], strides = [1, 1]} : vector<8x128xf32> to vector<8x32xf32>
    %382 = vector.extract_strided_slice %372 {offsets = [0, 32], sizes = [8, 32], strides = [1, 1]} : vector<8x128xf32> to vector<8x32xf32>
    %383 = arith.addf %381, %382 : vector<8x32xf32>
    %384 = arith.negf %383 : vector<8x32xf32>
    %385 = math.exp %384 : vector<8x32xf32>
    %cst_153 = arith.constant 1.000000e+00 : f32
    %386 = vector.broadcast %cst_153 : f32 to vector<8x32xf32>
    %387 = arith.addf %386, %385 : vector<8x32xf32>
    %388 = arith.divf %386, %387 : vector<8x32xf32>
    %389 = vector.extract_strided_slice %369 {offsets = [0, 64], sizes = [8, 32], strides = [1, 1]} : vector<8x128xf32> to vector<8x32xf32>
    %390 = vector.extract_strided_slice %372 {offsets = [0, 64], sizes = [8, 32], strides = [1, 1]} : vector<8x128xf32> to vector<8x32xf32>
    %391 = arith.mulf %380, %390 : vector<8x32xf32>
    %392 = arith.addf %389, %391 : vector<8x32xf32>
    %393 = math.tanh %392 : vector<8x32xf32>
    %cst_154 = arith.constant 1.000000e+00 : f32
    %394 = vector.broadcast %cst_154 : f32 to vector<8x32xf32>
    %395 = arith.subf %394, %388 : vector<8x32xf32>
    %396 = arith.mulf %395, %393 : vector<8x32xf32>
    %397 = arith.mulf %388, %367 : vector<8x32xf32>
    %398 = arith.addf %396, %397 : vector<8x32xf32>
    %c1_155 = arith.constant 1 : index
    %c0_156 = arith.constant 0 : index
    %c0_157 = arith.constant 0 : index
    %399 = vector.load %arg11[%c1_155, %c0_156, %c0_157] : memref<8x8x128xf32, #tpu.memory_space<vmem>>, vector<1x8x128xf32>
    %400 = vector.shape_cast %399 : vector<1x8x128xf32> to vector<8x128xf32>
    %cst_158 = arith.constant dense<0.000000e+00> : vector<8x128xf32>
    %401 = tpu.matmul %398, %364, %cst_158 {dimension_numbers = #tpu.dot_dimension_numbers<[1], [0], [0], [1], [0, 0, 1, 1], [], []>} : vector<8x32xf32>, vector<32x128xf32>, vector<8x128xf32> -> vector<8x128xf32>
    %402 = vector.broadcast %366 : vector<1x128xf32> to vector<8x128xf32>
    %403 = arith.addf %401, %402 : vector<8x128xf32>
    %404 = vector.extract_strided_slice %400 {offsets = [0, 0], sizes = [8, 32], strides = [1, 1]} : vector<8x128xf32> to vector<8x32xf32>
    %405 = vector.extract_strided_slice %403 {offsets = [0, 0], sizes = [8, 32], strides = [1, 1]} : vector<8x128xf32> to vector<8x32xf32>
    %406 = arith.addf %404, %405 : vector<8x32xf32>
    %407 = arith.negf %406 : vector<8x32xf32>
    %408 = math.exp %407 : vector<8x32xf32>
    %cst_159 = arith.constant 1.000000e+00 : f32
    %409 = vector.broadcast %cst_159 : f32 to vector<8x32xf32>
    %410 = arith.addf %409, %408 : vector<8x32xf32>
    %411 = arith.divf %409, %410 : vector<8x32xf32>
    %412 = vector.extract_strided_slice %400 {offsets = [0, 32], sizes = [8, 32], strides = [1, 1]} : vector<8x128xf32> to vector<8x32xf32>
    %413 = vector.extract_strided_slice %403 {offsets = [0, 32], sizes = [8, 32], strides = [1, 1]} : vector<8x128xf32> to vector<8x32xf32>
    %414 = arith.addf %412, %413 : vector<8x32xf32>
    %415 = arith.negf %414 : vector<8x32xf32>
    %416 = math.exp %415 : vector<8x32xf32>
    %cst_160 = arith.constant 1.000000e+00 : f32
    %417 = vector.broadcast %cst_160 : f32 to vector<8x32xf32>
    %418 = arith.addf %417, %416 : vector<8x32xf32>
    %419 = arith.divf %417, %418 : vector<8x32xf32>
    %420 = vector.extract_strided_slice %400 {offsets = [0, 64], sizes = [8, 32], strides = [1, 1]} : vector<8x128xf32> to vector<8x32xf32>
    %421 = vector.extract_strided_slice %403 {offsets = [0, 64], sizes = [8, 32], strides = [1, 1]} : vector<8x128xf32> to vector<8x32xf32>
    %422 = arith.mulf %411, %421 : vector<8x32xf32>
    %423 = arith.addf %420, %422 : vector<8x32xf32>
    %424 = math.tanh %423 : vector<8x32xf32>
    %cst_161 = arith.constant 1.000000e+00 : f32
    %425 = vector.broadcast %cst_161 : f32 to vector<8x32xf32>
    %426 = arith.subf %425, %419 : vector<8x32xf32>
    %427 = arith.mulf %426, %424 : vector<8x32xf32>
    %428 = arith.mulf %419, %398 : vector<8x32xf32>
    %429 = arith.addf %427, %428 : vector<8x32xf32>
    %c2_162 = arith.constant 2 : index
    %c0_163 = arith.constant 0 : index
    %c0_164 = arith.constant 0 : index
    %430 = vector.load %arg11[%c2_162, %c0_163, %c0_164] : memref<8x8x128xf32, #tpu.memory_space<vmem>>, vector<1x8x128xf32>
    %431 = vector.shape_cast %430 : vector<1x8x128xf32> to vector<8x128xf32>
    %cst_165 = arith.constant dense<0.000000e+00> : vector<8x128xf32>
    %432 = tpu.matmul %429, %364, %cst_165 {dimension_numbers = #tpu.dot_dimension_numbers<[1], [0], [0], [1], [0, 0, 1, 1], [], []>} : vector<8x32xf32>, vector<32x128xf32>, vector<8x128xf32> -> vector<8x128xf32>
    %433 = vector.broadcast %366 : vector<1x128xf32> to vector<8x128xf32>
    %434 = arith.addf %432, %433 : vector<8x128xf32>
    %435 = vector.extract_strided_slice %431 {offsets = [0, 0], sizes = [8, 32], strides = [1, 1]} : vector<8x128xf32> to vector<8x32xf32>
    %436 = vector.extract_strided_slice %434 {offsets = [0, 0], sizes = [8, 32], strides = [1, 1]} : vector<8x128xf32> to vector<8x32xf32>
    %437 = arith.addf %435, %436 : vector<8x32xf32>
    %438 = arith.negf %437 : vector<8x32xf32>
    %439 = math.exp %438 : vector<8x32xf32>
    %cst_166 = arith.constant 1.000000e+00 : f32
    %440 = vector.broadcast %cst_166 : f32 to vector<8x32xf32>
    %441 = arith.addf %440, %439 : vector<8x32xf32>
    %442 = arith.divf %440, %441 : vector<8x32xf32>
    %443 = vector.extract_strided_slice %431 {offsets = [0, 32], sizes = [8, 32], strides = [1, 1]} : vector<8x128xf32> to vector<8x32xf32>
    %444 = vector.extract_strided_slice %434 {offsets = [0, 32], sizes = [8, 32], strides = [1, 1]} : vector<8x128xf32> to vector<8x32xf32>
    %445 = arith.addf %443, %444 : vector<8x32xf32>
    %446 = arith.negf %445 : vector<8x32xf32>
    %447 = math.exp %446 : vector<8x32xf32>
    %cst_167 = arith.constant 1.000000e+00 : f32
    %448 = vector.broadcast %cst_167 : f32 to vector<8x32xf32>
    %449 = arith.addf %448, %447 : vector<8x32xf32>
    %450 = arith.divf %448, %449 : vector<8x32xf32>
    %451 = vector.extract_strided_slice %431 {offsets = [0, 64], sizes = [8, 32], strides = [1, 1]} : vector<8x128xf32> to vector<8x32xf32>
    %452 = vector.extract_strided_slice %434 {offsets = [0, 64], sizes = [8, 32], strides = [1, 1]} : vector<8x128xf32> to vector<8x32xf32>
    %453 = arith.mulf %442, %452 : vector<8x32xf32>
    %454 = arith.addf %451, %453 : vector<8x32xf32>
    %455 = math.tanh %454 : vector<8x32xf32>
    %cst_168 = arith.constant 1.000000e+00 : f32
    %456 = vector.broadcast %cst_168 : f32 to vector<8x32xf32>
    %457 = arith.subf %456, %450 : vector<8x32xf32>
    %458 = arith.mulf %457, %455 : vector<8x32xf32>
    %459 = arith.mulf %450, %429 : vector<8x32xf32>
    %460 = arith.addf %458, %459 : vector<8x32xf32>
    %c3_169 = arith.constant 3 : index
    %c0_170 = arith.constant 0 : index
    %c0_171 = arith.constant 0 : index
    %461 = vector.load %arg11[%c3_169, %c0_170, %c0_171] : memref<8x8x128xf32, #tpu.memory_space<vmem>>, vector<1x8x128xf32>
    %462 = vector.shape_cast %461 : vector<1x8x128xf32> to vector<8x128xf32>
    %cst_172 = arith.constant dense<0.000000e+00> : vector<8x128xf32>
    %463 = tpu.matmul %460, %364, %cst_172 {dimension_numbers = #tpu.dot_dimension_numbers<[1], [0], [0], [1], [0, 0, 1, 1], [], []>} : vector<8x32xf32>, vector<32x128xf32>, vector<8x128xf32> -> vector<8x128xf32>
    %464 = vector.broadcast %366 : vector<1x128xf32> to vector<8x128xf32>
    %465 = arith.addf %463, %464 : vector<8x128xf32>
    %466 = vector.extract_strided_slice %462 {offsets = [0, 0], sizes = [8, 32], strides = [1, 1]} : vector<8x128xf32> to vector<8x32xf32>
    %467 = vector.extract_strided_slice %465 {offsets = [0, 0], sizes = [8, 32], strides = [1, 1]} : vector<8x128xf32> to vector<8x32xf32>
    %468 = arith.addf %466, %467 : vector<8x32xf32>
    %469 = arith.negf %468 : vector<8x32xf32>
    %470 = math.exp %469 : vector<8x32xf32>
    %cst_173 = arith.constant 1.000000e+00 : f32
    %471 = vector.broadcast %cst_173 : f32 to vector<8x32xf32>
    %472 = arith.addf %471, %470 : vector<8x32xf32>
    %473 = arith.divf %471, %472 : vector<8x32xf32>
    %474 = vector.extract_strided_slice %462 {offsets = [0, 32], sizes = [8, 32], strides = [1, 1]} : vector<8x128xf32> to vector<8x32xf32>
    %475 = vector.extract_strided_slice %465 {offsets = [0, 32], sizes = [8, 32], strides = [1, 1]} : vector<8x128xf32> to vector<8x32xf32>
    %476 = arith.addf %474, %475 : vector<8x32xf32>
    %477 = arith.negf %476 : vector<8x32xf32>
    %478 = math.exp %477 : vector<8x32xf32>
    %cst_174 = arith.constant 1.000000e+00 : f32
    %479 = vector.broadcast %cst_174 : f32 to vector<8x32xf32>
    %480 = arith.addf %479, %478 : vector<8x32xf32>
    %481 = arith.divf %479, %480 : vector<8x32xf32>
    %482 = vector.extract_strided_slice %462 {offsets = [0, 64], sizes = [8, 32], strides = [1, 1]} : vector<8x128xf32> to vector<8x32xf32>
    %483 = vector.extract_strided_slice %465 {offsets = [0, 64], sizes = [8, 32], strides = [1, 1]} : vector<8x128xf32> to vector<8x32xf32>
    %484 = arith.mulf %473, %483 : vector<8x32xf32>
    %485 = arith.addf %482, %484 : vector<8x32xf32>
    %486 = math.tanh %485 : vector<8x32xf32>
    %cst_175 = arith.constant 1.000000e+00 : f32
    %487 = vector.broadcast %cst_175 : f32 to vector<8x32xf32>
    %488 = arith.subf %487, %481 : vector<8x32xf32>
    %489 = arith.mulf %488, %486 : vector<8x32xf32>
    %490 = arith.mulf %481, %460 : vector<8x32xf32>
    %491 = arith.addf %489, %490 : vector<8x32xf32>
    %c4_176 = arith.constant 4 : index
    %c0_177 = arith.constant 0 : index
    %c0_178 = arith.constant 0 : index
    %492 = vector.load %arg11[%c4_176, %c0_177, %c0_178] : memref<8x8x128xf32, #tpu.memory_space<vmem>>, vector<1x8x128xf32>
    %493 = vector.shape_cast %492 : vector<1x8x128xf32> to vector<8x128xf32>
    %cst_179 = arith.constant dense<0.000000e+00> : vector<8x128xf32>
    %494 = tpu.matmul %491, %364, %cst_179 {dimension_numbers = #tpu.dot_dimension_numbers<[1], [0], [0], [1], [0, 0, 1, 1], [], []>} : vector<8x32xf32>, vector<32x128xf32>, vector<8x128xf32> -> vector<8x128xf32>
    %495 = vector.broadcast %366 : vector<1x128xf32> to vector<8x128xf32>
    %496 = arith.addf %494, %495 : vector<8x128xf32>
    %497 = vector.extract_strided_slice %493 {offsets = [0, 0], sizes = [8, 32], strides = [1, 1]} : vector<8x128xf32> to vector<8x32xf32>
    %498 = vector.extract_strided_slice %496 {offsets = [0, 0], sizes = [8, 32], strides = [1, 1]} : vector<8x128xf32> to vector<8x32xf32>
    %499 = arith.addf %497, %498 : vector<8x32xf32>
    %500 = arith.negf %499 : vector<8x32xf32>
    %501 = math.exp %500 : vector<8x32xf32>
    %cst_180 = arith.constant 1.000000e+00 : f32
    %502 = vector.broadcast %cst_180 : f32 to vector<8x32xf32>
    %503 = arith.addf %502, %501 : vector<8x32xf32>
    %504 = arith.divf %502, %503 : vector<8x32xf32>
    %505 = vector.extract_strided_slice %493 {offsets = [0, 32], sizes = [8, 32], strides = [1, 1]} : vector<8x128xf32> to vector<8x32xf32>
    %506 = vector.extract_strided_slice %496 {offsets = [0, 32], sizes = [8, 32], strides = [1, 1]} : vector<8x128xf32> to vector<8x32xf32>
    %507 = arith.addf %505, %506 : vector<8x32xf32>
    %508 = arith.negf %507 : vector<8x32xf32>
    %509 = math.exp %508 : vector<8x32xf32>
    %cst_181 = arith.constant 1.000000e+00 : f32
    %510 = vector.broadcast %cst_181 : f32 to vector<8x32xf32>
    %511 = arith.addf %510, %509 : vector<8x32xf32>
    %512 = arith.divf %510, %511 : vector<8x32xf32>
    %513 = vector.extract_strided_slice %493 {offsets = [0, 64], sizes = [8, 32], strides = [1, 1]} : vector<8x128xf32> to vector<8x32xf32>
    %514 = vector.extract_strided_slice %496 {offsets = [0, 64], sizes = [8, 32], strides = [1, 1]} : vector<8x128xf32> to vector<8x32xf32>
    %515 = arith.mulf %504, %514 : vector<8x32xf32>
    %516 = arith.addf %513, %515 : vector<8x32xf32>
    %517 = math.tanh %516 : vector<8x32xf32>
    %cst_182 = arith.constant 1.000000e+00 : f32
    %518 = vector.broadcast %cst_182 : f32 to vector<8x32xf32>
    %519 = arith.subf %518, %512 : vector<8x32xf32>
    %520 = arith.mulf %519, %517 : vector<8x32xf32>
    %521 = arith.mulf %512, %491 : vector<8x32xf32>
    %522 = arith.addf %520, %521 : vector<8x32xf32>
    %c5_183 = arith.constant 5 : index
    %c0_184 = arith.constant 0 : index
    %c0_185 = arith.constant 0 : index
    %523 = vector.load %arg11[%c5_183, %c0_184, %c0_185] : memref<8x8x128xf32, #tpu.memory_space<vmem>>, vector<1x8x128xf32>
    %524 = vector.shape_cast %523 : vector<1x8x128xf32> to vector<8x128xf32>
    %cst_186 = arith.constant dense<0.000000e+00> : vector<8x128xf32>
    %525 = tpu.matmul %522, %364, %cst_186 {dimension_numbers = #tpu.dot_dimension_numbers<[1], [0], [0], [1], [0, 0, 1, 1], [], []>} : vector<8x32xf32>, vector<32x128xf32>, vector<8x128xf32> -> vector<8x128xf32>
    %526 = vector.broadcast %366 : vector<1x128xf32> to vector<8x128xf32>
    %527 = arith.addf %525, %526 : vector<8x128xf32>
    %528 = vector.extract_strided_slice %524 {offsets = [0, 0], sizes = [8, 32], strides = [1, 1]} : vector<8x128xf32> to vector<8x32xf32>
    %529 = vector.extract_strided_slice %527 {offsets = [0, 0], sizes = [8, 32], strides = [1, 1]} : vector<8x128xf32> to vector<8x32xf32>
    %530 = arith.addf %528, %529 : vector<8x32xf32>
    %531 = arith.negf %530 : vector<8x32xf32>
    %532 = math.exp %531 : vector<8x32xf32>
    %cst_187 = arith.constant 1.000000e+00 : f32
    %533 = vector.broadcast %cst_187 : f32 to vector<8x32xf32>
    %534 = arith.addf %533, %532 : vector<8x32xf32>
    %535 = arith.divf %533, %534 : vector<8x32xf32>
    %536 = vector.extract_strided_slice %524 {offsets = [0, 32], sizes = [8, 32], strides = [1, 1]} : vector<8x128xf32> to vector<8x32xf32>
    %537 = vector.extract_strided_slice %527 {offsets = [0, 32], sizes = [8, 32], strides = [1, 1]} : vector<8x128xf32> to vector<8x32xf32>
    %538 = arith.addf %536, %537 : vector<8x32xf32>
    %539 = arith.negf %538 : vector<8x32xf32>
    %540 = math.exp %539 : vector<8x32xf32>
    %cst_188 = arith.constant 1.000000e+00 : f32
    %541 = vector.broadcast %cst_188 : f32 to vector<8x32xf32>
    %542 = arith.addf %541, %540 : vector<8x32xf32>
    %543 = arith.divf %541, %542 : vector<8x32xf32>
    %544 = vector.extract_strided_slice %524 {offsets = [0, 64], sizes = [8, 32], strides = [1, 1]} : vector<8x128xf32> to vector<8x32xf32>
    %545 = vector.extract_strided_slice %527 {offsets = [0, 64], sizes = [8, 32], strides = [1, 1]} : vector<8x128xf32> to vector<8x32xf32>
    %546 = arith.mulf %535, %545 : vector<8x32xf32>
    %547 = arith.addf %544, %546 : vector<8x32xf32>
    %548 = math.tanh %547 : vector<8x32xf32>
    %cst_189 = arith.constant 1.000000e+00 : f32
    %549 = vector.broadcast %cst_189 : f32 to vector<8x32xf32>
    %550 = arith.subf %549, %543 : vector<8x32xf32>
    %551 = arith.mulf %550, %548 : vector<8x32xf32>
    %552 = arith.mulf %543, %522 : vector<8x32xf32>
    %553 = arith.addf %551, %552 : vector<8x32xf32>
    %c6_190 = arith.constant 6 : index
    %c0_191 = arith.constant 0 : index
    %c0_192 = arith.constant 0 : index
    %554 = vector.load %arg11[%c6_190, %c0_191, %c0_192] : memref<8x8x128xf32, #tpu.memory_space<vmem>>, vector<1x8x128xf32>
    %555 = vector.shape_cast %554 : vector<1x8x128xf32> to vector<8x128xf32>
    %cst_193 = arith.constant dense<0.000000e+00> : vector<8x128xf32>
    %556 = tpu.matmul %553, %364, %cst_193 {dimension_numbers = #tpu.dot_dimension_numbers<[1], [0], [0], [1], [0, 0, 1, 1], [], []>} : vector<8x32xf32>, vector<32x128xf32>, vector<8x128xf32> -> vector<8x128xf32>
    %557 = vector.broadcast %366 : vector<1x128xf32> to vector<8x128xf32>
    %558 = arith.addf %556, %557 : vector<8x128xf32>
    %559 = vector.extract_strided_slice %555 {offsets = [0, 0], sizes = [8, 32], strides = [1, 1]} : vector<8x128xf32> to vector<8x32xf32>
    %560 = vector.extract_strided_slice %558 {offsets = [0, 0], sizes = [8, 32], strides = [1, 1]} : vector<8x128xf32> to vector<8x32xf32>
    %561 = arith.addf %559, %560 : vector<8x32xf32>
    %562 = arith.negf %561 : vector<8x32xf32>
    %563 = math.exp %562 : vector<8x32xf32>
    %cst_194 = arith.constant 1.000000e+00 : f32
    %564 = vector.broadcast %cst_194 : f32 to vector<8x32xf32>
    %565 = arith.addf %564, %563 : vector<8x32xf32>
    %566 = arith.divf %564, %565 : vector<8x32xf32>
    %567 = vector.extract_strided_slice %555 {offsets = [0, 32], sizes = [8, 32], strides = [1, 1]} : vector<8x128xf32> to vector<8x32xf32>
    %568 = vector.extract_strided_slice %558 {offsets = [0, 32], sizes = [8, 32], strides = [1, 1]} : vector<8x128xf32> to vector<8x32xf32>
    %569 = arith.addf %567, %568 : vector<8x32xf32>
    %570 = arith.negf %569 : vector<8x32xf32>
    %571 = math.exp %570 : vector<8x32xf32>
    %cst_195 = arith.constant 1.000000e+00 : f32
    %572 = vector.broadcast %cst_195 : f32 to vector<8x32xf32>
    %573 = arith.addf %572, %571 : vector<8x32xf32>
    %574 = arith.divf %572, %573 : vector<8x32xf32>
    %575 = vector.extract_strided_slice %555 {offsets = [0, 64], sizes = [8, 32], strides = [1, 1]} : vector<8x128xf32> to vector<8x32xf32>
    %576 = vector.extract_strided_slice %558 {offsets = [0, 64], sizes = [8, 32], strides = [1, 1]} : vector<8x128xf32> to vector<8x32xf32>
    %577 = arith.mulf %566, %576 : vector<8x32xf32>
    %578 = arith.addf %575, %577 : vector<8x32xf32>
    %579 = math.tanh %578 : vector<8x32xf32>
    %cst_196 = arith.constant 1.000000e+00 : f32
    %580 = vector.broadcast %cst_196 : f32 to vector<8x32xf32>
    %581 = arith.subf %580, %574 : vector<8x32xf32>
    %582 = arith.mulf %581, %579 : vector<8x32xf32>
    %583 = arith.mulf %574, %553 : vector<8x32xf32>
    %584 = arith.addf %582, %583 : vector<8x32xf32>
    %c7_197 = arith.constant 7 : index
    %c0_198 = arith.constant 0 : index
    %c0_199 = arith.constant 0 : index
    %585 = vector.load %arg11[%c7_197, %c0_198, %c0_199] : memref<8x8x128xf32, #tpu.memory_space<vmem>>, vector<1x8x128xf32>
    %586 = vector.shape_cast %585 : vector<1x8x128xf32> to vector<8x128xf32>
    %cst_200 = arith.constant dense<0.000000e+00> : vector<8x128xf32>
    %587 = tpu.matmul %584, %364, %cst_200 {dimension_numbers = #tpu.dot_dimension_numbers<[1], [0], [0], [1], [0, 0, 1, 1], [], []>} : vector<8x32xf32>, vector<32x128xf32>, vector<8x128xf32> -> vector<8x128xf32>
    %588 = vector.broadcast %366 : vector<1x128xf32> to vector<8x128xf32>
    %589 = arith.addf %587, %588 : vector<8x128xf32>
    %590 = vector.extract_strided_slice %586 {offsets = [0, 0], sizes = [8, 32], strides = [1, 1]} : vector<8x128xf32> to vector<8x32xf32>
    %591 = vector.extract_strided_slice %589 {offsets = [0, 0], sizes = [8, 32], strides = [1, 1]} : vector<8x128xf32> to vector<8x32xf32>
    %592 = arith.addf %590, %591 : vector<8x32xf32>
    %593 = arith.negf %592 : vector<8x32xf32>
    %594 = math.exp %593 : vector<8x32xf32>
    %cst_201 = arith.constant 1.000000e+00 : f32
    %595 = vector.broadcast %cst_201 : f32 to vector<8x32xf32>
    %596 = arith.addf %595, %594 : vector<8x32xf32>
    %597 = arith.divf %595, %596 : vector<8x32xf32>
    %598 = vector.extract_strided_slice %586 {offsets = [0, 32], sizes = [8, 32], strides = [1, 1]} : vector<8x128xf32> to vector<8x32xf32>
    %599 = vector.extract_strided_slice %589 {offsets = [0, 32], sizes = [8, 32], strides = [1, 1]} : vector<8x128xf32> to vector<8x32xf32>
    %600 = arith.addf %598, %599 : vector<8x32xf32>
    %601 = arith.negf %600 : vector<8x32xf32>
    %602 = math.exp %601 : vector<8x32xf32>
    %cst_202 = arith.constant 1.000000e+00 : f32
    %603 = vector.broadcast %cst_202 : f32 to vector<8x32xf32>
    %604 = arith.addf %603, %602 : vector<8x32xf32>
    %605 = arith.divf %603, %604 : vector<8x32xf32>
    %606 = vector.extract_strided_slice %586 {offsets = [0, 64], sizes = [8, 32], strides = [1, 1]} : vector<8x128xf32> to vector<8x32xf32>
    %607 = vector.extract_strided_slice %589 {offsets = [0, 64], sizes = [8, 32], strides = [1, 1]} : vector<8x128xf32> to vector<8x32xf32>
    %608 = arith.mulf %597, %607 : vector<8x32xf32>
    %609 = arith.addf %606, %608 : vector<8x32xf32>
    %610 = math.tanh %609 : vector<8x32xf32>
    %cst_203 = arith.constant 1.000000e+00 : f32
    %611 = vector.broadcast %cst_203 : f32 to vector<8x32xf32>
    %612 = arith.subf %611, %605 : vector<8x32xf32>
    %613 = arith.mulf %612, %610 : vector<8x32xf32>
    %614 = arith.mulf %605, %584 : vector<8x32xf32>
    %615 = arith.addf %613, %614 : vector<8x32xf32>
    %c0_204 = arith.constant 0 : index
    %c0_205 = arith.constant 0 : index
    %616 = vector.load %arg8[%c0_204, %c0_205] : memref<32x128xf32, #tpu.memory_space<vmem>>, vector<32x128xf32>
    %cst_206 = arith.constant dense<0.000000e+00> : vector<8x128xf32>
    %617 = tpu.matmul %615, %616, %cst_206 {dimension_numbers = #tpu.dot_dimension_numbers<[1], [0], [0], [1], [0, 0, 1, 1], [], []>} : vector<8x32xf32>, vector<32x128xf32>, vector<8x128xf32> -> vector<8x128xf32>
    %c0_207 = arith.constant 0 : index
    %c0_208 = arith.constant 0 : index
    %618 = vector.load %arg9[%c0_207, %c0_208] : memref<1x128xf32, #tpu.memory_space<vmem>>, vector<1x128xf32>
    %619 = vector.broadcast %618 : vector<1x128xf32> to vector<8x128xf32>
    %620 = arith.addf %617, %619 : vector<8x128xf32>
    %c0_209 = arith.constant 0 : index
    %c0_210 = arith.constant 0 : index
    %621 = vector.load %arg10[%c0_209, %c0_210] : memref<8x128xf32, #tpu.memory_space<vmem>>, vector<8x128xf32>
    tpu.vector_store %arg10[%c0_209, %c0_210], %620 {strides = array<i32>} : memref<8x128xf32, #tpu.memory_space<vmem>>, vector<8x128xf32>,
    return
  }
  func.func @transform_0(%arg0: i32) -> (i32, i32, i32) {
    %c0_i32 = arith.constant 0 : i32
    %c0_i32_0 = arith.constant 0 : i32
    %c0_i32_1 = arith.constant 0 : i32
    return %arg0, %c0_i32, %c0_i32_0 : i32, i32, i32
  }
  func.func @transform_1(%arg0: i32) -> (i32, i32) {
    %c0_i32 = arith.constant 0 : i32
    %c0_i32_0 = arith.constant 0 : i32
    %c0_i32_1 = arith.constant 0 : i32
    return %c0_i32, %c0_i32_0 : i32, i32
  }
  func.func @transform_2(%arg0: i32) -> (i32, i32) {
    %c0_i32 = arith.constant 0 : i32
    %c0_i32_0 = arith.constant 0 : i32
    %c0_i32_1 = arith.constant 0 : i32
    return %c0_i32, %c0_i32_0 : i32, i32
  }
  func.func @transform_3(%arg0: i32) -> (i32, i32, i32) {
    %c0_i32 = arith.constant 0 : i32
    %c0_i32_0 = arith.constant 0 : i32
    %c0_i32_1 = arith.constant 0 : i32
    %c0_i32_2 = arith.constant 0 : i32
    return %c0_i32, %c0_i32_0, %c0_i32_1 : i32, i32, i32
  }
  func.func @transform_4(%arg0: i32) -> (i32, i32, i32) {
    %c0_i32 = arith.constant 0 : i32
    %c0_i32_0 = arith.constant 0 : i32
    %c0_i32_1 = arith.constant 0 : i32
    %c0_i32_2 = arith.constant 0 : i32
    return %c0_i32, %c0_i32_0, %c0_i32_1 : i32, i32, i32
  }
  func.func @transform_5(%arg0: i32) -> (i32, i32, i32) {
    %c0_i32 = arith.constant 0 : i32
    %c0_i32_0 = arith.constant 0 : i32
    %c0_i32_1 = arith.constant 0 : i32
    %c0_i32_2 = arith.constant 0 : i32
    return %c0_i32, %c0_i32_0, %c0_i32_1 : i32, i32, i32
  }
  func.func @transform_6(%arg0: i32) -> (i32, i32, i32) {
    %c0_i32 = arith.constant 0 : i32
    %c0_i32_0 = arith.constant 0 : i32
    %c0_i32_1 = arith.constant 0 : i32
    %c0_i32_2 = arith.constant 0 : i32
    return %c0_i32, %c0_i32_0, %c0_i32_1 : i32, i32, i32
  }
  func.func @transform_7(%arg0: i32) -> (i32, i32) {
    %c0_i32 = arith.constant 0 : i32
    %c0_i32_0 = arith.constant 0 : i32
    %c0_i32_1 = arith.constant 0 : i32
    return %c0_i32, %c0_i32_0 : i32, i32
  }
  func.func @transform_8(%arg0: i32) -> (i32, i32) {
    %c0_i32 = arith.constant 0 : i32
    %c0_i32_0 = arith.constant 0 : i32
    %c0_i32_1 = arith.constant 0 : i32
    return %c0_i32, %c0_i32_0 : i32, i32
  }
  func.func @transform_9(%arg0: i32) -> (i32, i32) {
    %c0_i32 = arith.constant 0 : i32
    %c0_i32_0 = arith.constant 0 : i32
    return %arg0, %c0_i32 : i32, i32
  }
}

</mosaic_0001>

<llo_original>
// kernel: tpu_custom_call.1
$region0: #{tpu_custom_call.1}
  #allocation0 [shape = 'u32[]', space=smem, size = 0x4, offset = 0x4, fixed_abs, tag = 'smem constant byte address 0x4 - core index']
  #allocation1 [shape = 'u32[72,128]{1,0:T(1,128)}', space=vmem, size = 0x9000, scoped, tag = 'internal scratch']
  #allocation2 [shape = 'f32[8,8,128]{2,1,0:T(8,128)}', space=vmem, size = 0x8000, scoped, tag = 'scratch operand']
  #allocation3 [shape = 'f32[8,8,32]{2,1,0:T(8,128)}', space=vmem, size = 0x8000, scoped, tag = 'scratch operand']
  %s0 = inlined_call_operand.hbm [shape: f32[8,8,32], index: 0, kind: input, shape index: {}]
  %s1 = inlined_call_operand.hbm [shape: f32[32,128], index: 1, kind: input, shape index: {}]
  %s2 = inlined_call_operand.hbm [shape: f32[1,128], index: 2, kind: input, shape index: {}]
  %s3 = inlined_call_operand.hbm [shape: f32[2,32,128], index: 3, kind: input, shape index: {}]
  %s4 = inlined_call_operand.vmem [shape: f32[2,1,128], index: 4, kind: input, shape index: {}]
  %s5 = inlined_call_operand.hbm [shape: f32[2,32,128], index: 5, kind: input, shape index: {}]
  %s6 = inlined_call_operand.vmem [shape: f32[2,1,128], index: 6, kind: input, shape index: {}]
  %s7 = inlined_call_operand.hbm [shape: f32[32,128], index: 7, kind: input, shape index: {}]
  %s8 = inlined_call_operand.vmem [shape: f32[1,128], index: 8, kind: input, shape index: {}]
  %s9 = inlined_call_operand.hbm [shape: f32[8,128], index: 9, kind: output, shape index: {}]
  %s10 = sld [smem:[#allocation0]]
  $region70: #{tpu_custom_call.1} parent=0
    _
  %s12 = ssub.s32 1, %s10
  %s13 = scalar_select 0, %s12, %s10
  $region1: #{tpu_custom_call.1} parent=0
    #allocation4 [shape = 'u8[32768]{0}', space=vmem, size = 0x8000, scoped, tag = 'input window, operand 0, single buffered']
    #allocation5 [shape = 's32[1]{0}', space=sflag, size = 0x4, scoped, tag = 'scoped memory for tpu_custom_call.1']
    #allocation6 [shape = 's32[1]{0}', space=sflag, size = 0x4, scoped, tag = 'scoped memory for tpu_custom_call.1']
    #allocation7 [shape = 'u8[16384]{0}', space=vmem, size = 0x4000, scoped, tag = 'input window, operand 1, single buffered']
    #allocation8 [shape = 's32[1]{0}', space=sflag, size = 0x4, scoped, tag = 'scoped memory for tpu_custom_call.1']
    #allocation9 [shape = 'u8[512]{0}', space=vmem, size = 0x400, scoped, tag = 'input window, operand 2, single buffered']
    #allocation10 [shape = 'u8[32768]{0}', space=vmem, size = 0x8000, scoped, tag = 'input window, operand 3, single buffered']
    #allocation11 [shape = 's32[1]{0}', space=sflag, size = 0x4, scoped, tag = 'scoped memory for tpu_custom_call.1']
    #allocation12 [shape = 'u8[32768]{0}', space=vmem, size = 0x8000, scoped, tag = 'input window, operand 5, single buffered']
    #allocation13 [shape = 'u8[16384]{0}', space=vmem, size = 0x4000, scoped, tag = 'input window, operand 7, single buffered']
    #allocation14 [shape = 's32[1]{0}', space=sflag, size = 0x4, scoped, tag = 'scoped memory for tpu_custom_call.1']
    #allocation15 [shape = 'u8[4096]{0}', space=vmem, size = 0x1000, scoped, tag = 'output window, operand 0, single buffered']
    %14 = vsyncpa [#allocation5], 0
    %15 = vsyncpa [#allocation8], 0
    %16 = vsyncpa [#allocation11], 0
    %17 = vsyncpa [#allocation14], 0
    %18 = vsyncpa [#allocation6], 0
    // Predicated region
    $region2: #{tpu_custom_call.1} parent=1 // pred_check
      _
    $region3: #{tpu_custom_call.1} parent=1 // pred_check_branch
      %20 = sbr.rel (0) target = $region5
    $region4: #{tpu_custom_call.1} parent=1 // pred_region
      %22 = vsyncadd [#allocation5], 0
      %s23 = sshll.u32 %s0, 4
      %s24 = int_to_ptr.hbm [resolvable:$true] %s23
      %s25 = sshll.u32 [#allocation4], 4
      %s26 = int_to_ptr.vmem [resolvable:$true] %s25
      %31 = dma.hbm_to_vmem [thread:$0]  %s24, 1024, %s26, [#allocation5], 128, 128, 8
    $region5: #{tpu_custom_call.1} parent=1 // pred_fallthru
      _
    // Predicated region
    $region6: #{tpu_custom_call.1} parent=1 // pred_check
      _
    $region7: #{tpu_custom_call.1} parent=1 // pred_check_branch
      %33 = sbr.rel (0) target = $region9
    $region8: #{tpu_custom_call.1} parent=1 // pred_region
      %35 = vsyncadd [#allocation8], 0
      %s36 = sshll.u32 %s1, 4
      %s37 = int_to_ptr.hbm [resolvable:$true] %s36
      %s38 = sshll.u32 [#allocation7], 4
      %s39 = int_to_ptr.vmem [resolvable:$true] %s38
      %44 = dma.hbm_to_vmem [thread:$0]  %s37, 512, %s39, [#allocation8], 128, 128, 8
    $region9: #{tpu_custom_call.1} parent=1 // pred_fallthru
      _
    // Predicated region
    $region10: #{tpu_custom_call.1} parent=1 // pred_check
      _
    $region11: #{tpu_custom_call.1} parent=1 // pred_check_branch
      %46 = sbr.rel (0) target = $region13
    $region12: #{tpu_custom_call.1} parent=1 // pred_region
      %48 = vsyncadd [#allocation8], 0
      %s50 = sshll.u32 %s2, 4
      %s51 = int_to_ptr.hbm [resolvable:$true] %s50
      %s52 = sshll.u32 [#allocation9], 4
      %s53 = int_to_ptr.vmem [resolvable:$true] %s52
      %55 = dma.hbm_to_vmem [thread:$0]  %s51, 16, %s53, [#allocation8]
    $region13: #{tpu_custom_call.1} parent=1 // pred_fallthru
      _
    // Predicated region
    $region14: #{tpu_custom_call.1} parent=1 // pred_check
      _
    $region15: #{tpu_custom_call.1} parent=1 // pred_check_branch
      %57 = sbr.rel (0) target = $region17
    $region16: #{tpu_custom_call.1} parent=1 // pred_region
      %59 = vsyncadd [#allocation11], 0
      %s60 = sshll.u32 %s3, 4
      %s61 = int_to_ptr.hbm [resolvable:$true] %s60
      %s62 = sshll.u32 [#allocation10], 4
      %s63 = int_to_ptr.vmem [resolvable:$true] %s62
      %68 = dma.hbm_to_vmem [thread:$0]  %s61, 1024, %s63, [#allocation11], 128, 128, 8
    $region17: #{tpu_custom_call.1} parent=1 // pred_fallthru
      _
    // Predicated region
    $region18: #{tpu_custom_call.1} parent=1 // pred_check
      _
    $region19: #{tpu_custom_call.1} parent=1 // pred_check_branch
      %70 = sbr.rel (0) target = $region21
    $region20: #{tpu_custom_call.1} parent=1 // pred_region
      _
    $region21: #{tpu_custom_call.1} parent=1 // pred_fallthru
      _
    // Predicated region
    $region22: #{tpu_custom_call.1} parent=1 // pred_check
      _
    $region23: #{tpu_custom_call.1} parent=1 // pred_check_branch
      %72 = sbr.rel (0) target = $region25
    $region24: #{tpu_custom_call.1} parent=1 // pred_region
      %74 = vsyncadd [#allocation11], 0
      %s75 = sshll.u32 %s5, 4
      %s76 = int_to_ptr.hbm [resolvable:$true] %s75
      %s77 = sshll.u32 [#allocation12], 4
      %s78 = int_to_ptr.vmem [resolvable:$true] %s77
      %83 = dma.hbm_to_vmem [thread:$0]  %s76, 1024, %s78, [#allocation11], 128, 128, 8
    $region25: #{tpu_custom_call.1} parent=1 // pred_fallthru
      _
    // Predicated region
    $region26: #{tpu_custom_call.1} parent=1 // pred_check
      _
    $region27: #{tpu_custom_call.1} parent=1 // pred_check_branch
      %85 = sbr.rel (0) target = $region29
    $region28: #{tpu_custom_call.1} parent=1 // pred_region
      _
    $region29: #{tpu_custom_call.1} parent=1 // pred_fallthru
      _
    // Predicated region
    $region30: #{tpu_custom_call.1} parent=1 // pred_check
      _
    $region31: #{tpu_custom_call.1} parent=1 // pred_check_branch
      %87 = sbr.rel (0) target = $region33
    $region32: #{tpu_custom_call.1} parent=1 // pred_region
      %89 = vsyncadd [#allocation14], 0
      %s90 = sshll.u32 %s7, 4
      %s91 = int_to_ptr.hbm [resolvable:$true] %s90
      %s92 = sshll.u32 [#allocation13], 4
      %s93 = int_to_ptr.vmem [resolvable:$true] %s92
      %98 = dma.hbm_to_vmem [thread:$0]  %s91, 512, %s93, [#allocation14], 128, 128, 8
    $region33: #{tpu_custom_call.1} parent=1 // pred_fallthru
      _
    // Predicated region
    $region34: #{tpu_custom_call.1} parent=1 // pred_check
      _
    $region35: #{tpu_custom_call.1} parent=1 // pred_check_branch
      %100 = sbr.rel (0) target = $region37
    $region36: #{tpu_custom_call.1} parent=1 // pred_region
      _
    $region37: #{tpu_custom_call.1} parent=1 // pred_fallthru
      _
    // Predicated region
    $region38: #{tpu_custom_call.1} parent=1 // pred_check
      _
    $region39: #{tpu_custom_call.1} parent=1 // pred_check_branch
      %102 = sbr.rel (0) target = $region41
    $region40: #{tpu_custom_call.1} parent=1 // pred_region
      %104 = dma.done [#allocation5], 1024
    $region41: #{tpu_custom_call.1} parent=1 // pred_fallthru
      _
    // Predicated region
    $region42: #{tpu_custom_call.1} parent=1 // pred_check
      _
    $region43: #{tpu_custom_call.1} parent=1 // pred_check_branch
      %106 = sbr.rel (0) target = $region45
    $region44: #{tpu_custom_call.1} parent=1 // pred_region
      %108 = dma.done [#allocation8], 512
    $region45: #{tpu_custom_call.1} parent=1 // pred_fallthru
      _
    // Predicated region
    $region46: #{tpu_custom_call.1} parent=1 // pred_check
      _
    $region47: #{tpu_custom_call.1} parent=1 // pred_check_branch
      %110 = sbr.rel (0) target = $region49
    $region48: #{tpu_custom_call.1} parent=1 // pred_region
      %112 = dma.done [#allocation8], 16
    $region49: #{tpu_custom_call.1} parent=1 // pred_fallthru
      _
    // Predicated region
    $region50: #{tpu_custom_call.1} parent=1 // pred_check
      _
    $region51: #{tpu_custom_call.1} parent=1 // pred_check_branch
      %114 = sbr.rel (0) target = $region53
    $region52: #{tpu_custom_call.1} parent=1 // pred_region
      %116 = dma.done [#allocation11], 1024
    $region53: #{tpu_custom_call.1} parent=1 // pred_fallthru
      _
    // Predicated region
    $region54: #{tpu_custom_call.1} parent=1 // pred_check
      _
    $region55: #{tpu_custom_call.1} parent=1 // pred_check_branch
      %118 = sbr.rel (0) target = $region57
    $region56: #{tpu_custom_call.1} parent=1 // pred_region
      %120 = dma.done [#allocation11], 1024
    $region57: #{tpu_custom_call.1} parent=1 // pred_fallthru
      _
    // Predicated region
    $region58: #{tpu_custom_call.1} parent=1 // pred_check
      _
    $region59: #{tpu_custom_call.1} parent=1 // pred_check_branch
      %122 = sbr.rel (0) target = $region61
    $region60: #{tpu_custom_call.1} parent=1 // pred_region
      %124 = dma.done [#allocation14], 512
    $region61: #{tpu_custom_call.1} parent=1 // pred_fallthru
      _
    %v125 = vld [vmem:[#allocation4] sm:$0xff]
    %v126 = vld [vmem:[#allocation4 + $0x8] sm:$0xff]
    %v127 = vld [vmem:[#allocation4 + $0x10] sm:$0xff]
    %v128 = vld [vmem:[#allocation4 + $0x18] sm:$0xff]
    %v129 = vld [vmem:[#allocation4 + $0x20] sm:$0xff]
    %v130 = vld [vmem:[#allocation4 + $0x28] sm:$0xff]
    %v131 = vld [vmem:[#allocation4 + $0x30] sm:$0xff]
    %v132 = vld [vmem:[#allocation4 + $0x38] sm:$0xff]
    %v133 = vld [vmem:[#allocation7] sm:$0xff]
    %v134 = vld [vmem:[#allocation7 + $0x8] sm:$0xff]
    %v135 = vld [vmem:[#allocation7 + $0x10] sm:$0xff]
    %v136 = vld [vmem:[#allocation7 + $0x18] sm:$0xff]
    %v137 = vld [vmem:[#allocation9] sm:$0x1]
    %v139 = vperm.slane %v137, 0
    %vm141 = vcmask 261120
    %v143 = vsel %vm141, %v125, 0
    %v146 = vsel %vm141, %v126, 0
    %v149 = vsel %vm141, %v127, 0
    %v152 = vsel %vm141, %v128, 0
    %v155 = vsel %vm141, %v129, 0
    %v158 = vsel %vm141, %v130, 0
    %v161 = vsel %vm141, %v131, 0
    %v164 = vsel %vm141, %v132, 0
    %166 = vmatpush.msra.mxu0 0.0
    %167 = vmatpush.msra.mxu0 0.0
    %168 = vmatpush.msra.mxu0 0.0
    %169 = vmatpush.msra.mxu0 0.0
    %170 = vmatpush.msra.mxu0 0.0
    %171 = vmatpush.msra.mxu0 0.0
    %172 = vmatpush.msra.mxu0 0.0
    %173 = vmatpush.msra.mxu0 0.0
    %174 = vmatpush.msra.mxu0 0.0
    %175 = vmatpush.msra.mxu0 0.0
    %176 = vmatpush.msra.mxu0 0.0
    %177 = vmatpush.msra.mxu0 0.0
    %178 = vmatpush.msra.mxu0 %v136
    %179 = vmatpush.msra.mxu0 %v135
    %180 = vmatpush.msra.mxu0 %v134
    %181 = vmatpush.msra.mxu0 %v133
    %182 = vmatmul.f32.gmra.mxu0 %v143
    %v183 = vpop.f32.mrf.mxu0
    %v184 = vadd.f32 %v139, %v183
    %185 = vmatmul.f32.gmra.mxu0 %v146
    %v186 = vpop.f32.mrf.mxu0
    %v187 = vadd.f32 %v139, %v186
    %188 = vmatmul.f32.gmra.mxu0 %v149
    %v189 = vpop.f32.mrf.mxu0
    %v190 = vadd.f32 %v139, %v189
    %191 = vmatmul.f32.gmra.mxu0 %v152
    %v192 = vpop.f32.mrf.mxu0
    %v193 = vadd.f32 %v139, %v192
    %194 = vmatmul.f32.gmra.mxu0 %v155
    %v195 = vpop.f32.mrf.mxu0
    %v196 = vadd.f32 %v139, %v195
    %197 = vmatmul.f32.gmra.mxu0 %v158
    %v198 = vpop.f32.mrf.mxu0
    %v199 = vadd.f32 %v139, %v198
    %200 = vmatmul.f32.gmra.mxu0 %v161
    %v201 = vpop.f32.mrf.mxu0
    %v202 = vadd.f32 %v139, %v201
    %203 = vmatmul.f32.gmra.mxu0 %v164
    %v204 = vpop.f32.mrf.mxu0
    %v205 = vadd.f32 %v139, %v204
    %206 = vdwg.mxu0
    %208 = vrot.lane.b32.xlu0 %v184, 96
    %v209 = vpop.permute.xlu0 %208
    %v210 = vsel %vm141, %v209, 0
    %v212 = vsel %vm141, %v184, 0
    %214 = vmatpush.xpose.msra.mxu0 0.0
    %215 = vmatpush.xpose.msra.mxu0 0.0
    %216 = vmatpush.xpose.msra.mxu0 0.0
    %217 = vmatpush.xpose.msra.mxu0 0.0
    %218 = vmatpush.xpose.msra.mxu0 0.0
    %219 = vmatpush.xpose.msra.mxu0 0.0
    %220 = vmatpush.xpose.msra.mxu0 0.0
    %221 = vmatpush.xpose.msra.mxu0 0.0
    %222 = vmatpush.xpose.msra.mxu0 0.0
    %223 = vmatpush.xpose.msra.mxu0 0.0
    %224 = vmatpush.xpose.msra.mxu0 0.0
    %225 = vmatpush.xpose.msra.mxu0 0.0
    %226 = vmatpush.xpose.msra.mxu0 0.0
    %227 = vmatpush.xpose.msra.mxu0 0.0
    %228 = vmatpush.xpose.msra.mxu0 0.0
    %229 = vmatpush.xpose.msra.mxu0 %v212
    %230 = vmatmul.f32.gmra.mxu0 %v210
    %v231 = vpop.f32.mrf.mxu0
    %v232 = vadd.f32 0.0, %v231
    %233 = vdwg.mxu0
    %235 = vrot.lane.b32.xlu0 %v187, 96
    %v236 = vpop.permute.xlu0 %235
    %v237 = vsel %vm141, %v236, 0
    %v239 = vsel %vm141, %v187, 0
    %241 = vmatpush.xpose.msra.mxu0 0.0
    %242 = vmatpush.xpose.msra.mxu0 0.0
    %243 = vmatpush.xpose.msra.mxu0 0.0
    %244 = vmatpush.xpose.msra.mxu0 0.0
    %245 = vmatpush.xpose.msra.mxu0 0.0
    %246 = vmatpush.xpose.msra.mxu0 0.0
    %247 = vmatpush.xpose.msra.mxu0 0.0
    %248 = vmatpush.xpose.msra.mxu0 0.0
    %249 = vmatpush.xpose.msra.mxu0 0.0
    %250 = vmatpush.xpose.msra.mxu0 0.0
    %251 = vmatpush.xpose.msra.mxu0 0.0
    %252 = vmatpush.xpose.msra.mxu0 0.0
    %253 = vmatpush.xpose.msra.mxu0 0.0
    %254 = vmatpush.xpose.msra.mxu0 0.0
    %255 = vmatpush.xpose.msra.mxu0 0.0
    %256 = vmatpush.xpose.msra.mxu0 %v239
    %257 = vmatmul.f32.gmra.mxu0 %v237
    %v258 = vpop.f32.mrf.mxu0
    %v259 = vadd.f32 0.0, %v258
    %260 = vdwg.mxu0
    %262 = vrot.lane.b32.xlu0 %v190, 96
    %v263 = vpop.permute.xlu0 %262
    %v264 = vsel %vm141, %v263, 0
    %v266 = vsel %vm141, %v190, 0
    %268 = vmatpush.xpose.msra.mxu0 0.0
    %269 = vmatpush.xpose.msra.mxu0 0.0
    %270 = vmatpush.xpose.msra.mxu0 0.0
    %271 = vmatpush.xpose.msra.mxu0 0.0
    %272 = vmatpush.xpose.msra.mxu0 0.0
    %273 = vmatpush.xpose.msra.mxu0 0.0
    %274 = vmatpush.xpose.msra.mxu0 0.0
    %275 = vmatpush.xpose.msra.mxu0 0.0
    %276 = vmatpush.xpose.msra.mxu0 0.0
    %277 = vmatpush.xpose.msra.mxu0 0.0
    %278 = vmatpush.xpose.msra.mxu0 0.0
    %279 = vmatpush.xpose.msra.mxu0 0.0
    %280 = vmatpush.xpose.msra.mxu0 0.0
    %281 = vmatpush.xpose.msra.mxu0 0.0
    %282 = vmatpush.xpose.msra.mxu0 0.0
    %283 = vmatpush.xpose.msra.mxu0 %v266
    %284 = vmatmul.f32.gmra.mxu0 %v264
    %v285 = vpop.f32.mrf.mxu0
    %v286 = vadd.f32 0.0, %v285
    %287 = vdwg.mxu0
    %289 = vrot.lane.b32.xlu0 %v193, 96
    %v290 = vpop.permute.xlu0 %289
    %v291 = vsel %vm141, %v290, 0
    %v293 = vsel %vm141, %v193, 0
    %295 = vmatpush.xpose.msra.mxu0 0.0
    %296 = vmatpush.xpose.msra.mxu0 0.0
    %297 = vmatpush.xpose.msra.mxu0 0.0
    %298 = vmatpush.xpose.msra.mxu0 0.0
    %299 = vmatpush.xpose.msra.mxu0 0.0
    %300 = vmatpush.xpose.msra.mxu0 0.0
    %301 = vmatpush.xpose.msra.mxu0 0.0
    %302 = vmatpush.xpose.msra.mxu0 0.0
    %303 = vmatpush.xpose.msra.mxu0 0.0
    %304 = vmatpush.xpose.msra.mxu0 0.0
    %305 = vmatpush.xpose.msra.mxu0 0.0
    %306 = vmatpush.xpose.msra.mxu0 0.0
    %307 = vmatpush.xpose.msra.mxu0 0.0
    %308 = vmatpush.xpose.msra.mxu0 0.0
    %309 = vmatpush.xpose.msra.mxu0 0.0
    %310 = vmatpush.xpose.msra.mxu0 %v293
    %311 = vmatmul.f32.gmra.mxu0 %v291
    %v312 = vpop.f32.mrf.mxu0
    %v313 = vadd.f32 0.0, %v312
    %314 = vdwg.mxu0
    %316 = vrot.lane.b32.xlu0 %v196, 96
    %v317 = vpop.permute.xlu0 %316
    %v318 = vsel %vm141, %v317, 0
    %v320 = vsel %vm141, %v196, 0
    %322 = vmatpush.xpose.msra.mxu0 0.0
    %323 = vmatpush.xpose.msra.mxu0 0.0
    %324 = vmatpush.xpose.msra.mxu0 0.0
    %325 = vmatpush.xpose.msra.mxu0 0.0
    %326 = vmatpush.xpose.msra.mxu0 0.0
    %327 = vmatpush.xpose.msra.mxu0 0.0
    %328 = vmatpush.xpose.msra.mxu0 0.0
    %329 = vmatpush.xpose.msra.mxu0 0.0
    %330 = vmatpush.xpose.msra.mxu0 0.0
    %331 = vmatpush.xpose.msra.mxu0 0.0
    %332 = vmatpush.xpose.msra.mxu0 0.0
    %333 = vmatpush.xpose.msra.mxu0 0.0
    %334 = vmatpush.xpose.msra.mxu0 0.0
    %335 = vmatpush.xpose.msra.mxu0 0.0
    %336 = vmatpush.xpose.msra.mxu0 0.0
    %337 = vmatpush.xpose.msra.mxu0 %v320
    %338 = vmatmul.f32.gmra.mxu0 %v318
    %v339 = vpop.f32.mrf.mxu0
    %v340 = vadd.f32 0.0, %v339
    %341 = vdwg.mxu0
    %343 = vrot.lane.b32.xlu0 %v199, 96
    %v344 = vpop.permute.xlu0 %343
    %v345 = vsel %vm141, %v344, 0
    %v347 = vsel %vm141, %v199, 0
    %349 = vmatpush.xpose.msra.mxu0 0.0
    %350 = vmatpush.xpose.msra.mxu0 0.0
    %351 = vmatpush.xpose.msra.mxu0 0.0
    %352 = vmatpush.xpose.msra.mxu0 0.0
    %353 = vmatpush.xpose.msra.mxu0 0.0
    %354 = vmatpush.xpose.msra.mxu0 0.0
    %355 = vmatpush.xpose.msra.mxu0 0.0
    %356 = vmatpush.xpose.msra.mxu0 0.0
    %357 = vmatpush.xpose.msra.mxu0 0.0
    %358 = vmatpush.xpose.msra.mxu0 0.0
    %359 = vmatpush.xpose.msra.mxu0 0.0
    %360 = vmatpush.xpose.msra.mxu0 0.0
    %361 = vmatpush.xpose.msra.mxu0 0.0
    %362 = vmatpush.xpose.msra.mxu0 0.0
    %363 = vmatpush.xpose.msra.mxu0 0.0
    %364 = vmatpush.xpose.msra.mxu0 %v347
    %365 = vmatmul.f32.gmra.mxu0 %v345
    %v366 = vpop.f32.mrf.mxu0
    %v367 = vadd.f32 0.0, %v366
    %368 = vdwg.mxu0
    %370 = vrot.lane.b32.xlu0 %v202, 96
    %v371 = vpop.permute.xlu0 %370
    %v372 = vsel %vm141, %v371, 0
    %v374 = vsel %vm141, %v202, 0
    %376 = vmatpush.xpose.msra.mxu0 0.0
    %377 = vmatpush.xpose.msra.mxu0 0.0
    %378 = vmatpush.xpose.msra.mxu0 0.0
    %379 = vmatpush.xpose.msra.mxu0 0.0
    %380 = vmatpush.xpose.msra.mxu0 0.0
    %381 = vmatpush.xpose.msra.mxu0 0.0
    %382 = vmatpush.xpose.msra.mxu0 0.0
    %383 = vmatpush.xpose.msra.mxu0 0.0
    %384 = vmatpush.xpose.msra.mxu0 0.0
    %385 = vmatpush.xpose.msra.mxu0 0.0
    %386 = vmatpush.xpose.msra.mxu0 0.0
    %387 = vmatpush.xpose.msra.mxu0 0.0
    %388 = vmatpush.xpose.msra.mxu0 0.0
    %389 = vmatpush.xpose.msra.mxu0 0.0
    %390 = vmatpush.xpose.msra.mxu0 0.0
    %391 = vmatpush.xpose.msra.mxu0 %v374
    %392 = vmatmul.f32.gmra.mxu0 %v372
    %v393 = vpop.f32.mrf.mxu0
    %v394 = vadd.f32 0.0, %v393
    %395 = vdwg.mxu0
    %397 = vrot.lane.b32.xlu0 %v205, 96
    %v398 = vpop.permute.xlu0 %397
    %v399 = vsel %vm141, %v398, 0
    %v401 = vsel %vm141, %v205, 0
    %403 = vmatpush.xpose.msra.mxu0 0.0
    %404 = vmatpush.xpose.msra.mxu0 0.0
    %405 = vmatpush.xpose.msra.mxu0 0.0
    %406 = vmatpush.xpose.msra.mxu0 0.0
    %407 = vmatpush.xpose.msra.mxu0 0.0
    %408 = vmatpush.xpose.msra.mxu0 0.0
    %409 = vmatpush.xpose.msra.mxu0 0.0
    %410 = vmatpush.xpose.msra.mxu0 0.0
    %411 = vmatpush.xpose.msra.mxu0 0.0
    %412 = vmatpush.xpose.msra.mxu0 0.0
    %413 = vmatpush.xpose.msra.mxu0 0.0
    %414 = vmatpush.xpose.msra.mxu0 0.0
    %415 = vmatpush.xpose.msra.mxu0 0.0
    %416 = vmatpush.xpose.msra.mxu0 0.0
    %417 = vmatpush.xpose.msra.mxu0 0.0
    %418 = vmatpush.xpose.msra.mxu0 %v401
    %419 = vmatmul.f32.gmra.mxu0 %v399
    %v420 = vpop.f32.mrf.mxu0
    %v421 = vadd.f32 0.0, %v420
    %422 = vdwg.mxu0
    %v423 = vmul.f32 %v232, 0.17677669
    %v424 = vmul.f32 %v259, 0.17677669
    %v425 = vmul.f32 %v286, 0.17677669
    %v426 = vmul.f32 %v313, 0.17677669
    %v427 = vmul.f32 %v340, 0.17677669
    %v428 = vmul.f32 %v367, 0.17677669
    %v429 = vmul.f32 %v394, 0.17677669
    %v430 = vmul.f32 %v421, 0.17677669
    %vm431 = vcmask 64512
    %v432 = vsel %vm431, %v423, -inf
    %433 = vmax.xlane.f32.xlu0 %v432
    %v434 = vpop.xlane.xlu0 %433
    %v435 = vsel %vm431, %v424, -inf
    %436 = vmax.xlane.f32.xlu0 %v435
    %v437 = vpop.xlane.xlu0 %436
    %v438 = vsel %vm431, %v425, -inf
    %439 = vmax.xlane.f32.xlu0 %v438
    %v440 = vpop.xlane.xlu0 %439
    %v441 = vsel %vm431, %v426, -inf
    %442 = vmax.xlane.f32.xlu0 %v441
    %v443 = vpop.xlane.xlu0 %442
    %v444 = vsel %vm431, %v427, -inf
    %445 = vmax.xlane.f32.xlu0 %v444
    %v446 = vpop.xlane.xlu0 %445
    %v447 = vsel %vm431, %v428, -inf
    %448 = vmax.xlane.f32.xlu0 %v447
    %v449 = vpop.xlane.xlu0 %448
    %v450 = vsel %vm431, %v429, -inf
    %451 = vmax.xlane.f32.xlu0 %v450
    %v452 = vpop.xlane.xlu0 %451
    %v453 = vsel %vm431, %v430, -inf
    %454 = vmax.xlane.f32.xlu0 %v453
    %v455 = vpop.xlane.xlu0 %454
    %v456 = vsub.f32 %v423, %v434
    %v457 = vsub.f32 %v424, %v437
    %v458 = vsub.f32 %v425, %v440
    %v459 = vsub.f32 %v426, %v443
    %v460 = vsub.f32 %v427, %v446
    %v461 = vsub.f32 %v428, %v449
    %v462 = vsub.f32 %v429, %v452
    %v463 = vsub.f32 %v430, %v455
    %v464 = vmul.f32 %v456, 1.442695
    %v465 = vpow.pop %v464
    %v466 = vmul.f32 %v457, 1.442695
    %v467 = vpow.pop %v466
    %v468 = vmul.f32 %v458, 1.442695
    %v469 = vpow.pop %v468
    %v470 = vmul.f32 %v459, 1.442695
    %v471 = vpow.pop %v470
    %v472 = vmul.f32 %v460, 1.442695
    %v473 = vpow.pop %v472
    %v474 = vmul.f32 %v461, 1.442695
    %v475 = vpow.pop %v474
    %v476 = vmul.f32 %v462, 1.442695
    %v477 = vpow.pop %v476
    %v478 = vmul.f32 %v463, 1.442695
    %v479 = vpow.pop %v478
    %v480 = vsel %vm431, %v465, 0.0
    %481 = vadd.xlane.f32.xlu0 %v480
    %v482 = vpop.xlane.xlu0 %481
    %v483 = vsel %vm431, %v467, 0.0
    %484 = vadd.xlane.f32.xlu0 %v483
    %v485 = vpop.xlane.xlu0 %484
    %v486 = vsel %vm431, %v469, 0.0
    %487 = vadd.xlane.f32.xlu0 %v486
    %v488 = vpop.xlane.xlu0 %487
    %v489 = vsel %vm431, %v471, 0.0
    %490 = vadd.xlane.f32.xlu0 %v489
    %v491 = vpop.xlane.xlu0 %490
    %v492 = vsel %vm431, %v473, 0.0
    %493 = vadd.xlane.f32.xlu0 %v492
    %v494 = vpop.xlane.xlu0 %493
    %v495 = vsel %vm431, %v475, 0.0
    %496 = vadd.xlane.f32.xlu0 %v495
    %v497 = vpop.xlane.xlu0 %496
    %v498 = vsel %vm431, %v477, 0.0
    %499 = vadd.xlane.f32.xlu0 %v498
    %v500 = vpop.xlane.xlu0 %499
    %v501 = vsel %vm431, %v479, 0.0
    %502 = vadd.xlane.f32.xlu0 %v501
    %v503 = vpop.xlane.xlu0 %502
    %v504 = vrcp.pop %v482
    %v505 = vmul.f32 %v482, %v504
    %v506 = vsub.f32 1.0, %v505
    %v507 = vmul.f32 %v504, %v506
    %v508 = vadd.f32 %v504, %v507
    %vm509 = vweird.f32 %v482
    %vm510 = vweird.f32 %v504
    %vm511 = vmor %vm509, %vm510
    %v512 = vsel %vm511, %v504, %v508
    %v513 = vand.u32 2147483647, %v482
    %vm514 = vcmp.eq.f32.partialorder %v513, 8.507059e+37
    %v515 = vand.u32 %v482, 2147483648
    %v516 = vor.u32 1.1754944e-38, %v515
    %v517 = vsel %vm514, %v516, %v512
    %v518 = vmul.f32 %v465, %v517
    %v519 = vrcp.pop %v485
    %v520 = vmul.f32 %v485, %v519
    %v521 = vsub.f32 1.0, %v520
    %v522 = vmul.f32 %v519, %v521
    %v523 = vadd.f32 %v519, %v522
    %vm524 = vweird.f32 %v485
    %vm525 = vweird.f32 %v519
    %vm526 = vmor %vm524, %vm525
    %v527 = vsel %vm526, %v519, %v523
    %v528 = vand.u32 2147483647, %v485
    %vm529 = vcmp.eq.f32.partialorder %v528, 8.507059e+37
    %v530 = vand.u32 %v485, 2147483648
    %v531 = vor.u32 1.1754944e-38, %v530
    %v532 = vsel %vm529, %v531, %v527
    %v533 = vmul.f32 %v467, %v532
    %v534 = vrcp.pop %v488
    %v535 = vmul.f32 %v488, %v534
    %v536 = vsub.f32 1.0, %v535
    %v537 = vmul.f32 %v534, %v536
    %v538 = vadd.f32 %v534, %v537
    %vm539 = vweird.f32 %v488
    %vm540 = vweird.f32 %v534
    %vm541 = vmor %vm539, %vm540
    %v542 = vsel %vm541, %v534, %v538
    %v543 = vand.u32 2147483647, %v488
    %vm544 = vcmp.eq.f32.partialorder %v543, 8.507059e+37
    %v545 = vand.u32 %v488, 2147483648
    %v546 = vor.u32 1.1754944e-38, %v545
    %v547 = vsel %vm544, %v546, %v542
    %v548 = vmul.f32 %v469, %v547
    %v549 = vrcp.pop %v491
    %v550 = vmul.f32 %v491, %v549
    %v551 = vsub.f32 1.0, %v550
    %v552 = vmul.f32 %v549, %v551
    %v553 = vadd.f32 %v549, %v552
    %vm554 = vweird.f32 %v491
    %vm555 = vweird.f32 %v549
    %vm556 = vmor %vm554, %vm555
    %v557 = vsel %vm556, %v549, %v553
    %v558 = vand.u32 2147483647, %v491
    %vm559 = vcmp.eq.f32.partialorder %v558, 8.507059e+37
    %v560 = vand.u32 %v491, 2147483648
    %v561 = vor.u32 1.1754944e-38, %v560
    %v562 = vsel %vm559, %v561, %v557
    %v563 = vmul.f32 %v471, %v562
    %v564 = vrcp.pop %v494
    %v565 = vmul.f32 %v494, %v564
    %v566 = vsub.f32 1.0, %v565
    %v567 = vmul.f32 %v564, %v566
    %v568 = vadd.f32 %v564, %v567
    %vm569 = vweird.f32 %v494
    %vm570 = vweird.f32 %v564
    %vm571 = vmor %vm569, %vm570
    %v572 = vsel %vm571, %v564, %v568
    %v573 = vand.u32 2147483647, %v494
    %vm574 = vcmp.eq.f32.partialorder %v573, 8.507059e+37
    %v575 = vand.u32 %v494, 2147483648
    %v576 = vor.u32 1.1754944e-38, %v575
    %v577 = vsel %vm574, %v576, %v572
    %v578 = vmul.f32 %v473, %v577
    %v579 = vrcp.pop %v497
    %v580 = vmul.f32 %v497, %v579
    %v581 = vsub.f32 1.0, %v580
    %v582 = vmul.f32 %v579, %v581
    %v583 = vadd.f32 %v579, %v582
    %vm584 = vweird.f32 %v497
    %vm585 = vweird.f32 %v579
    %vm586 = vmor %vm584, %vm585
    %v587 = vsel %vm586, %v579, %v583
    %v588 = vand.u32 2147483647, %v497
    %vm589 = vcmp.eq.f32.partialorder %v588, 8.507059e+37
    %v590 = vand.u32 %v497, 2147483648
    %v591 = vor.u32 1.1754944e-38, %v590
    %v592 = vsel %vm589, %v591, %v587
    %v593 = vmul.f32 %v475, %v592
    %v594 = vrcp.pop %v500
    %v595 = vmul.f32 %v500, %v594
    %v596 = vsub.f32 1.0, %v595
    %v597 = vmul.f32 %v594, %v596
    %v598 = vadd.f32 %v594, %v597
    %vm599 = vweird.f32 %v500
    %vm600 = vweird.f32 %v594
    %vm601 = vmor %vm599, %vm600
    %v602 = vsel %vm601, %v594, %v598
    %v603 = vand.u32 2147483647, %v500
    %vm604 = vcmp.eq.f32.partialorder %v603, 8.507059e+37
    %v605 = vand.u32 %v500, 2147483648
    %v606 = vor.u32 1.1754944e-38, %v605
    %v607 = vsel %vm604, %v606, %v602
    %v608 = vmul.f32 %v477, %v607
    %v609 = vrcp.pop %v503
    %v610 = vmul.f32 %v503, %v609
    %v611 = vsub.f32 1.0, %v610
    %v612 = vmul.f32 %v609, %v611
    %v613 = vadd.f32 %v609, %v612
    %vm614 = vweird.f32 %v503
    %vm615 = vweird.f32 %v609
    %vm616 = vmor %vm614, %vm615
    %v617 = vsel %vm616, %v609, %v613
    %v618 = vand.u32 2147483647, %v503
    %vm619 = vcmp.eq.f32.partialorder %v618, 8.507059e+37
    %v620 = vand.u32 %v503, 2147483648
    %v621 = vor.u32 1.1754944e-38, %v620
    %v622 = vsel %vm619, %v621, %v617
    %v623 = vmul.f32 %v479, %v622
    %624 = vrot.lane.b32.xlu0 %v184, 64
    %v625 = vpop.permute.xlu0 %624
    %v628 = vsel %vm431, %v518, 0
    %630 = vmatpush.msra.mxu0 0.0
    %631 = vmatpush.msra.mxu0 0.0
    %632 = vmatpush.msra.mxu0 0.0
    %633 = vmatpush.msra.mxu0 0.0
    %634 = vmatpush.msra.mxu0 0.0
    %635 = vmatpush.msra.mxu0 0.0
    %636 = vmatpush.msra.mxu0 0.0
    %637 = vmatpush.msra.mxu0 0.0
    %638 = vmatpush.msra.mxu0 0.0
    %639 = vmatpush.msra.mxu0 0.0
    %640 = vmatpush.msra.mxu0 0.0
    %641 = vmatpush.msra.mxu0 0.0
    %642 = vmatpush.msra.mxu0 0.0
    %643 = vmatpush.msra.mxu0 0.0
    %644 = vmatpush.msra.mxu0 0.0
    %645 = vmatpush.msra.mxu0 %v625
    %646 = vmatmul.f32.gmra.mxu0 %v628
    %v647 = vpop.f32.mrf.mxu0
    %v648 = vadd.f32 0.0, %v647
    %649 = vdwg.mxu0
    %650 = vrot.lane.b32.xlu0 %v187, 64
    %v651 = vpop.permute.xlu0 %650
    %v654 = vsel %vm431, %v533, 0
    %656 = vmatpush.msra.mxu0 0.0
    %657 = vmatpush.msra.mxu0 0.0
    %658 = vmatpush.msra.mxu0 0.0
    %659 = vmatpush.msra.mxu0 0.0
    %660 = vmatpush.msra.mxu0 0.0
    %661 = vmatpush.msra.mxu0 0.0
    %662 = vmatpush.msra.mxu0 0.0
    %663 = vmatpush.msra.mxu0 0.0
    %664 = vmatpush.msra.mxu0 0.0
    %665 = vmatpush.msra.mxu0 0.0
    %666 = vmatpush.msra.mxu0 0.0
    %667 = vmatpush.msra.mxu0 0.0
    %668 = vmatpush.msra.mxu0 0.0
    %669 = vmatpush.msra.mxu0 0.0
    %670 = vmatpush.msra.mxu0 0.0
    %671 = vmatpush.msra.mxu0 %v651
    %672 = vmatmul.f32.gmra.mxu0 %v654
    %v673 = vpop.f32.mrf.mxu0
    %v674 = vadd.f32 0.0, %v673
    %675 = vdwg.mxu0
    %676 = vrot.lane.b32.xlu0 %v190, 64
    %v677 = vpop.permute.xlu0 %676
    %v680 = vsel %vm431, %v548, 0
    %682 = vmatpush.msra.mxu0 0.0
    %683 = vmatpush.msra.mxu0 0.0
    %684 = vmatpush.msra.mxu0 0.0
    %685 = vmatpush.msra.mxu0 0.0
    %686 = vmatpush.msra.mxu0 0.0
    %687 = vmatpush.msra.mxu0 0.0
    %688 = vmatpush.msra.mxu0 0.0
    %689 = vmatpush.msra.mxu0 0.0
    %690 = vmatpush.msra.mxu0 0.0
    %691 = vmatpush.msra.mxu0 0.0
    %692 = vmatpush.msra.mxu0 0.0
    %693 = vmatpush.msra.mxu0 0.0
    %694 = vmatpush.msra.mxu0 0.0
    %695 = vmatpush.msra.mxu0 0.0
    %696 = vmatpush.msra.mxu0 0.0
    %697 = vmatpush.msra.mxu0 %v677
    %698 = vmatmul.f32.gmra.mxu0 %v680
    %v699 = vpop.f32.mrf.mxu0
    %v700 = vadd.f32 0.0, %v699
    %701 = vdwg.mxu0
    %702 = vrot.lane.b32.xlu0 %v193, 64
    %v703 = vpop.permute.xlu0 %702
    %v706 = vsel %vm431, %v563, 0
    %708 = vmatpush.msra.mxu0 0.0
    %709 = vmatpush.msra.mxu0 0.0
    %710 = vmatpush.msra.mxu0 0.0
    %711 = vmatpush.msra.mxu0 0.0
    %712 = vmatpush.msra.mxu0 0.0
    %713 = vmatpush.msra.mxu0 0.0
    %714 = vmatpush.msra.mxu0 0.0
    %715 = vmatpush.msra.mxu0 0.0
    %716 = vmatpush.msra.mxu0 0.0
    %717 = vmatpush.msra.mxu0 0.0
    %718 = vmatpush.msra.mxu0 0.0
    %719 = vmatpush.msra.mxu0 0.0
    %720 = vmatpush.msra.mxu0 0.0
    %721 = vmatpush.msra.mxu0 0.0
    %722 = vmatpush.msra.mxu0 0.0
    %723 = vmatpush.msra.mxu0 %v703
    %724 = vmatmul.f32.gmra.mxu0 %v706
    %v725 = vpop.f32.mrf.mxu0
    %v726 = vadd.f32 0.0, %v725
    %727 = vdwg.mxu0
    %728 = vrot.lane.b32.xlu0 %v196, 64
    %v729 = vpop.permute.xlu0 %728
    %v732 = vsel %vm431, %v578, 0
    %734 = vmatpush.msra.mxu0 0.0
    %735 = vmatpush.msra.mxu0 0.0
    %736 = vmatpush.msra.mxu0 0.0
    %737 = vmatpush.msra.mxu0 0.0
    %738 = vmatpush.msra.mxu0 0.0
    %739 = vmatpush.msra.mxu0 0.0
    %740 = vmatpush.msra.mxu0 0.0
    %741 = vmatpush.msra.mxu0 0.0
    %742 = vmatpush.msra.mxu0 0.0
    %743 = vmatpush.msra.mxu0 0.0
    %744 = vmatpush.msra.mxu0 0.0
    %745 = vmatpush.msra.mxu0 0.0
    %746 = vmatpush.msra.mxu0 0.0
    %747 = vmatpush.msra.mxu0 0.0
    %748 = vmatpush.msra.mxu0 0.0
    %749 = vmatpush.msra.mxu0 %v729
    %750 = vmatmul.f32.gmra.mxu0 %v732
    %v751 = vpop.f32.mrf.mxu0
    %v752 = vadd.f32 0.0, %v751
    %753 = vdwg.mxu0
    %754 = vrot.lane.b32.xlu0 %v199, 64
    %v755 = vpop.permute.xlu0 %754
    %v758 = vsel %vm431, %v593, 0
    %760 = vmatpush.msra.mxu0 0.0
    %761 = vmatpush.msra.mxu0 0.0
    %762 = vmatpush.msra.mxu0 0.0
    %763 = vmatpush.msra.mxu0 0.0
    %764 = vmatpush.msra.mxu0 0.0
    %765 = vmatpush.msra.mxu0 0.0
    %766 = vmatpush.msra.mxu0 0.0
    %767 = vmatpush.msra.mxu0 0.0
    %768 = vmatpush.msra.mxu0 0.0
    %769 = vmatpush.msra.mxu0 0.0
    %770 = vmatpush.msra.mxu0 0.0
    %771 = vmatpush.msra.mxu0 0.0
    %772 = vmatpush.msra.mxu0 0.0
    %773 = vmatpush.msra.mxu0 0.0
    %774 = vmatpush.msra.mxu0 0.0
    %775 = vmatpush.msra.mxu0 %v755
    %776 = vmatmul.f32.gmra.mxu0 %v758
    %v777 = vpop.f32.mrf.mxu0
    %v778 = vadd.f32 0.0, %v777
    %779 = vdwg.mxu0
    %780 = vrot.lane.b32.xlu0 %v202, 64
    %v781 = vpop.permute.xlu0 %780
    %v784 = vsel %vm431, %v608, 0
    %786 = vmatpush.msra.mxu0 0.0
    %787 = vmatpush.msra.mxu0 0.0
    %788 = vmatpush.msra.mxu0 0.0
    %789 = vmatpush.msra.mxu0 0.0
    %790 = vmatpush.msra.mxu0 0.0
    %791 = vmatpush.msra.mxu0 0.0
    %792 = vmatpush.msra.mxu0 0.0
    %793 = vmatpush.msra.mxu0 0.0
    %794 = vmatpush.msra.mxu0 0.0
    %795 = vmatpush.msra.mxu0 0.0
    %796 = vmatpush.msra.mxu0 0.0
    %797 = vmatpush.msra.mxu0 0.0
    %798 = vmatpush.msra.mxu0 0.0
    %799 = vmatpush.msra.mxu0 0.0
    %800 = vmatpush.msra.mxu0 0.0
    %801 = vmatpush.msra.mxu0 %v781
    %802 = vmatmul.f32.gmra.mxu0 %v784
    %v803 = vpop.f32.mrf.mxu0
    %v804 = vadd.f32 0.0, %v803
    %805 = vdwg.mxu0
    %806 = vrot.lane.b32.xlu0 %v205, 64
    %v807 = vpop.permute.xlu0 %806
    %v810 = vsel %vm431, %v623, 0
    %812 = vmatpush.msra.mxu0 0.0
    %813 = vmatpush.msra.mxu0 0.0
    %814 = vmatpush.msra.mxu0 0.0
    %815 = vmatpush.msra.mxu0 0.0
    %816 = vmatpush.msra.mxu0 0.0
    %817 = vmatpush.msra.mxu0 0.0
    %818 = vmatpush.msra.mxu0 0.0
    %819 = vmatpush.msra.mxu0 0.0
    %820 = vmatpush.msra.mxu0 0.0
    %821 = vmatpush.msra.mxu0 0.0
    %822 = vmatpush.msra.mxu0 0.0
    %823 = vmatpush.msra.mxu0 0.0
    %824 = vmatpush.msra.mxu0 0.0
    %825 = vmatpush.msra.mxu0 0.0
    %826 = vmatpush.msra.mxu0 0.0
    %827 = vmatpush.msra.mxu0 %v807
    %828 = vmatmul.f32.gmra.mxu0 %v810
    %v829 = vpop.f32.mrf.mxu0
    %v830 = vadd.f32 0.0, %v829
    %831 = vdwg.mxu0
    %v840 = vrot.slane %v674, 7
    %vm841 = vcmask 1041409
    %v842 = vsel %vm841, %v840, %v648
    %v843 = vrot.slane %v700, 6
    %vm844 = vcmask 1042434
    %v845 = vsel %vm844, %v843, %v842
    %v846 = vrot.slane %v726, 5
    %vm847 = vcmask 1043459
    %v848 = vsel %vm847, %v846, %v845
    %v849 = vrot.slane %v752, 4
    %vm850 = vcmask 1044484
    %v851 = vsel %vm850, %v849, %v848
    %v852 = vrot.slane %v778, 3
    %vm853 = vcmask 1045509
    %v854 = vsel %vm853, %v852, %v851
    %v855 = vrot.slane %v804, 2
    %vm856 = vcmask 1046534
    %v857 = vsel %vm856, %v855, %v854
    %v858 = vrot.slane %v830, 1
    %vm859 = vcmask 1047559
    %v860 = vsel %vm859, %v858, %v857
    %862 = vst.msk [vmem:[#allocation3] sm:$0xff] %vm141, %v860
    %v863 = vsel %vm844, %v840, %v648
    %v864 = vsel %vm847, %v843, %v863
    %v865 = vsel %vm850, %v846, %v864
    %v866 = vsel %vm853, %v849, %v865
    %v867 = vsel %vm856, %v852, %v866
    %v868 = vsel %vm859, %v855, %v867
    %s871 = scalar_lea.vmem [#allocation3], 8
    %vm872 = vcmask 261121
    %873 = vst.msk [vmem:[%s871 - $0x1] sm:$0xfe] %vm872, %v868
    %vm874 = vcmask 253952
    %875 = vst.msk [vmem:[%s871 + $0x7] sm:$0x1] %vm874, %v858
    %v876 = vsel %vm847, %v840, %v648
    %v877 = vsel %vm850, %v843, %v876
    %v878 = vsel %vm853, %v846, %v877
    %v879 = vsel %vm856, %v849, %v878
    %v880 = vsel %vm859, %v852, %v879
    %v881 = vsel %vm841, %v858, %v855
    %s884 = scalar_lea.vmem [#allocation3], 16
    %vm885 = vcmask 261122
    %886 = vst.msk [vmem:[%s884 - $0x2] sm:$0xfc] %vm885, %v880
    %vm887 = vcmask 254976
    %888 = vst.msk [vmem:[%s884 + $0x6] sm:$0x3] %vm887, %v881
    %v889 = vsel %vm850, %v840, %v648
    %v890 = vsel %vm853, %v843, %v889
    %v891 = vsel %vm856, %v846, %v890
    %v892 = vsel %vm859, %v849, %v891
    %v893 = vsel %vm841, %v855, %v852
    %v894 = vsel %vm844, %v858, %v893
    %s897 = scalar_lea.vmem [#allocation3], 24
    %vm898 = vcmask 261123
    %899 = vst.msk [vmem:[%s897 - $0x3] sm:$0xf8] %vm898, %v892
    %vm900 = vcmask 256000
    %901 = vst.msk [vmem:[%s897 + $0x5] sm:$0x7] %vm900, %v894
    %v902 = vsel %vm853, %v840, %v648
    %v903 = vsel %vm856, %v843, %v902
    %v904 = vsel %vm859, %v846, %v903
    %v905 = vsel %vm841, %v852, %v849
    %v906 = vsel %vm844, %v855, %v905
    %v907 = vsel %vm847, %v858, %v906
    %s910 = scalar_lea.vmem [#allocation3], 32
    %vm911 = vcmask 261124
    %912 = vst.msk [vmem:[%s910 - $0x4] sm:$0xf0] %vm911, %v904
    %vm913 = vcmask 257024
    %914 = vst.msk [vmem:[%s910 + $0x4] sm:$0xf] %vm913, %v907
    %v915 = vsel %vm856, %v840, %v648
    %v916 = vsel %vm859, %v843, %v915
    %v917 = vsel %vm841, %v849, %v846
    %v918 = vsel %vm844, %v852, %v917
    %v919 = vsel %vm847, %v855, %v918
    %v920 = vsel %vm850, %v858, %v919
    %s923 = scalar_lea.vmem [#allocation3], 40
    %vm924 = vcmask 261125
    %925 = vst.msk [vmem:[%s923 - $0x5] sm:$0xe0] %vm924, %v916
    %vm926 = vcmask 258048
    %927 = vst.msk [vmem:[%s923 + $0x3] sm:$0x1f] %vm926, %v920
    %v928 = vsel %vm859, %v840, %v648
    %v929 = vsel %vm841, %v846, %v843
    %v930 = vsel %vm844, %v849, %v929
    %v931 = vsel %vm847, %v852, %v930
    %v932 = vsel %vm850, %v855, %v931
    %v933 = vsel %vm853, %v858, %v932
    %s936 = scalar_lea.vmem [#allocation3], 48
    %vm937 = vcmask 261126
    %938 = vst.msk [vmem:[%s936 - $0x6] sm:$0xc0] %vm937, %v928
    %vm939 = vcmask 259072
    %940 = vst.msk [vmem:[%s936 + $0x2] sm:$0x3f] %vm939, %v933
    %v941 = vsel %vm841, %v843, %v840
    %v942 = vsel %vm844, %v846, %v941
    %v943 = vsel %vm847, %v849, %v942
    %v944 = vsel %vm850, %v852, %v943
    %v945 = vsel %vm853, %v855, %v944
    %v946 = vsel %vm856, %v858, %v945
    %s949 = scalar_lea.vmem [#allocation3], 56
    %vm950 = vcmask 261127
    %951 = vst.msk [vmem:[%s949 - $0x7] sm:$0x80] %vm950, %v648
    %vm952 = vcmask 260096
    %953 = vst.msk [vmem:[%s949 + $0x1] sm:$0x7f] %vm952, %v946
    %v954 = vld [vmem:[#allocation3] sm:$0xff]
    %v955 = vld [vmem:[#allocation3 + $0x8] sm:$0xff]
    %v956 = vld [vmem:[#allocation3 + $0x10] sm:$0xff]
    %v957 = vld [vmem:[#allocation3 + $0x18] sm:$0xff]
    %v958 = vld [vmem:[#allocation3 + $0x20] sm:$0xff]
    %v959 = vld [vmem:[#allocation3 + $0x28] sm:$0xff]
    %v960 = vld [vmem:[#allocation3 + $0x30] sm:$0xff]
    %v961 = vld [vmem:[#allocation3 + $0x38] sm:$0xff]
    %v962 = vld [vmem:[#allocation10] sm:$0xff]
    %v963 = vld [vmem:[#allocation10 + $0x8] sm:$0xff]
    %v964 = vld [vmem:[#allocation10 + $0x10] sm:$0xff]
    %v965 = vld [vmem:[#allocation10 + $0x18] sm:$0xff]
    %v966 = vld [vmem:[%s4] sm:$0x1]
    %v968 = vperm.slane %v966, 0
    %v971 = vsel %vm141, %v954, 0
    %v974 = vsel %vm141, %v955, 0
    %v977 = vsel %vm141, %v956, 0
    %v980 = vsel %vm141, %v957, 0
    %v983 = vsel %vm141, %v958, 0
    %v986 = vsel %vm141, %v959, 0
    %v989 = vsel %vm141, %v960, 0
    %v992 = vsel %vm141, %v961, 0
    %994 = vmatpush.msra.mxu0 0.0
    %995 = vmatpush.msra.mxu0 0.0
    %996 = vmatpush.msra.mxu0 0.0
    %997 = vmatpush.msra.mxu0 0.0
    %998 = vmatpush.msra.mxu0 0.0
    %999 = vmatpush.msra.mxu0 0.0
    %1000 = vmatpush.msra.mxu0 0.0
    %1001 = vmatpush.msra.mxu0 0.0
    %1002 = vmatpush.msra.mxu0 0.0
    %1003 = vmatpush.msra.mxu0 0.0
    %1004 = vmatpush.msra.mxu0 0.0
    %1005 = vmatpush.msra.mxu0 0.0
    %1006 = vmatpush.msra.mxu0 %v965
    %1007 = vmatpush.msra.mxu0 %v964
    %1008 = vmatpush.msra.mxu0 %v963
    %1009 = vmatpush.msra.mxu0 %v962
    %1010 = vmatmul.f32.gmra.mxu0 %v971
    %v1011 = vpop.f32.mrf.mxu0
    %v1012 = vadd.f32 %v968, %v1011
    %1013 = vmatmul.f32.gmra.mxu0 %v974
    %v1014 = vpop.f32.mrf.mxu0
    %v1015 = vadd.f32 %v968, %v1014
    %1016 = vmatmul.f32.gmra.mxu0 %v977
    %v1017 = vpop.f32.mrf.mxu0
    %v1018 = vadd.f32 %v968, %v1017
    %1019 = vmatmul.f32.gmra.mxu0 %v980
    %v1020 = vpop.f32.mrf.mxu0
    %v1021 = vadd.f32 %v968, %v1020
    %1022 = vmatmul.f32.gmra.mxu0 %v983
    %v1023 = vpop.f32.mrf.mxu0
    %v1024 = vadd.f32 %v968, %v1023
    %1025 = vmatmul.f32.gmra.mxu0 %v986
    %v1026 = vpop.f32.mrf.mxu0
    %v1027 = vadd.f32 %v968, %v1026
    %1028 = vmatmul.f32.gmra.mxu0 %v989
    %v1029 = vpop.f32.mrf.mxu0
    %v1030 = vadd.f32 %v968, %v1029
    %1031 = vmatmul.f32.gmra.mxu0 %v992
    %v1032 = vpop.f32.mrf.mxu0
    %v1033 = vadd.f32 %v968, %v1032
    %1034 = vdwg.mxu0
    %1035 = vst [vmem:[#allocation2] sm:$0xff] %v1012
    %1036 = vst [vmem:[#allocation2 + $0x8] sm:$0xff] %v1015
    %1037 = vst [vmem:[#allocation2 + $0x10] sm:$0xff] %v1018
    %1038 = vst [vmem:[#allocation2 + $0x18] sm:$0xff] %v1021
    %1039 = vst [vmem:[#allocation2 + $0x20] sm:$0xff] %v1024
    %1040 = vst [vmem:[#allocation2 + $0x28] sm:$0xff] %v1027
    %1041 = vst [vmem:[#allocation2 + $0x30] sm:$0xff] %v1030
    %1042 = vst [vmem:[#allocation2 + $0x38] sm:$0xff] %v1033
    %v1043 = vld [vmem:[#allocation12] sm:$0xff]
    %v1044 = vld [vmem:[#allocation12 + $0x8] sm:$0xff]
    %v1045 = vld [vmem:[#allocation12 + $0x10] sm:$0xff]
    %v1046 = vld [vmem:[#allocation12 + $0x18] sm:$0xff]
    %v1047 = vld [vmem:[%s6] sm:$0x1]
    %v1048 = vld [vmem:[#allocation2] sm:$0xff]
    %v1050 = vperm.slane %v1047, 0
    %v1053 = vsel %vm141, 0.0, 0
    %1055 = vmatpush.msra.mxu0 0.0
    %1056 = vmatpush.msra.mxu0 0.0
    %1057 = vmatpush.msra.mxu0 0.0
    %1058 = vmatpush.msra.mxu0 0.0
    %1059 = vmatpush.msra.mxu0 0.0
    %1060 = vmatpush.msra.mxu0 0.0
    %1061 = vmatpush.msra.mxu0 0.0
    %1062 = vmatpush.msra.mxu0 0.0
    %1063 = vmatpush.msra.mxu0 0.0
    %1064 = vmatpush.msra.mxu0 0.0
    %1065 = vmatpush.msra.mxu0 0.0
    %1066 = vmatpush.msra.mxu0 0.0
    %1067 = vmatpush.msra.mxu0 %v1046
    %1068 = vmatpush.msra.mxu0 %v1045
    %1069 = vmatpush.msra.mxu0 %v1044
    %1070 = vmatpush.msra.mxu0 %v1043
    %1071 = vmatmul.f32.gmra.mxu0 %v1053
    %v1072 = vpop.f32.mrf.mxu0
    %v1073 = vadd.f32 %v1050, %v1072
    %1074 = vdwg.mxu0
    %v1075 = vadd.f32 %v1048, %v1073
    %v1076 = vxor.u32 %v1075, 2147483648
    %v1077 = vmul.f32 %v1076, 1.442695
    %v1078 = vpow.pop %v1077
    %v1079 = vadd.f32 %v1078, 1.0
    %v1080 = vrcp.pop %v1079
    %v1081 = vmul.f32 %v1079, %v1080
    %v1082 = vsub.f32 1.0, %v1081
    %v1083 = vmul.f32 %v1080, %v1082
    %v1084 = vadd.f32 %v1080, %v1083
    %vm1085 = vweird.f32 %v1079
    %vm1086 = vweird.f32 %v1080
    %vm1087 = vmor %vm1085, %vm1086
    %v1088 = vsel %vm1087, %v1080, %v1084
    %v1089 = vand.u32 2147483647, %v1079
    %vm1090 = vcmp.eq.f32.partialorder %v1089, 8.507059e+37
    %v1091 = vand.u32 %v1079, 2147483648
    %v1092 = vor.u32 1.1754944e-38, %v1091
    %v1093 = vsel %vm1090, %v1092, %v1088
    %v1094 = vmul.f32 1.0, %v1093
    %1096 = vrot.lane.b32.xlu0 %v1073, 64
    %v1097 = vpop.permute.xlu0 %1096
    %v1099 = vmul.f32 %v1094, %v1097
    %1101 = vrot.lane.b32.xlu0 %v1099, 64
    %v1102 = vpop.permute.xlu0 %1101
    %v1104 = vadd.f32 %v1048, %v1102
    %v1105 = vtanh.pop %v1104
    %v1106 = vsub.f32 1.0, %v1094
    %1108 = vrot.lane.b32.xlu0 %v1105, 96
    %v1109 = vpop.permute.xlu0 %1108
    %v1111 = vmul.f32 %v1106, %v1109
    %v1112 = vmul.f32 %v1094, 0.0
    %v1113 = vadd.f32 %v1111, %v1112
    %1115 = vrot.lane.b32.xlu0 %v1113, 96
    %v1116 = vpop.permute.xlu0 %1115
    %1118 = vst.msk [vmem:[#allocation3] sm:$0xff] %vm141, %v1116
    %s1119 = scalar_lea.vmem [#allocation2], 8
    %v1120 = vld [vmem:[%s1119] sm:$0xff]
    %v1121 = vsel %vm141, %v1116, 0
    %1123 = vmatpush.msra.mxu0 0.0
    %1124 = vmatpush.msra.mxu0 0.0
    %1125 = vmatpush.msra.mxu0 0.0
    %1126 = vmatpush.msra.mxu0 0.0
    %1127 = vmatpush.msra.mxu0 0.0
    %1128 = vmatpush.msra.mxu0 0.0
    %1129 = vmatpush.msra.mxu0 0.0
    %1130 = vmatpush.msra.mxu0 0.0
    %1131 = vmatpush.msra.mxu0 0.0
    %1132 = vmatpush.msra.mxu0 0.0
    %1133 = vmatpush.msra.mxu0 0.0
    %1134 = vmatpush.msra.mxu0 0.0
    %1135 = vmatpush.msra.mxu0 %v1046
    %1136 = vmatpush.msra.mxu0 %v1045
    %1137 = vmatpush.msra.mxu0 %v1044
    %1138 = vmatpush.msra.mxu0 %v1043
    %1139 = vmatmul.f32.gmra.mxu0 %v1121
    %v1140 = vpop.f32.mrf.mxu0
    %v1141 = vadd.f32 %v1050, %v1140
    %1142 = vdwg.mxu0
    %v1143 = vadd.f32 %v1120, %v1141
    %v1144 = vxor.u32 %v1143, 2147483648
    %v1145 = vmul.f32 %v1144, 1.442695
    %v1146 = vpow.pop %v1145
    %v1147 = vadd.f32 %v1146, 1.0
    %v1148 = vrcp.pop %v1147
    %v1149 = vmul.f32 %v1147, %v1148
    %v1150 = vsub.f32 1.0, %v1149
    %v1151 = vmul.f32 %v1148, %v1150
    %v1152 = vadd.f32 %v1148, %v1151
    %vm1153 = vweird.f32 %v1147
    %vm1154 = vweird.f32 %v1148
    %vm1155 = vmor %vm1153, %vm1154
    %v1156 = vsel %vm1155, %v1148, %v1152
    %v1157 = vand.u32 2147483647, %v1147
    %vm1158 = vcmp.eq.f32.partialorder %v1157, 8.507059e+37
    %v1159 = vand.u32 %v1147, 2147483648
    %v1160 = vor.u32 1.1754944e-38, %v1159
    %v1161 = vsel %vm1158, %v1160, %v1156
    %v1162 = vmul.f32 1.0, %v1161
    %1164 = vrot.lane.b32.xlu0 %v1141, 64
    %v1165 = vpop.permute.xlu0 %1164
    %v1167 = vmul.f32 %v1162, %v1165
    %1169 = vrot.lane.b32.xlu0 %v1167, 64
    %v1170 = vpop.permute.xlu0 %1169
    %v1172 = vadd.f32 %v1120, %v1170
    %v1173 = vtanh.pop %v1172
    %v1174 = vsub.f32 1.0, %v1162
    %1176 = vrot.lane.b32.xlu0 %v1173, 96
    %v1177 = vpop.permute.xlu0 %1176
    %v1179 = vmul.f32 %v1174, %v1177
    %v1180 = vmul.f32 %v1162, %v1113
    %v1181 = vadd.f32 %v1179, %v1180
    %1183 = vrot.lane.b32.xlu0 %v1181, 96
    %v1184 = vpop.permute.xlu0 %1183
    %1186 = vst.msk [vmem:[%s871] sm:$0xff] %vm141, %v1184
    %s1187 = scalar_lea.vmem [#allocation2], 16
    %v1188 = vld [vmem:[%s1187] sm:$0xff]
    %v1189 = vsel %vm141, %v1184, 0
    %1191 = vmatpush.msra.mxu0 0.0
    %1192 = vmatpush.msra.mxu0 0.0
    %1193 = vmatpush.msra.mxu0 0.0
    %1194 = vmatpush.msra.mxu0 0.0
    %1195 = vmatpush.msra.mxu0 0.0
    %1196 = vmatpush.msra.mxu0 0.0
    %1197 = vmatpush.msra.mxu0 0.0
    %1198 = vmatpush.msra.mxu0 0.0
    %1199 = vmatpush.msra.mxu0 0.0
    %1200 = vmatpush.msra.mxu0 0.0
    %1201 = vmatpush.msra.mxu0 0.0
    %1202 = vmatpush.msra.mxu0 0.0
    %1203 = vmatpush.msra.mxu0 %v1046
    %1204 = vmatpush.msra.mxu0 %v1045
    %1205 = vmatpush.msra.mxu0 %v1044
    %1206 = vmatpush.msra.mxu0 %v1043
    %1207 = vmatmul.f32.gmra.mxu0 %v1189
    %v1208 = vpop.f32.mrf.mxu0
    %v1209 = vadd.f32 %v1050, %v1208
    %1210 = vdwg.mxu0
    %v1211 = vadd.f32 %v1188, %v1209
    %v1212 = vxor.u32 %v1211, 2147483648
    %v1213 = vmul.f32 %v1212, 1.442695
    %v1214 = vpow.pop %v1213
    %v1215 = vadd.f32 %v1214, 1.0
    %v1216 = vrcp.pop %v1215
    %v1217 = vmul.f32 %v1215, %v1216
    %v1218 = vsub.f32 1.0, %v1217
    %v1219 = vmul.f32 %v1216, %v1218
    %v1220 = vadd.f32 %v1216, %v1219
    %vm1221 = vweird.f32 %v1215
    %vm1222 = vweird.f32 %v1216
    %vm1223 = vmor %vm1221, %vm1222
    %v1224 = vsel %vm1223, %v1216, %v1220
    %v1225 = vand.u32 2147483647, %v1215
    %vm1226 = vcmp.eq.f32.partialorder %v1225, 8.507059e+37
    %v1227 = vand.u32 %v1215, 2147483648
    %v1228 = vor.u32 1.1754944e-38, %v1227
    %v1229 = vsel %vm1226, %v1228, %v1224
    %v1230 = vmul.f32 1.0, %v1229
    %1232 = vrot.lane.b32.xlu0 %v1209, 64
    %v1233 = vpop.permute.xlu0 %1232
    %v1235 = vmul.f32 %v1230, %v1233
    %1237 = vrot.lane.b32.xlu0 %v1235, 64
    %v1238 = vpop.permute.xlu0 %1237
    %v1240 = vadd.f32 %v1188, %v1238
    %v1241 = vtanh.pop %v1240
    %v1242 = vsub.f32 1.0, %v1230
    %1244 = vrot.lane.b32.xlu0 %v1241, 96
    %v1245 = vpop.permute.xlu0 %1244
    %v1247 = vmul.f32 %v1242, %v1245
    %v1248 = vmul.f32 %v1230, %v1181
    %v1249 = vadd.f32 %v1247, %v1248
    %1251 = vrot.lane.b32.xlu0 %v1249, 96
    %v1252 = vpop.permute.xlu0 %1251
    %1254 = vst.msk [vmem:[%s884] sm:$0xff] %vm141, %v1252
    %s1255 = scalar_lea.vmem [#allocation2], 24
    %v1256 = vld [vmem:[%s1255] sm:$0xff]
    %v1257 = vsel %vm141, %v1252, 0
    %1259 = vmatpush.msra.mxu0 0.0
    %1260 = vmatpush.msra.mxu0 0.0
    %1261 = vmatpush.msra.mxu0 0.0
    %1262 = vmatpush.msra.mxu0 0.0
    %1263 = vmatpush.msra.mxu0 0.0
    %1264 = vmatpush.msra.mxu0 0.0
    %1265 = vmatpush.msra.mxu0 0.0
    %1266 = vmatpush.msra.mxu0 0.0
    %1267 = vmatpush.msra.mxu0 0.0
    %1268 = vmatpush.msra.mxu0 0.0
    %1269 = vmatpush.msra.mxu0 0.0
    %1270 = vmatpush.msra.mxu0 0.0
    %1271 = vmatpush.msra.mxu0 %v1046
    %1272 = vmatpush.msra.mxu0 %v1045
    %1273 = vmatpush.msra.mxu0 %v1044
    %1274 = vmatpush.msra.mxu0 %v1043
    %1275 = vmatmul.f32.gmra.mxu0 %v1257
    %v1276 = vpop.f32.mrf.mxu0
    %v1277 = vadd.f32 %v1050, %v1276
    %1278 = vdwg.mxu0
    %v1279 = vadd.f32 %v1256, %v1277
    %v1280 = vxor.u32 %v1279, 2147483648
    %v1281 = vmul.f32 %v1280, 1.442695
    %v1282 = vpow.pop %v1281
    %v1283 = vadd.f32 %v1282, 1.0
    %v1284 = vrcp.pop %v1283
    %v1285 = vmul.f32 %v1283, %v1284
    %v1286 = vsub.f32 1.0, %v1285
    %v1287 = vmul.f32 %v1284, %v1286
    %v1288 = vadd.f32 %v1284, %v1287
    %vm1289 = vweird.f32 %v1283
    %vm1290 = vweird.f32 %v1284
    %vm1291 = vmor %vm1289, %vm1290
    %v1292 = vsel %vm1291, %v1284, %v1288
    %v1293 = vand.u32 2147483647, %v1283
    %vm1294 = vcmp.eq.f32.partialorder %v1293, 8.507059e+37
    %v1295 = vand.u32 %v1283, 2147483648
    %v1296 = vor.u32 1.1754944e-38, %v1295
    %v1297 = vsel %vm1294, %v1296, %v1292
    %v1298 = vmul.f32 1.0, %v1297
    %1300 = vrot.lane.b32.xlu0 %v1277, 64
    %v1301 = vpop.permute.xlu0 %1300
    %v1303 = vmul.f32 %v1298, %v1301
    %1305 = vrot.lane.b32.xlu0 %v1303, 64
    %v1306 = vpop.permute.xlu0 %1305
    %v1308 = vadd.f32 %v1256, %v1306
    %v1309 = vtanh.pop %v1308
    %v1310 = vsub.f32 1.0, %v1298
    %1312 = vrot.lane.b32.xlu0 %v1309, 96
    %v1313 = vpop.permute.xlu0 %1312
    %v1315 = vmul.f32 %v1310, %v1313
    %v1316 = vmul.f32 %v1298, %v1249
    %v1317 = vadd.f32 %v1315, %v1316
    %1319 = vrot.lane.b32.xlu0 %v1317, 96
    %v1320 = vpop.permute.xlu0 %1319
    %1322 = vst.msk [vmem:[%s897] sm:$0xff] %vm141, %v1320
    %s1323 = scalar_lea.vmem [#allocation2], 32
    %v1324 = vld [vmem:[%s1323] sm:$0xff]
    %v1325 = vsel %vm141, %v1320, 0
    %1327 = vmatpush.msra.mxu0 0.0
    %1328 = vmatpush.msra.mxu0 0.0
    %1329 = vmatpush.msra.mxu0 0.0
    %1330 = vmatpush.msra.mxu0 0.0
    %1331 = vmatpush.msra.mxu0 0.0
    %1332 = vmatpush.msra.mxu0 0.0
    %1333 = vmatpush.msra.mxu0 0.0
    %1334 = vmatpush.msra.mxu0 0.0
    %1335 = vmatpush.msra.mxu0 0.0
    %1336 = vmatpush.msra.mxu0 0.0
    %1337 = vmatpush.msra.mxu0 0.0
    %1338 = vmatpush.msra.mxu0 0.0
    %1339 = vmatpush.msra.mxu0 %v1046
    %1340 = vmatpush.msra.mxu0 %v1045
    %1341 = vmatpush.msra.mxu0 %v1044
    %1342 = vmatpush.msra.mxu0 %v1043
    %1343 = vmatmul.f32.gmra.mxu0 %v1325
    %v1344 = vpop.f32.mrf.mxu0
    %v1345 = vadd.f32 %v1050, %v1344
    %1346 = vdwg.mxu0
    %v1347 = vadd.f32 %v1324, %v1345
    %v1348 = vxor.u32 %v1347, 2147483648
    %v1349 = vmul.f32 %v1348, 1.442695
    %v1350 = vpow.pop %v1349
    %v1351 = vadd.f32 %v1350, 1.0
    %v1352 = vrcp.pop %v1351
    %v1353 = vmul.f32 %v1351, %v1352
    %v1354 = vsub.f32 1.0, %v1353
    %v1355 = vmul.f32 %v1352, %v1354
    %v1356 = vadd.f32 %v1352, %v1355
    %vm1357 = vweird.f32 %v1351
    %vm1358 = vweird.f32 %v1352
    %vm1359 = vmor %vm1357, %vm1358
    %v1360 = vsel %vm1359, %v1352, %v1356
    %v1361 = vand.u32 2147483647, %v1351
    %vm1362 = vcmp.eq.f32.partialorder %v1361, 8.507059e+37
    %v1363 = vand.u32 %v1351, 2147483648
    %v1364 = vor.u32 1.1754944e-38, %v1363
    %v1365 = vsel %vm1362, %v1364, %v1360
    %v1366 = vmul.f32 1.0, %v1365
    %1368 = vrot.lane.b32.xlu0 %v1345, 64
    %v1369 = vpop.permute.xlu0 %1368
    %v1371 = vmul.f32 %v1366, %v1369
    %1373 = vrot.lane.b32.xlu0 %v1371, 64
    %v1374 = vpop.permute.xlu0 %1373
    %v1376 = vadd.f32 %v1324, %v1374
    %v1377 = vtanh.pop %v1376
    %v1378 = vsub.f32 1.0, %v1366
    %1380 = vrot.lane.b32.xlu0 %v1377, 96
    %v1381 = vpop.permute.xlu0 %1380
    %v1383 = vmul.f32 %v1378, %v1381
    %v1384 = vmul.f32 %v1366, %v1317
    %v1385 = vadd.f32 %v1383, %v1384
    %1387 = vrot.lane.b32.xlu0 %v1385, 96
    %v1388 = vpop.permute.xlu0 %1387
    %1390 = vst.msk [vmem:[%s910] sm:$0xff] %vm141, %v1388
    %s1391 = scalar_lea.vmem [#allocation2], 40
    %v1392 = vld [vmem:[%s1391] sm:$0xff]
    %v1393 = vsel %vm141, %v1388, 0
    %1395 = vmatpush.msra.mxu0 0.0
    %1396 = vmatpush.msra.mxu0 0.0
    %1397 = vmatpush.msra.mxu0 0.0
    %1398 = vmatpush.msra.mxu0 0.0
    %1399 = vmatpush.msra.mxu0 0.0
    %1400 = vmatpush.msra.mxu0 0.0
    %1401 = vmatpush.msra.mxu0 0.0
    %1402 = vmatpush.msra.mxu0 0.0
    %1403 = vmatpush.msra.mxu0 0.0
    %1404 = vmatpush.msra.mxu0 0.0
    %1405 = vmatpush.msra.mxu0 0.0
    %1406 = vmatpush.msra.mxu0 0.0
    %1407 = vmatpush.msra.mxu0 %v1046
    %1408 = vmatpush.msra.mxu0 %v1045
    %1409 = vmatpush.msra.mxu0 %v1044
    %1410 = vmatpush.msra.mxu0 %v1043
    %1411 = vmatmul.f32.gmra.mxu0 %v1393
    %v1412 = vpop.f32.mrf.mxu0
    %v1413 = vadd.f32 %v1050, %v1412
    %1414 = vdwg.mxu0
    %v1415 = vadd.f32 %v1392, %v1413
    %v1416 = vxor.u32 %v1415, 2147483648
    %v1417 = vmul.f32 %v1416, 1.442695
    %v1418 = vpow.pop %v1417
    %v1419 = vadd.f32 %v1418, 1.0
    %v1420 = vrcp.pop %v1419
    %v1421 = vmul.f32 %v1419, %v1420
    %v1422 = vsub.f32 1.0, %v1421
    %v1423 = vmul.f32 %v1420, %v1422
    %v1424 = vadd.f32 %v1420, %v1423
    %vm1425 = vweird.f32 %v1419
    %vm1426 = vweird.f32 %v1420
    %vm1427 = vmor %vm1425, %vm1426
    %v1428 = vsel %vm1427, %v1420, %v1424
    %v1429 = vand.u32 2147483647, %v1419
    %vm1430 = vcmp.eq.f32.partialorder %v1429, 8.507059e+37
    %v1431 = vand.u32 %v1419, 2147483648
    %v1432 = vor.u32 1.1754944e-38, %v1431
    %v1433 = vsel %vm1430, %v1432, %v1428
    %v1434 = vmul.f32 1.0, %v1433
    %1436 = vrot.lane.b32.xlu0 %v1413, 64
    %v1437 = vpop.permute.xlu0 %1436
    %v1439 = vmul.f32 %v1434, %v1437
    %1441 = vrot.lane.b32.xlu0 %v1439, 64
    %v1442 = vpop.permute.xlu0 %1441
    %v1444 = vadd.f32 %v1392, %v1442
    %v1445 = vtanh.pop %v1444
    %v1446 = vsub.f32 1.0, %v1434
    %1448 = vrot.lane.b32.xlu0 %v1445, 96
    %v1449 = vpop.permute.xlu0 %1448
    %v1451 = vmul.f32 %v1446, %v1449
    %v1452 = vmul.f32 %v1434, %v1385
    %v1453 = vadd.f32 %v1451, %v1452
    %1455 = vrot.lane.b32.xlu0 %v1453, 96
    %v1456 = vpop.permute.xlu0 %1455
    %1458 = vst.msk [vmem:[%s923] sm:$0xff] %vm141, %v1456
    %s1459 = scalar_lea.vmem [#allocation2], 48
    %v1460 = vld [vmem:[%s1459] sm:$0xff]
    %v1461 = vsel %vm141, %v1456, 0
    %1463 = vmatpush.msra.mxu0 0.0
    %1464 = vmatpush.msra.mxu0 0.0
    %1465 = vmatpush.msra.mxu0 0.0
    %1466 = vmatpush.msra.mxu0 0.0
    %1467 = vmatpush.msra.mxu0 0.0
    %1468 = vmatpush.msra.mxu0 0.0
    %1469 = vmatpush.msra.mxu0 0.0
    %1470 = vmatpush.msra.mxu0 0.0
    %1471 = vmatpush.msra.mxu0 0.0
    %1472 = vmatpush.msra.mxu0 0.0
    %1473 = vmatpush.msra.mxu0 0.0
    %1474 = vmatpush.msra.mxu0 0.0
    %1475 = vmatpush.msra.mxu0 %v1046
    %1476 = vmatpush.msra.mxu0 %v1045
    %1477 = vmatpush.msra.mxu0 %v1044
    %1478 = vmatpush.msra.mxu0 %v1043
    %1479 = vmatmul.f32.gmra.mxu0 %v1461
    %v1480 = vpop.f32.mrf.mxu0
    %v1481 = vadd.f32 %v1050, %v1480
    %1482 = vdwg.mxu0
    %v1483 = vadd.f32 %v1460, %v1481
    %v1484 = vxor.u32 %v1483, 2147483648
    %v1485 = vmul.f32 %v1484, 1.442695
    %v1486 = vpow.pop %v1485
    %v1487 = vadd.f32 %v1486, 1.0
    %v1488 = vrcp.pop %v1487
    %v1489 = vmul.f32 %v1487, %v1488
    %v1490 = vsub.f32 1.0, %v1489
    %v1491 = vmul.f32 %v1488, %v1490
    %v1492 = vadd.f32 %v1488, %v1491
    %vm1493 = vweird.f32 %v1487
    %vm1494 = vweird.f32 %v1488
    %vm1495 = vmor %vm1493, %vm1494
    %v1496 = vsel %vm1495, %v1488, %v1492
    %v1497 = vand.u32 2147483647, %v1487
    %vm1498 = vcmp.eq.f32.partialorder %v1497, 8.507059e+37
    %v1499 = vand.u32 %v1487, 2147483648
    %v1500 = vor.u32 1.1754944e-38, %v1499
    %v1501 = vsel %vm1498, %v1500, %v1496
    %v1502 = vmul.f32 1.0, %v1501
    %1504 = vrot.lane.b32.xlu0 %v1481, 64
    %v1505 = vpop.permute.xlu0 %1504
    %v1507 = vmul.f32 %v1502, %v1505
    %1509 = vrot.lane.b32.xlu0 %v1507, 64
    %v1510 = vpop.permute.xlu0 %1509
    %v1512 = vadd.f32 %v1460, %v1510
    %v1513 = vtanh.pop %v1512
    %v1514 = vsub.f32 1.0, %v1502
    %1516 = vrot.lane.b32.xlu0 %v1513, 96
    %v1517 = vpop.permute.xlu0 %1516
    %v1519 = vmul.f32 %v1514, %v1517
    %v1520 = vmul.f32 %v1502, %v1453
    %v1521 = vadd.f32 %v1519, %v1520
    %1523 = vrot.lane.b32.xlu0 %v1521, 96
    %v1524 = vpop.permute.xlu0 %1523
    %1526 = vst.msk [vmem:[%s936] sm:$0xff] %vm141, %v1524
    %s1527 = scalar_lea.vmem [#allocation2], 56
    %v1528 = vld [vmem:[%s1527] sm:$0xff]
    %v1529 = vsel %vm141, %v1524, 0
    %1531 = vmatpush.msra.mxu0 0.0
    %1532 = vmatpush.msra.mxu0 0.0
    %1533 = vmatpush.msra.mxu0 0.0
    %1534 = vmatpush.msra.mxu0 0.0
    %1535 = vmatpush.msra.mxu0 0.0
    %1536 = vmatpush.msra.mxu0 0.0
    %1537 = vmatpush.msra.mxu0 0.0
    %1538 = vmatpush.msra.mxu0 0.0
    %1539 = vmatpush.msra.mxu0 0.0
    %1540 = vmatpush.msra.mxu0 0.0
    %1541 = vmatpush.msra.mxu0 0.0
    %1542 = vmatpush.msra.mxu0 0.0
    %1543 = vmatpush.msra.mxu0 %v1046
    %1544 = vmatpush.msra.mxu0 %v1045
    %1545 = vmatpush.msra.mxu0 %v1044
    %1546 = vmatpush.msra.mxu0 %v1043
    %1547 = vmatmul.f32.gmra.mxu0 %v1529
    %v1548 = vpop.f32.mrf.mxu0
    %v1549 = vadd.f32 %v1050, %v1548
    %1550 = vdwg.mxu0
    %v1551 = vadd.f32 %v1528, %v1549
    %v1552 = vxor.u32 %v1551, 2147483648
    %v1553 = vmul.f32 %v1552, 1.442695
    %v1554 = vpow.pop %v1553
    %v1555 = vadd.f32 %v1554, 1.0
    %v1556 = vrcp.pop %v1555
    %v1557 = vmul.f32 %v1555, %v1556
    %v1558 = vsub.f32 1.0, %v1557
    %v1559 = vmul.f32 %v1556, %v1558
    %v1560 = vadd.f32 %v1556, %v1559
    %vm1561 = vweird.f32 %v1555
    %vm1562 = vweird.f32 %v1556
    %vm1563 = vmor %vm1561, %vm1562
    %v1564 = vsel %vm1563, %v1556, %v1560
    %v1565 = vand.u32 2147483647, %v1555
    %vm1566 = vcmp.eq.f32.partialorder %v1565, 8.507059e+37
    %v1567 = vand.u32 %v1555, 2147483648
    %v1568 = vor.u32 1.1754944e-38, %v1567
    %v1569 = vsel %vm1566, %v1568, %v1564
    %v1570 = vmul.f32 1.0, %v1569
    %1572 = vrot.lane.b32.xlu0 %v1549, 64
    %v1573 = vpop.permute.xlu0 %1572
    %v1575 = vmul.f32 %v1570, %v1573
    %1577 = vrot.lane.b32.xlu0 %v1575, 64
    %v1578 = vpop.permute.xlu0 %1577
    %v1580 = vadd.f32 %v1528, %v1578
    %v1581 = vtanh.pop %v1580
    %v1582 = vsub.f32 1.0, %v1570
    %1584 = vrot.lane.b32.xlu0 %v1581, 96
    %v1585 = vpop.permute.xlu0 %1584
    %v1587 = vmul.f32 %v1582, %v1585
    %v1588 = vmul.f32 %v1570, %v1521
    %v1589 = vadd.f32 %v1587, %v1588
    %1591 = vrot.lane.b32.xlu0 %v1589, 96
    %v1592 = vpop.permute.xlu0 %1591
    %1594 = vst.msk [vmem:[%s949] sm:$0xff] %vm141, %v1592
    %v1595 = vld [vmem:[#allocation3] sm:$0xff]
    %v1596 = vld [vmem:[#allocation3 + $0x8] sm:$0xff]
    %v1597 = vld [vmem:[#allocation3 + $0x10] sm:$0xff]
    %v1598 = vld [vmem:[#allocation3 + $0x18] sm:$0xff]
    %v1599 = vld [vmem:[#allocation3 + $0x20] sm:$0xff]
    %v1600 = vld [vmem:[#allocation3 + $0x28] sm:$0xff]
    %v1601 = vld [vmem:[#allocation3 + $0x30] sm:$0xff]
    %v1602 = vld [vmem:[#allocation3 + $0x38] sm:$0xff]
    %s1603 = scalar_lea.vmem [#allocation10], 32
    %v1604 = vld [vmem:[%s1603] sm:$0xff]
    %v1605 = vld [vmem:[%s1603 + $0x8] sm:$0xff]
    %v1606 = vld [vmem:[%s1603 + $0x10] sm:$0xff]
    %v1607 = vld [vmem:[%s1603 + $0x18] sm:$0xff]
    %s1608 = scalar_lea.vmem %s4, 1
    %v1609 = vld [vmem:[%s1608] sm:$0x1]
    %v1611 = vperm.slane %v1609, 0
    %v1614 = vsel %vm141, %v1595, 0
    %v1617 = vsel %vm141, %v1596, 0
    %v1620 = vsel %vm141, %v1597, 0
    %v1623 = vsel %vm141, %v1598, 0
    %v1626 = vsel %vm141, %v1599, 0
    %v1629 = vsel %vm141, %v1600, 0
    %v1632 = vsel %vm141, %v1601, 0
    %v1635 = vsel %vm141, %v1602, 0
    %1637 = vmatpush.msra.mxu0 0.0
    %1638 = vmatpush.msra.mxu0 0.0
    %1639 = vmatpush.msra.mxu0 0.0
    %1640 = vmatpush.msra.mxu0 0.0
    %1641 = vmatpush.msra.mxu0 0.0
    %1642 = vmatpush.msra.mxu0 0.0
    %1643 = vmatpush.msra.mxu0 0.0
    %1644 = vmatpush.msra.mxu0 0.0
    %1645 = vmatpush.msra.mxu0 0.0
    %1646 = vmatpush.msra.mxu0 0.0
    %1647 = vmatpush.msra.mxu0 0.0
    %1648 = vmatpush.msra.mxu0 0.0
    %1649 = vmatpush.msra.mxu0 %v1607
    %1650 = vmatpush.msra.mxu0 %v1606
    %1651 = vmatpush.msra.mxu0 %v1605
    %1652 = vmatpush.msra.mxu0 %v1604
    %1653 = vmatmul.f32.gmra.mxu0 %v1614
    %v1654 = vpop.f32.mrf.mxu0
    %v1655 = vadd.f32 %v1611, %v1654
    %1656 = vmatmul.f32.gmra.mxu0 %v1617
    %v1657 = vpop.f32.mrf.mxu0
    %v1658 = vadd.f32 %v1611, %v1657
    %1659 = vmatmul.f32.gmra.mxu0 %v1620
    %v1660 = vpop.f32.mrf.mxu0
    %v1661 = vadd.f32 %v1611, %v1660
    %1662 = vmatmul.f32.gmra.mxu0 %v1623
    %v1663 = vpop.f32.mrf.mxu0
    %v1664 = vadd.f32 %v1611, %v1663
    %1665 = vmatmul.f32.gmra.mxu0 %v1626
    %v1666 = vpop.f32.mrf.mxu0
    %v1667 = vadd.f32 %v1611, %v1666
    %1668 = vmatmul.f32.gmra.mxu0 %v1629
    %v1669 = vpop.f32.mrf.mxu0
    %v1670 = vadd.f32 %v1611, %v1669
    %1671 = vmatmul.f32.gmra.mxu0 %v1632
    %v1672 = vpop.f32.mrf.mxu0
    %v1673 = vadd.f32 %v1611, %v1672
    %1674 = vmatmul.f32.gmra.mxu0 %v1635
    %v1675 = vpop.f32.mrf.mxu0
    %v1676 = vadd.f32 %v1611, %v1675
    %1677 = vdwg.mxu0
    %1678 = vst [vmem:[#allocation2] sm:$0xff] %v1655
    %1679 = vst [vmem:[#allocation2 + $0x8] sm:$0xff] %v1658
    %1680 = vst [vmem:[#allocation2 + $0x10] sm:$0xff] %v1661
    %1681 = vst [vmem:[#allocation2 + $0x18] sm:$0xff] %v1664
    %1682 = vst [vmem:[#allocation2 + $0x20] sm:$0xff] %v1667
    %1683 = vst [vmem:[#allocation2 + $0x28] sm:$0xff] %v1670
    %1684 = vst [vmem:[#allocation2 + $0x30] sm:$0xff] %v1673
    %1685 = vst [vmem:[#allocation2 + $0x38] sm:$0xff] %v1676
    %s1686 = scalar_lea.vmem [#allocation12], 32
    %v1687 = vld [vmem:[%s1686] sm:$0xff]
    %v1688 = vld [vmem:[%s1686 + $0x8] sm:$0xff]
    %v1689 = vld [vmem:[%s1686 + $0x10] sm:$0xff]
    %v1690 = vld [vmem:[%s1686 + $0x18] sm:$0xff]
    %s1691 = scalar_lea.vmem %s6, 1
    %v1692 = vld [vmem:[%s1691] sm:$0x1]
    %v1693 = vld [vmem:[#allocation2] sm:$0xff]
    %v1695 = vperm.slane %v1692, 0
    %1697 = vmatpush.msra.mxu0 0.0
    %1698 = vmatpush.msra.mxu0 0.0
    %1699 = vmatpush.msra.mxu0 0.0
    %1700 = vmatpush.msra.mxu0 0.0
    %1701 = vmatpush.msra.mxu0 0.0
    %1702 = vmatpush.msra.mxu0 0.0
    %1703 = vmatpush.msra.mxu0 0.0
    %1704 = vmatpush.msra.mxu0 0.0
    %1705 = vmatpush.msra.mxu0 0.0
    %1706 = vmatpush.msra.mxu0 0.0
    %1707 = vmatpush.msra.mxu0 0.0
    %1708 = vmatpush.msra.mxu0 0.0
    %1709 = vmatpush.msra.mxu0 %v1690
    %1710 = vmatpush.msra.mxu0 %v1689
    %1711 = vmatpush.msra.mxu0 %v1688
    %1712 = vmatpush.msra.mxu0 %v1687
    %1713 = vmatmul.f32.gmra.mxu0 %v1053
    %v1714 = vpop.f32.mrf.mxu0
    %v1715 = vadd.f32 %v1695, %v1714
    %1716 = vdwg.mxu0
    %v1717 = vadd.f32 %v1693, %v1715
    %v1718 = vxor.u32 %v1717, 2147483648
    %v1719 = vmul.f32 %v1718, 1.442695
    %v1720 = vpow.pop %v1719
    %v1721 = vadd.f32 %v1720, 1.0
    %v1722 = vrcp.pop %v1721
    %v1723 = vmul.f32 %v1721, %v1722
    %v1724 = vsub.f32 1.0, %v1723
    %v1725 = vmul.f32 %v1722, %v1724
    %v1726 = vadd.f32 %v1722, %v1725
    %vm1727 = vweird.f32 %v1721
    %vm1728 = vweird.f32 %v1722
    %vm1729 = vmor %vm1727, %vm1728
    %v1730 = vsel %vm1729, %v1722, %v1726
    %v1731 = vand.u32 2147483647, %v1721
    %vm1732 = vcmp.eq.f32.partialorder %v1731, 8.507059e+37
    %v1733 = vand.u32 %v1721, 2147483648
    %v1734 = vor.u32 1.1754944e-38, %v1733
    %v1735 = vsel %vm1732, %v1734, %v1730
    %v1736 = vmul.f32 1.0, %v1735
    %1738 = vrot.lane.b32.xlu0 %v1715, 64
    %v1739 = vpop.permute.xlu0 %1738
    %v1741 = vmul.f32 %v1736, %v1739
    %1743 = vrot.lane.b32.xlu0 %v1741, 64
    %v1744 = vpop.permute.xlu0 %1743
    %v1746 = vadd.f32 %v1693, %v1744
    %v1747 = vtanh.pop %v1746
    %v1748 = vsub.f32 1.0, %v1736
    %1750 = vrot.lane.b32.xlu0 %v1747, 96
    %v1751 = vpop.permute.xlu0 %1750
    %v1753 = vmul.f32 %v1748, %v1751
    %v1754 = vmul.f32 %v1736, 0.0
    %v1755 = vadd.f32 %v1753, %v1754
    %v1756 = vld [vmem:[%s1119] sm:$0xff]
    %1758 = vrot.lane.b32.xlu0 %v1755, 96
    %v1759 = vpop.permute.xlu0 %1758
    %v1760 = vsel %vm141, %v1759, 0
    %1762 = vmatpush.msra.mxu0 0.0
    %1763 = vmatpush.msra.mxu0 0.0
    %1764 = vmatpush.msra.mxu0 0.0
    %1765 = vmatpush.msra.mxu0 0.0
    %1766 = vmatpush.msra.mxu0 0.0
    %1767 = vmatpush.msra.mxu0 0.0
    %1768 = vmatpush.msra.mxu0 0.0
    %1769 = vmatpush.msra.mxu0 0.0
    %1770 = vmatpush.msra.mxu0 0.0
    %1771 = vmatpush.msra.mxu0 0.0
    %1772 = vmatpush.msra.mxu0 0.0
    %1773 = vmatpush.msra.mxu0 0.0
    %1774 = vmatpush.msra.mxu0 %v1690
    %1775 = vmatpush.msra.mxu0 %v1689
    %1776 = vmatpush.msra.mxu0 %v1688
    %1777 = vmatpush.msra.mxu0 %v1687
    %1778 = vmatmul.f32.gmra.mxu0 %v1760
    %v1779 = vpop.f32.mrf.mxu0
    %v1780 = vadd.f32 %v1695, %v1779
    %1781 = vdwg.mxu0
    %v1782 = vadd.f32 %v1756, %v1780
    %v1783 = vxor.u32 %v1782, 2147483648
    %v1784 = vmul.f32 %v1783, 1.442695
    %v1785 = vpow.pop %v1784
    %v1786 = vadd.f32 %v1785, 1.0
    %v1787 = vrcp.pop %v1786
    %v1788 = vmul.f32 %v1786, %v1787
    %v1789 = vsub.f32 1.0, %v1788
    %v1790 = vmul.f32 %v1787, %v1789
    %v1791 = vadd.f32 %v1787, %v1790
    %vm1792 = vweird.f32 %v1786
    %vm1793 = vweird.f32 %v1787
    %vm1794 = vmor %vm1792, %vm1793
    %v1795 = vsel %vm1794, %v1787, %v1791
    %v1796 = vand.u32 2147483647, %v1786
    %vm1797 = vcmp.eq.f32.partialorder %v1796, 8.507059e+37
    %v1798 = vand.u32 %v1786, 2147483648
    %v1799 = vor.u32 1.1754944e-38, %v1798
    %v1800 = vsel %vm1797, %v1799, %v1795
    %v1801 = vmul.f32 1.0, %v1800
    %1803 = vrot.lane.b32.xlu0 %v1780, 64
    %v1804 = vpop.permute.xlu0 %1803
    %v1806 = vmul.f32 %v1801, %v1804
    %1808 = vrot.lane.b32.xlu0 %v1806, 64
    %v1809 = vpop.permute.xlu0 %1808
    %v1811 = vadd.f32 %v1756, %v1809
    %v1812 = vtanh.pop %v1811
    %v1813 = vsub.f32 1.0, %v1801
    %1815 = vrot.lane.b32.xlu0 %v1812, 96
    %v1816 = vpop.permute.xlu0 %1815
    %v1818 = vmul.f32 %v1813, %v1816
    %v1819 = vmul.f32 %v1801, %v1755
    %v1820 = vadd.f32 %v1818, %v1819
    %v1821 = vld [vmem:[%s1187] sm:$0xff]
    %1823 = vrot.lane.b32.xlu0 %v1820, 96
    %v1824 = vpop.permute.xlu0 %1823
    %v1825 = vsel %vm141, %v1824, 0
    %1827 = vmatpush.msra.mxu0 0.0
    %1828 = vmatpush.msra.mxu0 0.0
    %1829 = vmatpush.msra.mxu0 0.0
    %1830 = vmatpush.msra.mxu0 0.0
    %1831 = vmatpush.msra.mxu0 0.0
    %1832 = vmatpush.msra.mxu0 0.0
    %1833 = vmatpush.msra.mxu0 0.0
    %1834 = vmatpush.msra.mxu0 0.0
    %1835 = vmatpush.msra.mxu0 0.0
    %1836 = vmatpush.msra.mxu0 0.0
    %1837 = vmatpush.msra.mxu0 0.0
    %1838 = vmatpush.msra.mxu0 0.0
    %1839 = vmatpush.msra.mxu0 %v1690
    %1840 = vmatpush.msra.mxu0 %v1689
    %1841 = vmatpush.msra.mxu0 %v1688
    %1842 = vmatpush.msra.mxu0 %v1687
    %1843 = vmatmul.f32.gmra.mxu0 %v1825
    %v1844 = vpop.f32.mrf.mxu0
    %v1845 = vadd.f32 %v1695, %v1844
    %1846 = vdwg.mxu0
    %v1847 = vadd.f32 %v1821, %v1845
    %v1848 = vxor.u32 %v1847, 2147483648
    %v1849 = vmul.f32 %v1848, 1.442695
    %v1850 = vpow.pop %v1849
    %v1851 = vadd.f32 %v1850, 1.0
    %v1852 = vrcp.pop %v1851
    %v1853 = vmul.f32 %v1851, %v1852
    %v1854 = vsub.f32 1.0, %v1853
    %v1855 = vmul.f32 %v1852, %v1854
    %v1856 = vadd.f32 %v1852, %v1855
    %vm1857 = vweird.f32 %v1851
    %vm1858 = vweird.f32 %v1852
    %vm1859 = vmor %vm1857, %vm1858
    %v1860 = vsel %vm1859, %v1852, %v1856
    %v1861 = vand.u32 2147483647, %v1851
    %vm1862 = vcmp.eq.f32.partialorder %v1861, 8.507059e+37
    %v1863 = vand.u32 %v1851, 2147483648
    %v1864 = vor.u32 1.1754944e-38, %v1863
    %v1865 = vsel %vm1862, %v1864, %v1860
    %v1866 = vmul.f32 1.0, %v1865
    %1868 = vrot.lane.b32.xlu0 %v1845, 64
    %v1869 = vpop.permute.xlu0 %1868
    %v1871 = vmul.f32 %v1866, %v1869
    %1873 = vrot.lane.b32.xlu0 %v1871, 64
    %v1874 = vpop.permute.xlu0 %1873
    %v1876 = vadd.f32 %v1821, %v1874
    %v1877 = vtanh.pop %v1876
    %v1878 = vsub.f32 1.0, %v1866
    %1880 = vrot.lane.b32.xlu0 %v1877, 96
    %v1881 = vpop.permute.xlu0 %1880
    %v1883 = vmul.f32 %v1878, %v1881
    %v1884 = vmul.f32 %v1866, %v1820
    %v1885 = vadd.f32 %v1883, %v1884
    %v1886 = vld [vmem:[%s1255] sm:$0xff]
    %1888 = vrot.lane.b32.xlu0 %v1885, 96
    %v1889 = vpop.permute.xlu0 %1888
    %v1890 = vsel %vm141, %v1889, 0
    %1892 = vmatpush.msra.mxu0 0.0
    %1893 = vmatpush.msra.mxu0 0.0
    %1894 = vmatpush.msra.mxu0 0.0
    %1895 = vmatpush.msra.mxu0 0.0
    %1896 = vmatpush.msra.mxu0 0.0
    %1897 = vmatpush.msra.mxu0 0.0
    %1898 = vmatpush.msra.mxu0 0.0
    %1899 = vmatpush.msra.mxu0 0.0
    %1900 = vmatpush.msra.mxu0 0.0
    %1901 = vmatpush.msra.mxu0 0.0
    %1902 = vmatpush.msra.mxu0 0.0
    %1903 = vmatpush.msra.mxu0 0.0
    %1904 = vmatpush.msra.mxu0 %v1690
    %1905 = vmatpush.msra.mxu0 %v1689
    %1906 = vmatpush.msra.mxu0 %v1688
    %1907 = vmatpush.msra.mxu0 %v1687
    %1908 = vmatmul.f32.gmra.mxu0 %v1890
    %v1909 = vpop.f32.mrf.mxu0
    %v1910 = vadd.f32 %v1695, %v1909
    %1911 = vdwg.mxu0
    %v1912 = vadd.f32 %v1886, %v1910
    %v1913 = vxor.u32 %v1912, 2147483648
    %v1914 = vmul.f32 %v1913, 1.442695
    %v1915 = vpow.pop %v1914
    %v1916 = vadd.f32 %v1915, 1.0
    %v1917 = vrcp.pop %v1916
    %v1918 = vmul.f32 %v1916, %v1917
    %v1919 = vsub.f32 1.0, %v1918
    %v1920 = vmul.f32 %v1917, %v1919
    %v1921 = vadd.f32 %v1917, %v1920
    %vm1922 = vweird.f32 %v1916
    %vm1923 = vweird.f32 %v1917
    %vm1924 = vmor %vm1922, %vm1923
    %v1925 = vsel %vm1924, %v1917, %v1921
    %v1926 = vand.u32 2147483647, %v1916
    %vm1927 = vcmp.eq.f32.partialorder %v1926, 8.507059e+37
    %v1928 = vand.u32 %v1916, 2147483648
    %v1929 = vor.u32 1.1754944e-38, %v1928
    %v1930 = vsel %vm1927, %v1929, %v1925
    %v1931 = vmul.f32 1.0, %v1930
    %1933 = vrot.lane.b32.xlu0 %v1910, 64
    %v1934 = vpop.permute.xlu0 %1933
    %v1936 = vmul.f32 %v1931, %v1934
    %1938 = vrot.lane.b32.xlu0 %v1936, 64
    %v1939 = vpop.permute.xlu0 %1938
    %v1941 = vadd.f32 %v1886, %v1939
    %v1942 = vtanh.pop %v1941
    %v1943 = vsub.f32 1.0, %v1931
    %1945 = vrot.lane.b32.xlu0 %v1942, 96
    %v1946 = vpop.permute.xlu0 %1945
    %v1948 = vmul.f32 %v1943, %v1946
    %v1949 = vmul.f32 %v1931, %v1885
    %v1950 = vadd.f32 %v1948, %v1949
    %v1951 = vld [vmem:[%s1323] sm:$0xff]
    %1953 = vrot.lane.b32.xlu0 %v1950, 96
    %v1954 = vpop.permute.xlu0 %1953
    %v1955 = vsel %vm141, %v1954, 0
    %1957 = vmatpush.msra.mxu0 0.0
    %1958 = vmatpush.msra.mxu0 0.0
    %1959 = vmatpush.msra.mxu0 0.0
    %1960 = vmatpush.msra.mxu0 0.0
    %1961 = vmatpush.msra.mxu0 0.0
    %1962 = vmatpush.msra.mxu0 0.0
    %1963 = vmatpush.msra.mxu0 0.0
    %1964 = vmatpush.msra.mxu0 0.0
    %1965 = vmatpush.msra.mxu0 0.0
    %1966 = vmatpush.msra.mxu0 0.0
    %1967 = vmatpush.msra.mxu0 0.0
    %1968 = vmatpush.msra.mxu0 0.0
    %1969 = vmatpush.msra.mxu0 %v1690
    %1970 = vmatpush.msra.mxu0 %v1689
    %1971 = vmatpush.msra.mxu0 %v1688
    %1972 = vmatpush.msra.mxu0 %v1687
    %1973 = vmatmul.f32.gmra.mxu0 %v1955
    %v1974 = vpop.f32.mrf.mxu0
    %v1975 = vadd.f32 %v1695, %v1974
    %1976 = vdwg.mxu0
    %v1977 = vadd.f32 %v1951, %v1975
    %v1978 = vxor.u32 %v1977, 2147483648
    %v1979 = vmul.f32 %v1978, 1.442695
    %v1980 = vpow.pop %v1979
    %v1981 = vadd.f32 %v1980, 1.0
    %v1982 = vrcp.pop %v1981
    %v1983 = vmul.f32 %v1981, %v1982
    %v1984 = vsub.f32 1.0, %v1983
    %v1985 = vmul.f32 %v1982, %v1984
    %v1986 = vadd.f32 %v1982, %v1985
    %vm1987 = vweird.f32 %v1981
    %vm1988 = vweird.f32 %v1982
    %vm1989 = vmor %vm1987, %vm1988
    %v1990 = vsel %vm1989, %v1982, %v1986
    %v1991 = vand.u32 2147483647, %v1981
    %vm1992 = vcmp.eq.f32.partialorder %v1991, 8.507059e+37
    %v1993 = vand.u32 %v1981, 2147483648
    %v1994 = vor.u32 1.1754944e-38, %v1993
    %v1995 = vsel %vm1992, %v1994, %v1990
    %v1996 = vmul.f32 1.0, %v1995
    %1998 = vrot.lane.b32.xlu0 %v1975, 64
    %v1999 = vpop.permute.xlu0 %1998
    %v2001 = vmul.f32 %v1996, %v1999
    %2003 = vrot.lane.b32.xlu0 %v2001, 64
    %v2004 = vpop.permute.xlu0 %2003
    %v2006 = vadd.f32 %v1951, %v2004
    %v2007 = vtanh.pop %v2006
    %v2008 = vsub.f32 1.0, %v1996
    %2010 = vrot.lane.b32.xlu0 %v2007, 96
    %v2011 = vpop.permute.xlu0 %2010
    %v2013 = vmul.f32 %v2008, %v2011
    %v2014 = vmul.f32 %v1996, %v1950
    %v2015 = vadd.f32 %v2013, %v2014
    %v2016 = vld [vmem:[%s1391] sm:$0xff]
    %2018 = vrot.lane.b32.xlu0 %v2015, 96
    %v2019 = vpop.permute.xlu0 %2018
    %v2020 = vsel %vm141, %v2019, 0
    %2022 = vmatpush.msra.mxu0 0.0
    %2023 = vmatpush.msra.mxu0 0.0
    %2024 = vmatpush.msra.mxu0 0.0
    %2025 = vmatpush.msra.mxu0 0.0
    %2026 = vmatpush.msra.mxu0 0.0
    %2027 = vmatpush.msra.mxu0 0.0
    %2028 = vmatpush.msra.mxu0 0.0
    %2029 = vmatpush.msra.mxu0 0.0
    %2030 = vmatpush.msra.mxu0 0.0
    %2031 = vmatpush.msra.mxu0 0.0
    %2032 = vmatpush.msra.mxu0 0.0
    %2033 = vmatpush.msra.mxu0 0.0
    %2034 = vmatpush.msra.mxu0 %v1690
    %2035 = vmatpush.msra.mxu0 %v1689
    %2036 = vmatpush.msra.mxu0 %v1688
    %2037 = vmatpush.msra.mxu0 %v1687
    %2038 = vmatmul.f32.gmra.mxu0 %v2020
    %v2039 = vpop.f32.mrf.mxu0
    %v2040 = vadd.f32 %v1695, %v2039
    %2041 = vdwg.mxu0
    %v2042 = vadd.f32 %v2016, %v2040
    %v2043 = vxor.u32 %v2042, 2147483648
    %v2044 = vmul.f32 %v2043, 1.442695
    %v2045 = vpow.pop %v2044
    %v2046 = vadd.f32 %v2045, 1.0
    %v2047 = vrcp.pop %v2046
    %v2048 = vmul.f32 %v2046, %v2047
    %v2049 = vsub.f32 1.0, %v2048
    %v2050 = vmul.f32 %v2047, %v2049
    %v2051 = vadd.f32 %v2047, %v2050
    %vm2052 = vweird.f32 %v2046
    %vm2053 = vweird.f32 %v2047
    %vm2054 = vmor %vm2052, %vm2053
    %v2055 = vsel %vm2054, %v2047, %v2051
    %v2056 = vand.u32 2147483647, %v2046
    %vm2057 = vcmp.eq.f32.partialorder %v2056, 8.507059e+37
    %v2058 = vand.u32 %v2046, 2147483648
    %v2059 = vor.u32 1.1754944e-38, %v2058
    %v2060 = vsel %vm2057, %v2059, %v2055
    %v2061 = vmul.f32 1.0, %v2060
    %2063 = vrot.lane.b32.xlu0 %v2040, 64
    %v2064 = vpop.permute.xlu0 %2063
    %v2066 = vmul.f32 %v2061, %v2064
    %2068 = vrot.lane.b32.xlu0 %v2066, 64
    %v2069 = vpop.permute.xlu0 %2068
    %v2071 = vadd.f32 %v2016, %v2069
    %v2072 = vtanh.pop %v2071
    %v2073 = vsub.f32 1.0, %v2061
    %2075 = vrot.lane.b32.xlu0 %v2072, 96
    %v2076 = vpop.permute.xlu0 %2075
    %v2078 = vmul.f32 %v2073, %v2076
    %v2079 = vmul.f32 %v2061, %v2015
    %v2080 = vadd.f32 %v2078, %v2079
    %v2081 = vld [vmem:[%s1459] sm:$0xff]
    %2083 = vrot.lane.b32.xlu0 %v2080, 96
    %v2084 = vpop.permute.xlu0 %2083
    %v2085 = vsel %vm141, %v2084, 0
    %2087 = vmatpush.msra.mxu0 0.0
    %2088 = vmatpush.msra.mxu0 0.0
    %2089 = vmatpush.msra.mxu0 0.0
    %2090 = vmatpush.msra.mxu0 0.0
    %2091 = vmatpush.msra.mxu0 0.0
    %2092 = vmatpush.msra.mxu0 0.0
    %2093 = vmatpush.msra.mxu0 0.0
    %2094 = vmatpush.msra.mxu0 0.0
    %2095 = vmatpush.msra.mxu0 0.0
    %2096 = vmatpush.msra.mxu0 0.0
    %2097 = vmatpush.msra.mxu0 0.0
    %2098 = vmatpush.msra.mxu0 0.0
    %2099 = vmatpush.msra.mxu0 %v1690
    %2100 = vmatpush.msra.mxu0 %v1689
    %2101 = vmatpush.msra.mxu0 %v1688
    %2102 = vmatpush.msra.mxu0 %v1687
    %2103 = vmatmul.f32.gmra.mxu0 %v2085
    %v2104 = vpop.f32.mrf.mxu0
    %v2105 = vadd.f32 %v1695, %v2104
    %2106 = vdwg.mxu0
    %v2107 = vadd.f32 %v2081, %v2105
    %v2108 = vxor.u32 %v2107, 2147483648
    %v2109 = vmul.f32 %v2108, 1.442695
    %v2110 = vpow.pop %v2109
    %v2111 = vadd.f32 %v2110, 1.0
    %v2112 = vrcp.pop %v2111
    %v2113 = vmul.f32 %v2111, %v2112
    %v2114 = vsub.f32 1.0, %v2113
    %v2115 = vmul.f32 %v2112, %v2114
    %v2116 = vadd.f32 %v2112, %v2115
    %vm2117 = vweird.f32 %v2111
    %vm2118 = vweird.f32 %v2112
    %vm2119 = vmor %vm2117, %vm2118
    %v2120 = vsel %vm2119, %v2112, %v2116
    %v2121 = vand.u32 2147483647, %v2111
    %vm2122 = vcmp.eq.f32.partialorder %v2121, 8.507059e+37
    %v2123 = vand.u32 %v2111, 2147483648
    %v2124 = vor.u32 1.1754944e-38, %v2123
    %v2125 = vsel %vm2122, %v2124, %v2120
    %v2126 = vmul.f32 1.0, %v2125
    %2128 = vrot.lane.b32.xlu0 %v2105, 64
    %v2129 = vpop.permute.xlu0 %2128
    %v2131 = vmul.f32 %v2126, %v2129
    %2133 = vrot.lane.b32.xlu0 %v2131, 64
    %v2134 = vpop.permute.xlu0 %2133
    %v2136 = vadd.f32 %v2081, %v2134
    %v2137 = vtanh.pop %v2136
    %v2138 = vsub.f32 1.0, %v2126
    %2140 = vrot.lane.b32.xlu0 %v2137, 96
    %v2141 = vpop.permute.xlu0 %2140
    %v2143 = vmul.f32 %v2138, %v2141
    %v2144 = vmul.f32 %v2126, %v2080
    %v2145 = vadd.f32 %v2143, %v2144
    %v2146 = vld [vmem:[%s1527] sm:$0xff]
    %2148 = vrot.lane.b32.xlu0 %v2145, 96
    %v2149 = vpop.permute.xlu0 %2148
    %v2150 = vsel %vm141, %v2149, 0
    %2152 = vmatpush.msra.mxu0 0.0
    %2153 = vmatpush.msra.mxu0 0.0
    %2154 = vmatpush.msra.mxu0 0.0
    %2155 = vmatpush.msra.mxu0 0.0
    %2156 = vmatpush.msra.mxu0 0.0
    %2157 = vmatpush.msra.mxu0 0.0
    %2158 = vmatpush.msra.mxu0 0.0
    %2159 = vmatpush.msra.mxu0 0.0
    %2160 = vmatpush.msra.mxu0 0.0
    %2161 = vmatpush.msra.mxu0 0.0
    %2162 = vmatpush.msra.mxu0 0.0
    %2163 = vmatpush.msra.mxu0 0.0
    %2164 = vmatpush.msra.mxu0 %v1690
    %2165 = vmatpush.msra.mxu0 %v1689
    %2166 = vmatpush.msra.mxu0 %v1688
    %2167 = vmatpush.msra.mxu0 %v1687
    %2168 = vmatmul.f32.gmra.mxu0 %v2150
    %v2169 = vpop.f32.mrf.mxu0
    %v2170 = vadd.f32 %v1695, %v2169
    %2171 = vdwg.mxu0
    %v2172 = vadd.f32 %v2146, %v2170
    %v2173 = vxor.u32 %v2172, 2147483648
    %v2174 = vmul.f32 %v2173, 1.442695
    %v2175 = vpow.pop %v2174
    %v2176 = vadd.f32 %v2175, 1.0
    %v2177 = vrcp.pop %v2176
    %v2178 = vmul.f32 %v2176, %v2177
    %v2179 = vsub.f32 1.0, %v2178
    %v2180 = vmul.f32 %v2177, %v2179
    %v2181 = vadd.f32 %v2177, %v2180
    %vm2182 = vweird.f32 %v2176
    %vm2183 = vweird.f32 %v2177
    %vm2184 = vmor %vm2182, %vm2183
    %v2185 = vsel %vm2184, %v2177, %v2181
    %v2186 = vand.u32 2147483647, %v2176
    %vm2187 = vcmp.eq.f32.partialorder %v2186, 8.507059e+37
    %v2188 = vand.u32 %v2176, 2147483648
    %v2189 = vor.u32 1.1754944e-38, %v2188
    %v2190 = vsel %vm2187, %v2189, %v2185
    %v2191 = vmul.f32 1.0, %v2190
    %2193 = vrot.lane.b32.xlu0 %v2170, 64
    %v2194 = vpop.permute.xlu0 %2193
    %v2196 = vmul.f32 %v2191, %v2194
    %2198 = vrot.lane.b32.xlu0 %v2196, 64
    %v2199 = vpop.permute.xlu0 %2198
    %v2201 = vadd.f32 %v2146, %v2199
    %v2202 = vtanh.pop %v2201
    %v2203 = vsub.f32 1.0, %v2191
    %2205 = vrot.lane.b32.xlu0 %v2202, 96
    %v2206 = vpop.permute.xlu0 %2205
    %v2208 = vmul.f32 %v2203, %v2206
    %v2209 = vmul.f32 %v2191, %v2145
    %v2210 = vadd.f32 %v2208, %v2209
    %v2211 = vld [vmem:[#allocation13] sm:$0xff]
    %v2212 = vld [vmem:[#allocation13 + $0x8] sm:$0xff]
    %v2213 = vld [vmem:[#allocation13 + $0x10] sm:$0xff]
    %v2214 = vld [vmem:[#allocation13 + $0x18] sm:$0xff]
    %v2215 = vld [vmem:[%s8] sm:$0x1]
    %v2217 = vperm.slane %v2215, 0
    %2220 = vrot.lane.b32.xlu0 %v2210, 96
    %v2221 = vpop.permute.xlu0 %2220
    %v2222 = vsel %vm141, %v2221, 0
    %2224 = vmatpush.msra.mxu0 0.0
    %2225 = vmatpush.msra.mxu0 0.0
    %2226 = vmatpush.msra.mxu0 0.0
    %2227 = vmatpush.msra.mxu0 0.0
    %2228 = vmatpush.msra.mxu0 0.0
    %2229 = vmatpush.msra.mxu0 0.0
    %2230 = vmatpush.msra.mxu0 0.0
    %2231 = vmatpush.msra.mxu0 0.0
    %2232 = vmatpush.msra.mxu0 0.0
    %2233 = vmatpush.msra.mxu0 0.0
    %2234 = vmatpush.msra.mxu0 0.0
    %2235 = vmatpush.msra.mxu0 0.0
    %2236 = vmatpush.msra.mxu0 %v2214
    %2237 = vmatpush.msra.mxu0 %v2213
    %2238 = vmatpush.msra.mxu0 %v2212
    %2239 = vmatpush.msra.mxu0 %v2211
    %2240 = vmatmul.f32.gmra.mxu0 %v2222
    %v2241 = vpop.f32.mrf.mxu0
    %v2242 = vadd.f32 %v2217, %v2241
    %2243 = vdwg.mxu0
    %2244 = vst [vmem:[#allocation15] sm:$0xff] %v2242
    // Predicated region
    $region62: #{tpu_custom_call.1} parent=1 // pred_check
      _
    $region63: #{tpu_custom_call.1} parent=1 // pred_check_branch
      %2246 = sbr.rel (0) target = $region65
    $region64: #{tpu_custom_call.1} parent=1 // pred_region
      %2248 = vsyncadd [#allocation6], 0
      %s2250 = sshll.u32 [#allocation15], 4
      %s2251 = int_to_ptr.vmem [resolvable:$true] %s2250
      %s2252 = sshll.u32 %s9, 4
      %s2253 = int_to_ptr.hbm [resolvable:$true] %s2252
      %2255 = dma.vmem_to_hbm [thread:$0]  %s2251, 128, %s2253, [#allocation6]
    $region65: #{tpu_custom_call.1} parent=1 // pred_fallthru
      _
    // Predicated region
    $region66: #{tpu_custom_call.1} parent=1 // pred_check
      _
    $region67: #{tpu_custom_call.1} parent=1 // pred_check_branch
      %2257 = sbr.rel (0) target = $region69
    $region68: #{tpu_custom_call.1} parent=1 // pred_region
      %2259 = dma.done [#allocation6], 128
    $region69: #{tpu_custom_call.1} parent=1 // pred_fallthru
      _
    %2260 = vsyncpa [#allocation5], 1
    %2261 = vsyncpa [#allocation8], 1
    %2262 = vsyncpa [#allocation11], 1
    %2263 = vsyncpa [#allocation14], 1
    %2264 = vsyncpa [#allocation6], 1

</llo_original>
